<compile_context>
chip_gen: v5e
topology: v5e:2x2
jax: 0.10.0
libtpu: 0.0.40
codegen_flags: <defaults>
</compile_context>

<pallas_src>
import functools
import math

import jax
import jax.numpy as jnp
from jax.experimental import pallas as pl
from jax.experimental.pallas import tpu as pltpu


# ----------------------------------------------------------------------------
# In-kernel math helpers (activations stay f32; matmuls are bf16->f32)
# ----------------------------------------------------------------------------
_SQRT_2_OVER_PI = 0.7978845608028654


def _gelu(x):
    # tanh-approximate GELU: one EUP tanh instead of erf's exp + divide chain.
    # TODO(synk): torch.nn.GELU() defaults to exact erf; tanh form deviates ~1e-3.
    return 0.5 * x * (1.0 + jnp.tanh(_SQRT_2_OVER_PI * (x + 0.044715 * x * x * x)))


def _layernorm(x, g, b, eps=1e-5):
    mu = jnp.mean(x, axis=-1, keepdims=True)
    var = jnp.mean((x - mu) ** 2, axis=-1, keepdims=True)
    return (x - mu) * jax.lax.rsqrt(var + eps) * g + b


def _shift_seq(t, direction):
    """Shift [bt, S, D] along seq with zero boundary (XLU roll + iota mask).

    direction=+1: row s receives t[s-1] (row 0 -> 0)
    direction=-1: row s receives t[s+1] (row S-1 -> 0)
    """
    seq = t.shape[1]
    rolled = pltpu.roll(t, shift=direction % seq, axis=1)
    pos = jax.lax.broadcasted_iota(jnp.int32, t.shape, 1)
    keep = (pos >= direction) if direction > 0 else (pos < seq + direction)
    return jnp.where(keep, rolled, 0.0)


def _conv3(x3, w_ref, bias):
    """Conv1d(k=3, pad=1) as 3 unshifted matmuls + shifted-output combine.

    x3: [bt, S, Cin] f32; w_ref: [3, Cin, D]; bias: [1, D] (BN folded)."""
    bt, seq, cin = x3.shape
    d = w_ref.shape[-1]
    xf = x3.reshape(bt * seq, cin).astype(w_ref.dtype)
    taps = [jnp.dot(xf, w_ref[j], preferred_element_type=jnp.float32
                    ).reshape(bt, seq, d) for j in range(3)]
    return _shift_seq(taps[0], 1) + taps[1] + _shift_seq(taps[2], -1) + bias


# ----------------------------------------------------------------------------
# The single fused kernel: temporal_conv -> L transformer blocks -> head
# ----------------------------------------------------------------------------
def _gtn_fused_kernel(x_ref,
                      c1w_ref, c1b_ref, c2w_ref, c2b_ref,
                      ln_ref, wqkv_ref, bqkv_ref, wo_ref, bo_ref,
                      w1_ref, b1_ref, w2_ref, b2_ref,
                      hwa_ref, hba_ref, hwb_ref, hbb_ref, hwc_ref, hbc_ref,
                      o_ref, attn_scr, *, num_heads, num_layers):
    xin = x_ref[...].astype(jnp.float32)                  # [bt, S, Cin]
    bt, seq, _ = xin.shape
    dmodel = c1w_ref.shape[-1]
    dh = dmodel // num_heads
    rows = bt * seq

    # --- temporal_conv: (Conv1d k=3 p=1 + BN + GELU) x2, BN folded at init ---
    h = _gelu(_conv3(xin, c1w_ref, c1b_ref[...]))
    h = _gelu(_conv3(h, c2w_ref, c2b_ref[...]))
    h = h.reshape(rows, dmodel)                           # flat rows for matmuls

    # --- residu transformer blocks (static unroll over stacked [L,...] weights)
    for l in range(num_layers):
        g_pre, b_pre = ln_ref[l, 0:1, :], ln_ref[l, 1:2, :]
        g_post, b_post = ln_ref[l, 2:3, :], ln_ref[l, 3:4, :]

        nx = _layernorm(h, g_pre, b_pre)
        qkv = jnp.dot(nx.astype(wqkv_ref.dtype), wqkv_ref[l],
                      preferred_element_type=jnp.float32) + bqkv_ref[l]
        q = qkv[:, :dmodel]          # 1/sqrt(dh) folded into Wq/bq at init time
        k = qkv[:, dmodel:2 * dmodel]
        v = qkv[:, 2 * dmodel:]

        for hd in range(num_heads):
            lo = hd * dh
            qh = q[:, lo:lo + dh].reshape(bt, seq, dh)
            kh = k[:, lo:lo + dh].reshape(bt, seq, dh)
            vh = v[:, lo:lo + dh].reshape(bt, seq, dh)
            s = jnp.einsum("bqd,bkd->bqk", qh, kh,
                           preferred_element_type=jnp.float32)
            s = s - jnp.max(s, axis=-1, keepdims=True)
            p = jnp.exp(s)
            p = p * pl.reciprocal(jnp.sum(p, axis=-1, keepdims=True),
                                  approx=True)
            oh = jnp.einsum("bqk,bkd->bqd", p, vh,
                            preferred_element_type=jnp.float32)
            attn_scr[:, lo:lo + dh] = oh.reshape(rows, dh)   # 32-lane slice write

        attn = jnp.dot(attn_scr[...].astype(wo_ref.dtype), wo_ref[l],
                       preferred_element_type=jnp.float32) + bo_ref[l]
        x1 = h + attn                                       # residual 1 (dropout=id)
        nx2 = _layernorm(x1, g_post, b_post)
        h1 = _gelu(jnp.dot(nx2.astype(w1_ref.dtype), w1_ref[l],
                           preferred_element_type=jnp.float32) + b1_ref[l])
        ff = jnp.dot(h1.astype(w2_ref.dtype), w2_ref[l],
                     preferred_element_type=jnp.float32) + b2_ref[l]
        h = x1 + ff                                         # residual 2

    # --- head: AdaptiveAvgPool1d(1) -> projection(+residual) -> classifier ---
    pooled = jnp.sum(h.reshape(bt, seq, dmodel), axis=1) * (1.0 / seq)   # [bt, D]

    def lin(a, w, b, act):
        y = jnp.dot(a.astype(w.dtype), w, preferred_element_type=jnp.float32) + b
        return _gelu(y) if act else y

    pr = lin(pooled, hwa_ref[0], hba_ref[0], True)          # projection (BN folded)
    pr = lin(pr, hwb_ref[0], hbb_ref[0], True)
    x2 = pooled + pr                                        # residual projection
    cl = lin(x2, hwa_ref[1], hba_ref[1], True)              # classifier
    cl = lin(cl, hwb_ref[1], hbb_ref[1], True)
    logits = lin(cl, hwc_ref[...], hbc_ref[...], False)     # [bt, 128] lane-dense
    o_ref[...] = logits.reshape(bt, 1, logits.shape[-1])


# ----------------------------------------------------------------------------
# Wrapper
# ----------------------------------------------------------------------------
def _pick_bt(B, S, target_rows=1024, max_rows=2048):
    # Big tiles amortize the ~0.35 us per-step overhead; the row cap keeps the
    # FFN [rows, 4D] f32 intermediates inside the default scoped-VMEM budget
    # (16 MiB v5e / 32 MiB v6e + v7x) without needing vmem_limit overrides.
    bt = max(1, min(B, target_rows // max(S, 1)))
    while bt > 1 and bt * S > max_rows:
        bt -= 1
    # Ensure >= 2 grid steps whenever B >= 2 so megacore sharding of the
    # "parallel" axis gives v7x's second TensorCore work (one extra step is
    # essentially free on single-TC v5e/v6e).
    if B >= 2 and pl.cdiv(B, bt) < 2:
        bt = (B + 1) // 2
    return bt


def _const_index_map(ndim):
    zeros = (0,) * ndim
    return lambda i: zeros


_WEIGHT_ORDER = ("conv1_w", "conv1_b", "conv2_w", "conv2_b",
                 "ln", "wqkv", "bqkv", "wo", "bo", "w1", "b1", "w2", "b2",
                 "head_wa", "head_ba", "head_wb", "head_bb",
                 "head_wc", "head_bc")


def gtn_residu_forward(params, x_consigne, x_reponse, num_heads=4):
    x = (x_consigne - x_reponse).astype(jnp.float32)        # [B, S, F]
    if x.shape[-1] > 3:                                     # module's feature adapt
        x = x[:, :, :3]
    B, S, F = x.shape
    D = params["conv1_w"].shape[-1]
    L = params["ln"].shape[0]
    npad = params["head_wc"].shape[-1]

    bt = _pick_bt(B, S)
    in_specs = [pl.BlockSpec((bt, S, F), lambda i: (i, 0, 0))]
    args = [x]
    for name in _WEIGHT_ORDER:
        a = params[name]
        args.append(a)
        in_specs.append(pl.BlockSpec(a.shape, _const_index_map(a.ndim)))

    out = pl.pallas_call(
        functools.partial(_gtn_fused_kernel, num_heads=num_heads, num_layers=L),
        grid=(pl.cdiv(B, bt),),
        out_shape=jax.ShapeDtypeStruct((B, 1, npad), jnp.float32),
        in_specs=in_specs,
        out_specs=pl.BlockSpec((bt, 1, npad), lambda i: (i, 0, 0)),
        scratch_shapes=[pltpu.VMEM((bt * S, D), jnp.float32)],
        compiler_params=pltpu.CompilerParams(
            dimension_semantics=("parallel",)),
    )(*args)
    return out[:, 0, :params["num_classes"]]


# ----------------------------------------------------------------------------
# Parameter initialization (deterministic, mirrors GTNResidu._init_weights;
# weights packed/stacked for the fused kernel, BN + attention scale folded)
# ----------------------------------------------------------------------------
def init_params(key, model_dim=128, num_layers=2, num_heads=4,
                num_classes=9, feature_dim=3, bn_eps=1e-5):
    D, FF = model_dim, 4 * model_dim
    NPAD = ((num_classes + 127) // 128) * 128
    keys = iter(jax.random.split(key, 64))

    def kaiming_in(n_in, n_out):
        # nn.Linear: kaiming_normal_(fan_in, relu); stored transposed [in, out]
        return jax.random.normal(next(keys), (n_in, n_out),
                                 jnp.float32) * math.sqrt(2.0 / n_in)

    def conv_kaiming(c_out, c_in, k):
        # nn.Conv1d: kaiming_normal_(fan_out, relu); stored as [k, c_in, c_out]
        w = jax.random.normal(next(keys), (c_out, c_in, k),
                              jnp.float32) * math.sqrt(2.0 / (c_out * k))
        return jnp.transpose(w, (2, 1, 0))

    def fold_bn(w, b, n):
        # eval-mode BatchNorm1d with default stats (mean=0, var=1, g=1, b=0)
        # TODO(synk): fold real running stats / affine params from a checkpoint.
        scale = jnp.ones((n,), jnp.float32) / jnp.sqrt(jnp.ones((n,)) + bn_eps)
        return w * scale, (b * scale).reshape(1, n)

    p = {"num_classes": num_classes}

    # temporal_conv (conv1 kept f32 — K=3 contraction; conv2 bf16 for the MXU)
    w, b = fold_bn(conv_kaiming(D, feature_dim, 3), jnp.zeros((D,)), D)
    p["conv1_w"], p["conv1_b"] = w.astype(jnp.float32), b
    w, b = fold_bn(conv_kaiming(D, D, 3), jnp.zeros((D,)), D)
    p["conv2_w"], p["conv2_b"] = w.astype(jnp.bfloat16), b

    # transformer blocks, stacked over layers
    dh = D // num_heads
    scale = 1.0 / math.sqrt(dh)
    wqkv_l, bqkv_l, wo_l, bo_l, w1_l, b1_l, w2_l, b2_l = ([] for _ in range(8))
    for _ in range(num_layers):
        bound = math.sqrt(6.0 / (D + 3 * D))     # xavier_uniform on [3D, D]
        in_proj = jax.random.uniform(next(keys), (3 * D, D), jnp.float32,
                                     -bound, bound)
        wq = in_proj[0:D].T * scale              # attention scale folded here
        wk = in_proj[D:2 * D].T
        wv = in_proj[2 * D:3 * D].T
        wqkv_l.append(jnp.concatenate([wq, wk, wv], axis=1))      # [D, 3D]
        bqkv_l.append(jnp.zeros((1, 3 * D), jnp.float32))         # bq scaled (0)
        wo_l.append(kaiming_in(D, D))                             # out_proj Linear
        bo_l.append(jnp.zeros((1, D), jnp.float32))
        w1_l.append(kaiming_in(D, FF)); b1_l.append(jnp.zeros((1, FF), jnp.float32))
        w2_l.append(kaiming_in(FF, D)); b2_l.append(jnp.zeros((1, D), jnp.float32))
    ln1 = jnp.stack([jnp.ones((D,), jnp.float32), jnp.zeros((D,), jnp.float32),
                     jnp.ones((D,), jnp.float32), jnp.zeros((D,), jnp.float32)])
    p["ln"] = jnp.tile(ln1[None], (num_layers, 1, 1))             # [L, 4, D]
    p["wqkv"] = jnp.stack(wqkv_l).astype(jnp.bfloat16)
    p["bqkv"] = jnp.stack(bqkv_l)
    p["wo"] = jnp.stack(wo_l).astype(jnp.bfloat16)
    p["bo"] = jnp.stack(bo_l)
    p["w1"] = jnp.stack(w1_l).astype(jnp.bfloat16)
    p["b1"] = jnp.stack(b1_l)
    p["w2"] = jnp.stack(w2_l).astype(jnp.bfloat16)
    p["b2"] = jnp.stack(b2_l)

    # head: projection (proj1, proj2) and classifier (cls1, cls2, cls3)
    proj1, proj1_b = fold_bn(kaiming_in(D, 2 * D), jnp.zeros((2 * D,)), 2 * D)
    proj2, proj2_b = fold_bn(kaiming_in(2 * D, D), jnp.zeros((D,)), D)
    cls1, cls1_b = fold_bn(kaiming_in(D, 2 * D), jnp.zeros((2 * D,)), 2 * D)
    cls2, cls2_b = fold_bn(kaiming_in(2 * D, D), jnp.zeros((D,)), D)
    cls3 = kaiming_in(D, num_classes)
    p["head_wa"] = jnp.stack([proj1, cls1]).astype(jnp.bfloat16)   # [2, D, 2D]
    p["head_ba"] = jnp.stack([proj1_b, cls1_b])                    # [2, 1, 2D]
    p["head_wb"] = jnp.stack([proj2, cls2]).astype(jnp.bfloat16)   # [2, 2D, D]
    p["head_bb"] = jnp.stack([proj2_b, cls2_b])                    # [2, 1, D]
    p["head_wc"] = jnp.pad(cls3, ((0, 0), (0, NPAD - num_classes))
                           ).astype(jnp.bfloat16)                  # lane-dense slab
    p["head_bc"] = jnp.zeros((1, NPAD), jnp.float32)
    return p


if __name__ == "__main__":
    # small deterministic example: batch=2, seq=8, consigne_dim=reponse_dim=3,
    # model_dim=128, nhead=8 -> min(8,4)=4 attention heads, num_layers=2
    key = jax.random.PRNGKey(0)
    kp, kc, kr = jax.random.split(key, 3)

    B, S, F = 2, 8, 3
    MODEL_DIM, NUM_LAYERS, NUM_HEADS, NUM_CLASSES = 128, 2, 4, 9

    params = init_params(kp, model_dim=MODEL_DIM, num_layers=NUM_LAYERS,
                         num_heads=NUM_HEADS, num_classes=NUM_CLASSES,
                         feature_dim=F)
    x_consigne = jax.random.normal(kc, (B, S, F), jnp.float32)
    x_reponse = jax.random.normal(kr, (B, S, F), jnp.float32)

    logits = gtn_residu_forward(params, x_consigne, x_reponse,
                                num_heads=NUM_HEADS)
    jax.block_until_ready(logits)
    assert logits.shape == (B, NUM_CLASSES)
    assert bool(jnp.all(jnp.isfinite(logits)))
    print("KERNEL_OK")
</pallas_src>

<mosaic_0001>
module attributes {stable_mosaic.version = 11 : i64} {
  func.func @_gtn_fused_kernel(%arg0: i32, %arg1: memref<1x8x3xf32, #tpu.memory_space<vmem>>, %arg2: memref<3x3x128xf32, #tpu.memory_space<vmem>>, %arg3: memref<1x128xf32, #tpu.memory_space<vmem>>, %arg4: memref<3x128x128xbf16, #tpu.memory_space<vmem>>, %arg5: memref<1x128xf32, #tpu.memory_space<vmem>>, %arg6: memref<2x4x128xf32, #tpu.memory_space<vmem>>, %arg7: memref<2x128x384xbf16, #tpu.memory_space<vmem>>, %arg8: memref<2x1x384xf32, #tpu.memory_space<vmem>>, %arg9: memref<2x128x128xbf16, #tpu.memory_space<vmem>>, %arg10: memref<2x1x128xf32, #tpu.memory_space<vmem>>, %arg11: memref<2x128x512xbf16, #tpu.memory_space<vmem>>, %arg12: memref<2x1x512xf32, #tpu.memory_space<vmem>>, %arg13: memref<2x512x128xbf16, #tpu.memory_space<vmem>>, %arg14: memref<2x1x128xf32, #tpu.memory_space<vmem>>, %arg15: memref<2x128x256xbf16, #tpu.memory_space<vmem>>, %arg16: memref<2x1x256xf32, #tpu.memory_space<vmem>>, %arg17: memref<2x256x128xbf16, #tpu.memory_space<vmem>>, %arg18: memref<2x1x128xf32, #tpu.memory_space<vmem>>, %arg19: memref<128x128xbf16, #tpu.memory_space<vmem>>, %arg20: memref<1x128xf32, #tpu.memory_space<vmem>>, %arg21: memref<1x1x128xf32, #tpu.memory_space<vmem>>, %arg22: memref<8x128xf32, #tpu.memory_space<vmem>>) attributes {dimension_semantics = [#tpu.dimension_semantics<parallel>], iteration_bounds = array<i64: 2>, scalar_prefetch = 0 : i64, scratch_operands = 1 : i64, tpu.core_type = #tpu.core_type<tc>, window_params = [{transform_indices = @transform_0, window_bounds = array<i64: 1, 8, 3>}, {pipeline_mode = #tpu.pipeline_mode<synchronous>, transform_indices = @transform_1, window_bounds = array<i64: 3, 3, 128>}, {pipeline_mode = #tpu.pipeline_mode<synchronous>, transform_indices = @transform_2, window_bounds = array<i64: 1, 128>}, {pipeline_mode = #tpu.pipeline_mode<synchronous>, transform_indices = @transform_3, window_bounds = array<i64: 3, 128, 128>}, {pipeline_mode = #tpu.pipeline_mode<synchronous>, transform_indices = @transform_4, window_bounds = array<i64: 1, 128>}, {pipeline_mode = #tpu.pipeline_mode<synchronous>, transform_indices = @transform_5, window_bounds = array<i64: 2, 4, 128>}, {pipeline_mode = #tpu.pipeline_mode<synchronous>, transform_indices = @transform_6, window_bounds = array<i64: 2, 128, 384>}, {pipeline_mode = #tpu.pipeline_mode<synchronous>, transform_indices = @transform_7, window_bounds = array<i64: 2, 1, 384>}, {pipeline_mode = #tpu.pipeline_mode<synchronous>, transform_indices = @transform_8, window_bounds = array<i64: 2, 128, 128>}, {pipeline_mode = #tpu.pipeline_mode<synchronous>, transform_indices = @transform_9, window_bounds = array<i64: 2, 1, 128>}, {pipeline_mode = #tpu.pipeline_mode<synchronous>, transform_indices = @transform_10, window_bounds = array<i64: 2, 128, 512>}, {pipeline_mode = #tpu.pipeline_mode<synchronous>, transform_indices = @transform_11, window_bounds = array<i64: 2, 1, 512>}, {pipeline_mode = #tpu.pipeline_mode<synchronous>, transform_indices = @transform_12, window_bounds = array<i64: 2, 512, 128>}, {pipeline_mode = #tpu.pipeline_mode<synchronous>, transform_indices = @transform_13, window_bounds = array<i64: 2, 1, 128>}, {pipeline_mode = #tpu.pipeline_mode<synchronous>, transform_indices = @transform_14, window_bounds = array<i64: 2, 128, 256>}, {pipeline_mode = #tpu.pipeline_mode<synchronous>, transform_indices = @transform_15, window_bounds = array<i64: 2, 1, 256>}, {pipeline_mode = #tpu.pipeline_mode<synchronous>, transform_indices = @transform_16, window_bounds = array<i64: 2, 256, 128>}, {pipeline_mode = #tpu.pipeline_mode<synchronous>, transform_indices = @transform_17, window_bounds = array<i64: 2, 1, 128>}, {pipeline_mode = #tpu.pipeline_mode<synchronous>, transform_indices = @transform_18, window_bounds = array<i64: 128, 128>}, {pipeline_mode = #tpu.pipeline_mode<synchronous>, transform_indices = @transform_19, window_bounds = array<i64: 1, 128>}, {transform_indices = @transform_20, window_bounds = array<i64: 1, 1, 128>}]} {
    %c0 = arith.constant 0 : index
    %c0_0 = arith.constant 0 : index
    %c0_1 = arith.constant 0 : index
    %0 = vector.load %arg1[%c0, %c0_0, %c0_1] : memref<1x8x3xf32, #tpu.memory_space<vmem>>, vector<1x8x3xf32>
    %c0_2 = arith.constant 0 : index
    %c0_3 = arith.constant 0 : index
    %1 = vector.load %arg3[%c0_2, %c0_3] : memref<1x128xf32, #tpu.memory_space<vmem>>, vector<1x128xf32>
    %2 = vector.shape_cast %0 : vector<1x8x3xf32> to vector<8x3xf32>
    %c0_4 = arith.constant 0 : index
    %c0_5 = arith.constant 0 : index
    %c0_6 = arith.constant 0 : index
    %3 = vector.load %arg2[%c0_4, %c0_5, %c0_6] : memref<3x3x128xf32, #tpu.memory_space<vmem>>, vector<1x3x128xf32>
    %4 = vector.shape_cast %3 : vector<1x3x128xf32> to vector<3x128xf32>
    %cst = arith.constant dense<0.000000e+00> : vector<8x128xf32>
    %5 = tpu.matmul %2, %4, %cst {dimension_numbers = #tpu.dot_dimension_numbers<[1], [0], [0], [1], [0, 0, 1, 1], [], []>} : vector<8x3xf32>, vector<3x128xf32>, vector<8x128xf32> -> vector<8x128xf32>
    %6 = vector.shape_cast %5 : vector<8x128xf32> to vector<1x8x128xf32>
    %c1 = arith.constant 1 : index
    %c0_7 = arith.constant 0 : index
    %c0_8 = arith.constant 0 : index
    %7 = vector.load %arg2[%c1, %c0_7, %c0_8] : memref<3x3x128xf32, #tpu.memory_space<vmem>>, vector<1x3x128xf32>
    %8 = vector.shape_cast %7 : vector<1x3x128xf32> to vector<3x128xf32>
    %cst_9 = arith.constant dense<0.000000e+00> : vector<8x128xf32>
    %9 = tpu.matmul %2, %8, %cst_9 {dimension_numbers = #tpu.dot_dimension_numbers<[1], [0], [0], [1], [0, 0, 1, 1], [], []>} : vector<8x3xf32>, vector<3x128xf32>, vector<8x128xf32> -> vector<8x128xf32>
    %10 = vector.shape_cast %9 : vector<8x128xf32> to vector<1x8x128xf32>
    %c2 = arith.constant 2 : index
    %c0_10 = arith.constant 0 : index
    %c0_11 = arith.constant 0 : index
    %11 = vector.load %arg2[%c2, %c0_10, %c0_11] : memref<3x3x128xf32, #tpu.memory_space<vmem>>, vector<1x3x128xf32>
    %12 = vector.shape_cast %11 : vector<1x3x128xf32> to vector<3x128xf32>
    %cst_12 = arith.constant dense<0.000000e+00> : vector<8x128xf32>
    %13 = tpu.matmul %2, %12, %cst_12 {dimension_numbers = #tpu.dot_dimension_numbers<[1], [0], [0], [1], [0, 0, 1, 1], [], []>} : vector<8x3xf32>, vector<3x128xf32>, vector<8x128xf32> -> vector<8x128xf32>
    %14 = vector.shape_cast %13 : vector<8x128xf32> to vector<1x8x128xf32>
    %c1_i32 = arith.constant 1 : i32
    %15 = tpu.dynamic_rotate %6 by %c1_i32 dim 1 : vector<1x8x128xf32>, i32 -> vector<1x8x128xf32>
    %16 = tpu.iota {dimensions = array<i32: 1>} : vector<1x8x128xi32>
    %c1_i32_13 = arith.constant 1 : i32
    %17 = vector.broadcast %c1_i32_13 : i32 to vector<1x8x128xi32>
    %18 = arith.cmpi sge, %16, %17 : vector<1x8x128xi32>
    %cst_14 = arith.constant 0.000000e+00 : f32
    %19 = vector.broadcast %cst_14 : f32 to vector<1x8x128xf32>
    %20 = arith.select %18, %15, %19 : vector<1x8x128xi1>, vector<1x8x128xf32>
    %21 = arith.addf %20, %10 : vector<1x8x128xf32>
    %c7_i32 = arith.constant 7 : i32
    %22 = tpu.dynamic_rotate %14 by %c7_i32 dim 1 : vector<1x8x128xf32>, i32 -> vector<1x8x128xf32>
    %23 = tpu.iota {dimensions = array<i32: 1>} : vector<1x8x128xi32>
    %c7_i32_15 = arith.constant 7 : i32
    %24 = vector.broadcast %c7_i32_15 : i32 to vector<1x8x128xi32>
    %25 = arith.cmpi slt, %23, %24 : vector<1x8x128xi32>
    %cst_16 = arith.constant 0.000000e+00 : f32
    %26 = vector.broadcast %cst_16 : f32 to vector<1x8x128xf32>
    %27 = arith.select %25, %22, %26 : vector<1x8x128xi1>, vector<1x8x128xf32>
    %28 = arith.addf %21, %27 : vector<1x8x128xf32>
    %29 = vector.shape_cast %1 : vector<1x128xf32> to vector<1x1x128xf32>
    %30 = vector.broadcast %29 : vector<1x1x128xf32> to vector<1x8x128xf32>
    %31 = arith.addf %28, %30 : vector<1x8x128xf32>
    %cst_17 = arith.constant 5.000000e-01 : f32
    %32 = vector.broadcast %cst_17 : f32 to vector<1x8x128xf32>
    %33 = arith.mulf %32, %31 : vector<1x8x128xf32>
    %cst_18 = arith.constant 4.471500e-02 : f32
    %34 = vector.broadcast %cst_18 : f32 to vector<1x8x128xf32>
    %35 = arith.mulf %34, %31 : vector<1x8x128xf32>
    %36 = arith.mulf %35, %31 : vector<1x8x128xf32>
    %37 = arith.mulf %36, %31 : vector<1x8x128xf32>
    %38 = arith.addf %31, %37 : vector<1x8x128xf32>
    %cst_19 = arith.constant 0.797884583 : f32
    %39 = vector.broadcast %cst_19 : f32 to vector<1x8x128xf32>
    %40 = arith.mulf %39, %38 : vector<1x8x128xf32>
    %41 = math.tanh %40 : vector<1x8x128xf32>
    %cst_20 = arith.constant 1.000000e+00 : f32
    %42 = vector.broadcast %cst_20 : f32 to vector<1x8x128xf32>
    %43 = arith.addf %42, %41 : vector<1x8x128xf32>
    %44 = arith.mulf %33, %43 : vector<1x8x128xf32>
    %c0_21 = arith.constant 0 : index
    %c0_22 = arith.constant 0 : index
    %45 = vector.load %arg5[%c0_21, %c0_22] : memref<1x128xf32, #tpu.memory_space<vmem>>, vector<1x128xf32>
    %46 = vector.shape_cast %44 : vector<1x8x128xf32> to vector<8x128xf32>
    %47 = arith.truncf %46 : vector<8x128xf32> to vector<8x128xbf16>
    %c0_23 = arith.constant 0 : index
    %c0_24 = arith.constant 0 : index
    %c0_25 = arith.constant 0 : index
    %48 = vector.load %arg4[%c0_23, %c0_24, %c0_25] : memref<3x128x128xbf16, #tpu.memory_space<vmem>>, vector<1x128x128xbf16>
    %49 = vector.shape_cast %48 : vector<1x128x128xbf16> to vector<128x128xbf16>
    %cst_26 = arith.constant dense<0.000000e+00> : vector<8x128xf32>
    %50 = tpu.matmul %47, %49, %cst_26 {dimension_numbers = #tpu.dot_dimension_numbers<[1], [0], [0], [1], [0, 0, 1, 1], [], []>} : vector<8x128xbf16>, vector<128x128xbf16>, vector<8x128xf32> -> vector<8x128xf32>
    %51 = vector.shape_cast %50 : vector<8x128xf32> to vector<1x8x128xf32>
    %c1_27 = arith.constant 1 : index
    %c0_28 = arith.constant 0 : index
    %c0_29 = arith.constant 0 : index
    %52 = vector.load %arg4[%c1_27, %c0_28, %c0_29] : memref<3x128x128xbf16, #tpu.memory_space<vmem>>, vector<1x128x128xbf16>
    %53 = vector.shape_cast %52 : vector<1x128x128xbf16> to vector<128x128xbf16>
    %cst_30 = arith.constant dense<0.000000e+00> : vector<8x128xf32>
    %54 = tpu.matmul %47, %53, %cst_30 {dimension_numbers = #tpu.dot_dimension_numbers<[1], [0], [0], [1], [0, 0, 1, 1], [], []>} : vector<8x128xbf16>, vector<128x128xbf16>, vector<8x128xf32> -> vector<8x128xf32>
    %55 = vector.shape_cast %54 : vector<8x128xf32> to vector<1x8x128xf32>
    %c2_31 = arith.constant 2 : index
    %c0_32 = arith.constant 0 : index
    %c0_33 = arith.constant 0 : index
    %56 = vector.load %arg4[%c2_31, %c0_32, %c0_33] : memref<3x128x128xbf16, #tpu.memory_space<vmem>>, vector<1x128x128xbf16>
    %57 = vector.shape_cast %56 : vector<1x128x128xbf16> to vector<128x128xbf16>
    %cst_34 = arith.constant dense<0.000000e+00> : vector<8x128xf32>
    %58 = tpu.matmul %47, %57, %cst_34 {dimension_numbers = #tpu.dot_dimension_numbers<[1], [0], [0], [1], [0, 0, 1, 1], [], []>} : vector<8x128xbf16>, vector<128x128xbf16>, vector<8x128xf32> -> vector<8x128xf32>
    %59 = vector.shape_cast %58 : vector<8x128xf32> to vector<1x8x128xf32>
    %c1_i32_35 = arith.constant 1 : i32
    %60 = tpu.dynamic_rotate %51 by %c1_i32_35 dim 1 : vector<1x8x128xf32>, i32 -> vector<1x8x128xf32>
    %61 = tpu.iota {dimensions = array<i32: 1>} : vector<1x8x128xi32>
    %c1_i32_36 = arith.constant 1 : i32
    %62 = vector.broadcast %c1_i32_36 : i32 to vector<1x8x128xi32>
    %63 = arith.cmpi sge, %61, %62 : vector<1x8x128xi32>
    %cst_37 = arith.constant 0.000000e+00 : f32
    %64 = vector.broadcast %cst_37 : f32 to vector<1x8x128xf32>
    %65 = arith.select %63, %60, %64 : vector<1x8x128xi1>, vector<1x8x128xf32>
    %66 = arith.addf %65, %55 : vector<1x8x128xf32>
    %c7_i32_38 = arith.constant 7 : i32
    %67 = tpu.dynamic_rotate %59 by %c7_i32_38 dim 1 : vector<1x8x128xf32>, i32 -> vector<1x8x128xf32>
    %68 = tpu.iota {dimensions = array<i32: 1>} : vector<1x8x128xi32>
    %c7_i32_39 = arith.constant 7 : i32
    %69 = vector.broadcast %c7_i32_39 : i32 to vector<1x8x128xi32>
    %70 = arith.cmpi slt, %68, %69 : vector<1x8x128xi32>
    %cst_40 = arith.constant 0.000000e+00 : f32
    %71 = vector.broadcast %cst_40 : f32 to vector<1x8x128xf32>
    %72 = arith.select %70, %67, %71 : vector<1x8x128xi1>, vector<1x8x128xf32>
    %73 = arith.addf %66, %72 : vector<1x8x128xf32>
    %74 = vector.shape_cast %45 : vector<1x128xf32> to vector<1x1x128xf32>
    %75 = vector.broadcast %74 : vector<1x1x128xf32> to vector<1x8x128xf32>
    %76 = arith.addf %73, %75 : vector<1x8x128xf32>
    %cst_41 = arith.constant 5.000000e-01 : f32
    %77 = vector.broadcast %cst_41 : f32 to vector<1x8x128xf32>
    %78 = arith.mulf %77, %76 : vector<1x8x128xf32>
    %cst_42 = arith.constant 4.471500e-02 : f32
    %79 = vector.broadcast %cst_42 : f32 to vector<1x8x128xf32>
    %80 = arith.mulf %79, %76 : vector<1x8x128xf32>
    %81 = arith.mulf %80, %76 : vector<1x8x128xf32>
    %82 = arith.mulf %81, %76 : vector<1x8x128xf32>
    %83 = arith.addf %76, %82 : vector<1x8x128xf32>
    %cst_43 = arith.constant 0.797884583 : f32
    %84 = vector.broadcast %cst_43 : f32 to vector<1x8x128xf32>
    %85 = arith.mulf %84, %83 : vector<1x8x128xf32>
    %86 = math.tanh %85 : vector<1x8x128xf32>
    %cst_44 = arith.constant 1.000000e+00 : f32
    %87 = vector.broadcast %cst_44 : f32 to vector<1x8x128xf32>
    %88 = arith.addf %87, %86 : vector<1x8x128xf32>
    %89 = arith.mulf %78, %88 : vector<1x8x128xf32>
    %90 = vector.shape_cast %89 : vector<1x8x128xf32> to vector<8x128xf32>
    %c0_45 = arith.constant 0 : index
    %c0_46 = arith.constant 0 : index
    %c0_47 = arith.constant 0 : index
    %91 = vector.load %arg6[%c0_45, %c0_46, %c0_47] : memref<2x4x128xf32, #tpu.memory_space<vmem>>, vector<1x1x128xf32>
    %92 = vector.shape_cast %91 : vector<1x1x128xf32> to vector<1x128xf32>
    %c0_48 = arith.constant 0 : index
    %c1_49 = arith.constant 1 : index
    %c0_50 = arith.constant 0 : index
    %93 = vector.load %arg6[%c0_48, %c1_49, %c0_50] : memref<2x4x128xf32, #tpu.memory_space<vmem>>, vector<1x1x128xf32>
    %94 = vector.shape_cast %93 : vector<1x1x128xf32> to vector<1x128xf32>
    %c0_51 = arith.constant 0 : index
    %c2_52 = arith.constant 2 : index
    %c0_53 = arith.constant 0 : index
    %95 = vector.load %arg6[%c0_51, %c2_52, %c0_53] : memref<2x4x128xf32, #tpu.memory_space<vmem>>, vector<1x1x128xf32>
    %96 = vector.shape_cast %95 : vector<1x1x128xf32> to vector<1x128xf32>
    %c0_54 = arith.constant 0 : index
    %c3 = arith.constant 3 : index
    %c0_55 = arith.constant 0 : index
    %97 = vector.load %arg6[%c0_54, %c3, %c0_55] : memref<2x4x128xf32, #tpu.memory_space<vmem>>, vector<1x1x128xf32>
    %98 = vector.shape_cast %97 : vector<1x1x128xf32> to vector<1x128xf32>
    %cst_56 = arith.constant dense<0.000000e+00> : vector<8xf32>
    %99 = vector.multi_reduction <add>, %90, %cst_56 [1] : vector<8x128xf32> to vector<8xf32>
    %100 = vector.shape_cast %99 : vector<8xf32> to vector<8x1xf32>
    %cst_57 = arith.constant 1.280000e+02 : f32
    %101 = vector.broadcast %cst_57 : f32 to vector<8x1xf32>
    %102 = arith.divf %100, %101 : vector<8x1xf32>
    %103 = vector.broadcast %102 : vector<8x1xf32> to vector<8x128xf32>
    %104 = arith.subf %90, %103 : vector<8x128xf32>
    %105 = arith.mulf %104, %104 : vector<8x128xf32>
    %cst_58 = arith.constant dense<0.000000e+00> : vector<8xf32>
    %106 = vector.multi_reduction <add>, %105, %cst_58 [1] : vector<8x128xf32> to vector<8xf32>
    %107 = vector.shape_cast %106 : vector<8xf32> to vector<8x1xf32>
    %cst_59 = arith.constant 1.280000e+02 : f32
    %108 = vector.broadcast %cst_59 : f32 to vector<8x1xf32>
    %109 = arith.divf %107, %108 : vector<8x1xf32>
    %110 = vector.broadcast %102 : vector<8x1xf32> to vector<8x128xf32>
    %111 = arith.subf %90, %110 : vector<8x128xf32>
    %cst_60 = arith.constant 9.99999974E-6 : f32
    %112 = vector.broadcast %cst_60 : f32 to vector<8x1xf32>
    %113 = arith.addf %109, %112 : vector<8x1xf32>
    %114 = math.rsqrt %113 : vector<8x1xf32>
    %115 = vector.broadcast %114 : vector<8x1xf32> to vector<8x128xf32>
    %116 = arith.mulf %111, %115 : vector<8x128xf32>
    %117 = vector.broadcast %92 : vector<1x128xf32> to vector<8x128xf32>
    %118 = arith.mulf %116, %117 : vector<8x128xf32>
    %119 = vector.broadcast %94 : vector<1x128xf32> to vector<8x128xf32>
    %120 = arith.addf %118, %119 : vector<8x128xf32>
    %121 = arith.truncf %120 : vector<8x128xf32> to vector<8x128xbf16>
    %c0_61 = arith.constant 0 : index
    %c0_62 = arith.constant 0 : index
    %c0_63 = arith.constant 0 : index
    %122 = vector.load %arg7[%c0_61, %c0_62, %c0_63] : memref<2x128x384xbf16, #tpu.memory_space<vmem>>, vector<1x128x384xbf16>
    %123 = vector.shape_cast %122 : vector<1x128x384xbf16> to vector<128x384xbf16>
    %cst_64 = arith.constant dense<0.000000e+00> : vector<8x384xf32>
    %124 = tpu.matmul %121, %123, %cst_64 {dimension_numbers = #tpu.dot_dimension_numbers<[1], [0], [0], [1], [0, 0, 1, 1], [], []>} : vector<8x128xbf16>, vector<128x384xbf16>, vector<8x384xf32> -> vector<8x384xf32>
    %c0_65 = arith.constant 0 : index
    %c0_66 = arith.constant 0 : index
    %c0_67 = arith.constant 0 : index
    %125 = vector.load %arg8[%c0_65, %c0_66, %c0_67] : memref<2x1x384xf32, #tpu.memory_space<vmem>>, vector<1x1x384xf32>
    %126 = vector.shape_cast %125 : vector<1x1x384xf32> to vector<1x384xf32>
    %127 = vector.broadcast %126 : vector<1x384xf32> to vector<8x384xf32>
    %128 = arith.addf %124, %127 : vector<8x384xf32>
    %129 = vector.extract_strided_slice %128 {offsets = [0, 0], sizes = [8, 128], strides = [1, 1]} : vector<8x384xf32> to vector<8x128xf32>
    %130 = vector.extract_strided_slice %128 {offsets = [0, 128], sizes = [8, 128], strides = [1, 1]} : vector<8x384xf32> to vector<8x128xf32>
    %131 = vector.extract_strided_slice %128 {offsets = [0, 256], sizes = [8, 128], strides = [1, 1]} : vector<8x384xf32> to vector<8x128xf32>
    %132 = vector.extract_strided_slice %129 {offsets = [0, 0], sizes = [8, 32], strides = [1, 1]} : vector<8x128xf32> to vector<8x32xf32>
    %133 = vector.shape_cast %132 : vector<8x32xf32> to vector<1x8x32xf32>
    %134 = vector.extract_strided_slice %130 {offsets = [0, 0], sizes = [8, 32], strides = [1, 1]} : vector<8x128xf32> to vector<8x32xf32>
    %135 = vector.shape_cast %134 : vector<8x32xf32> to vector<1x8x32xf32>
    %136 = vector.extract_strided_slice %131 {offsets = [0, 0], sizes = [8, 32], strides = [1, 1]} : vector<8x128xf32> to vector<8x32xf32>
    %137 = vector.shape_cast %136 : vector<8x32xf32> to vector<1x8x32xf32>
    "tpu.trace_start"() <{level = 10 : i32, message = "bqd,bkd->bqk"}> : () -> ()
    %cst_68 = arith.constant dense<0.000000e+00> : vector<1x8x8xf32>
    %138 = tpu.matmul %133, %135, %cst_68 {dimension_numbers = #tpu.dot_dimension_numbers<[2], [2], [1], [1], [0, 0, 0, 1, 1, 1], [0], [0]>} : vector<1x8x32xf32>, vector<1x8x32xf32>, vector<1x8x8xf32> -> vector<1x8x8xf32>
    "tpu.trace_stop"() : () -> ()
    %cst_69 = arith.constant dense<0xFF800000> : vector<1x8xf32>
    %139 = vector.multi_reduction <maximumf>, %138, %cst_69 [2] : vector<1x8x8xf32> to vector<1x8xf32>
    %140 = vector.shape_cast %139 : vector<1x8xf32> to vector<1x8x1xf32>
    %141 = vector.broadcast %140 : vector<1x8x1xf32> to vector<1x8x8xf32>
    %142 = arith.subf %138, %141 : vector<1x8x8xf32>
    %143 = math.exp %142 : vector<1x8x8xf32>
    %cst_70 = arith.constant dense<0.000000e+00> : vector<1x8xf32>
    %144 = vector.multi_reduction <add>, %143, %cst_70 [2] : vector<1x8x8xf32> to vector<1x8xf32>
    %145 = vector.shape_cast %144 : vector<1x8xf32> to vector<1x8x1xf32>
    %146 = tpu.reciprocal %145 {approx = true} : vector<1x8x1xf32> -> vector<1x8x1xf32>
    %147 = vector.broadcast %146 : vector<1x8x1xf32> to vector<1x8x8xf32>
    %148 = arith.mulf %143, %147 : vector<1x8x8xf32>
    "tpu.trace_start"() <{level = 10 : i32, message = "bqk,bkd->bqd"}> : () -> ()
    %cst_71 = arith.constant dense<0.000000e+00> : vector<1x8x32xf32>
    %149 = tpu.matmul %148, %137, %cst_71 {dimension_numbers = #tpu.dot_dimension_numbers<[2], [1], [1], [2], [0, 0, 0, 1, 1, 2], [0], [0]>} : vector<1x8x8xf32>, vector<1x8x32xf32>, vector<1x8x32xf32> -> vector<1x8x32xf32>
    "tpu.trace_stop"() : () -> ()
    %150 = vector.shape_cast %149 : vector<1x8x32xf32> to vector<8x32xf32>
    %c0_72 = arith.constant 0 : index
    %c0_73 = arith.constant 0 : index
    %151 = vector.load %arg22[%c0_72, %c0_73] : memref<8x128xf32, #tpu.memory_space<vmem>>, vector<8x32xf32>
    tpu.vector_store %arg22[%c0_72, %c0_73], %150 {strides = array<i32>} : memref<8x128xf32, #tpu.memory_space<vmem>>, vector<8x32xf32>,
    %152 = vector.extract_strided_slice %129 {offsets = [0, 32], sizes = [8, 32], strides = [1, 1]} : vector<8x128xf32> to vector<8x32xf32>
    %153 = vector.shape_cast %152 : vector<8x32xf32> to vector<1x8x32xf32>
    %154 = vector.extract_strided_slice %130 {offsets = [0, 32], sizes = [8, 32], strides = [1, 1]} : vector<8x128xf32> to vector<8x32xf32>
    %155 = vector.shape_cast %154 : vector<8x32xf32> to vector<1x8x32xf32>
    %156 = vector.extract_strided_slice %131 {offsets = [0, 32], sizes = [8, 32], strides = [1, 1]} : vector<8x128xf32> to vector<8x32xf32>
    %157 = vector.shape_cast %156 : vector<8x32xf32> to vector<1x8x32xf32>
    "tpu.trace_start"() <{level = 10 : i32, message = "bqd,bkd->bqk"}> : () -> ()
    %cst_74 = arith.constant dense<0.000000e+00> : vector<1x8x8xf32>
    %158 = tpu.matmul %153, %155, %cst_74 {dimension_numbers = #tpu.dot_dimension_numbers<[2], [2], [1], [1], [0, 0, 0, 1, 1, 1], [0], [0]>} : vector<1x8x32xf32>, vector<1x8x32xf32>, vector<1x8x8xf32> -> vector<1x8x8xf32>
    "tpu.trace_stop"() : () -> ()
    %cst_75 = arith.constant dense<0xFF800000> : vector<1x8xf32>
    %159 = vector.multi_reduction <maximumf>, %158, %cst_75 [2] : vector<1x8x8xf32> to vector<1x8xf32>
    %160 = vector.shape_cast %159 : vector<1x8xf32> to vector<1x8x1xf32>
    %161 = vector.broadcast %160 : vector<1x8x1xf32> to vector<1x8x8xf32>
    %162 = arith.subf %158, %161 : vector<1x8x8xf32>
    %163 = math.exp %162 : vector<1x8x8xf32>
    %cst_76 = arith.constant dense<0.000000e+00> : vector<1x8xf32>
    %164 = vector.multi_reduction <add>, %163, %cst_76 [2] : vector<1x8x8xf32> to vector<1x8xf32>
    %165 = vector.shape_cast %164 : vector<1x8xf32> to vector<1x8x1xf32>
    %166 = tpu.reciprocal %165 {approx = true} : vector<1x8x1xf32> -> vector<1x8x1xf32>
    %167 = vector.broadcast %166 : vector<1x8x1xf32> to vector<1x8x8xf32>
    %168 = arith.mulf %163, %167 : vector<1x8x8xf32>
    "tpu.trace_start"() <{level = 10 : i32, message = "bqk,bkd->bqd"}> : () -> ()
    %cst_77 = arith.constant dense<0.000000e+00> : vector<1x8x32xf32>
    %169 = tpu.matmul %168, %157, %cst_77 {dimension_numbers = #tpu.dot_dimension_numbers<[2], [1], [1], [2], [0, 0, 0, 1, 1, 2], [0], [0]>} : vector<1x8x8xf32>, vector<1x8x32xf32>, vector<1x8x32xf32> -> vector<1x8x32xf32>
    "tpu.trace_stop"() : () -> ()
    %170 = vector.shape_cast %169 : vector<1x8x32xf32> to vector<8x32xf32>
    %c0_78 = arith.constant 0 : index
    %c32 = arith.constant 32 : index
    %171 = vector.load %arg22[%c0_78, %c32] : memref<8x128xf32, #tpu.memory_space<vmem>>, vector<8x32xf32>
    tpu.vector_store %arg22[%c0_78, %c32], %170 {strides = array<i32>} : memref<8x128xf32, #tpu.memory_space<vmem>>, vector<8x32xf32>,
    %172 = vector.extract_strided_slice %129 {offsets = [0, 64], sizes = [8, 32], strides = [1, 1]} : vector<8x128xf32> to vector<8x32xf32>
    %173 = vector.shape_cast %172 : vector<8x32xf32> to vector<1x8x32xf32>
    %174 = vector.extract_strided_slice %130 {offsets = [0, 64], sizes = [8, 32], strides = [1, 1]} : vector<8x128xf32> to vector<8x32xf32>
    %175 = vector.shape_cast %174 : vector<8x32xf32> to vector<1x8x32xf32>
    %176 = vector.extract_strided_slice %131 {offsets = [0, 64], sizes = [8, 32], strides = [1, 1]} : vector<8x128xf32> to vector<8x32xf32>
    %177 = vector.shape_cast %176 : vector<8x32xf32> to vector<1x8x32xf32>
    "tpu.trace_start"() <{level = 10 : i32, message = "bqd,bkd->bqk"}> : () -> ()
    %cst_79 = arith.constant dense<0.000000e+00> : vector<1x8x8xf32>
    %178 = tpu.matmul %173, %175, %cst_79 {dimension_numbers = #tpu.dot_dimension_numbers<[2], [2], [1], [1], [0, 0, 0, 1, 1, 1], [0], [0]>} : vector<1x8x32xf32>, vector<1x8x32xf32>, vector<1x8x8xf32> -> vector<1x8x8xf32>
    "tpu.trace_stop"() : () -> ()
    %cst_80 = arith.constant dense<0xFF800000> : vector<1x8xf32>
    %179 = vector.multi_reduction <maximumf>, %178, %cst_80 [2] : vector<1x8x8xf32> to vector<1x8xf32>
    %180 = vector.shape_cast %179 : vector<1x8xf32> to vector<1x8x1xf32>
    %181 = vector.broadcast %180 : vector<1x8x1xf32> to vector<1x8x8xf32>
    %182 = arith.subf %178, %181 : vector<1x8x8xf32>
    %183 = math.exp %182 : vector<1x8x8xf32>
    %cst_81 = arith.constant dense<0.000000e+00> : vector<1x8xf32>
    %184 = vector.multi_reduction <add>, %183, %cst_81 [2] : vector<1x8x8xf32> to vector<1x8xf32>
    %185 = vector.shape_cast %184 : vector<1x8xf32> to vector<1x8x1xf32>
    %186 = tpu.reciprocal %185 {approx = true} : vector<1x8x1xf32> -> vector<1x8x1xf32>
    %187 = vector.broadcast %186 : vector<1x8x1xf32> to vector<1x8x8xf32>
    %188 = arith.mulf %183, %187 : vector<1x8x8xf32>
    "tpu.trace_start"() <{level = 10 : i32, message = "bqk,bkd->bqd"}> : () -> ()
    %cst_82 = arith.constant dense<0.000000e+00> : vector<1x8x32xf32>
    %189 = tpu.matmul %188, %177, %cst_82 {dimension_numbers = #tpu.dot_dimension_numbers<[2], [1], [1], [2], [0, 0, 0, 1, 1, 2], [0], [0]>} : vector<1x8x8xf32>, vector<1x8x32xf32>, vector<1x8x32xf32> -> vector<1x8x32xf32>
    "tpu.trace_stop"() : () -> ()
    %190 = vector.shape_cast %189 : vector<1x8x32xf32> to vector<8x32xf32>
    %c0_83 = arith.constant 0 : index
    %c64 = arith.constant 64 : index
    %191 = vector.load %arg22[%c0_83, %c64] : memref<8x128xf32, #tpu.memory_space<vmem>>, vector<8x32xf32>
    tpu.vector_store %arg22[%c0_83, %c64], %190 {strides = array<i32>} : memref<8x128xf32, #tpu.memory_space<vmem>>, vector<8x32xf32>,
    %192 = vector.extract_strided_slice %129 {offsets = [0, 96], sizes = [8, 32], strides = [1, 1]} : vector<8x128xf32> to vector<8x32xf32>
    %193 = vector.shape_cast %192 : vector<8x32xf32> to vector<1x8x32xf32>
    %194 = vector.extract_strided_slice %130 {offsets = [0, 96], sizes = [8, 32], strides = [1, 1]} : vector<8x128xf32> to vector<8x32xf32>
    %195 = vector.shape_cast %194 : vector<8x32xf32> to vector<1x8x32xf32>
    %196 = vector.extract_strided_slice %131 {offsets = [0, 96], sizes = [8, 32], strides = [1, 1]} : vector<8x128xf32> to vector<8x32xf32>
    %197 = vector.shape_cast %196 : vector<8x32xf32> to vector<1x8x32xf32>
    "tpu.trace_start"() <{level = 10 : i32, message = "bqd,bkd->bqk"}> : () -> ()
    %cst_84 = arith.constant dense<0.000000e+00> : vector<1x8x8xf32>
    %198 = tpu.matmul %193, %195, %cst_84 {dimension_numbers = #tpu.dot_dimension_numbers<[2], [2], [1], [1], [0, 0, 0, 1, 1, 1], [0], [0]>} : vector<1x8x32xf32>, vector<1x8x32xf32>, vector<1x8x8xf32> -> vector<1x8x8xf32>
    "tpu.trace_stop"() : () -> ()
    %cst_85 = arith.constant dense<0xFF800000> : vector<1x8xf32>
    %199 = vector.multi_reduction <maximumf>, %198, %cst_85 [2] : vector<1x8x8xf32> to vector<1x8xf32>
    %200 = vector.shape_cast %199 : vector<1x8xf32> to vector<1x8x1xf32>
    %201 = vector.broadcast %200 : vector<1x8x1xf32> to vector<1x8x8xf32>
    %202 = arith.subf %198, %201 : vector<1x8x8xf32>
    %203 = math.exp %202 : vector<1x8x8xf32>
    %cst_86 = arith.constant dense<0.000000e+00> : vector<1x8xf32>
    %204 = vector.multi_reduction <add>, %203, %cst_86 [2] : vector<1x8x8xf32> to vector<1x8xf32>
    %205 = vector.shape_cast %204 : vector<1x8xf32> to vector<1x8x1xf32>
    %206 = tpu.reciprocal %205 {approx = true} : vector<1x8x1xf32> -> vector<1x8x1xf32>
    %207 = vector.broadcast %206 : vector<1x8x1xf32> to vector<1x8x8xf32>
    %208 = arith.mulf %203, %207 : vector<1x8x8xf32>
    "tpu.trace_start"() <{level = 10 : i32, message = "bqk,bkd->bqd"}> : () -> ()
    %cst_87 = arith.constant dense<0.000000e+00> : vector<1x8x32xf32>
    %209 = tpu.matmul %208, %197, %cst_87 {dimension_numbers = #tpu.dot_dimension_numbers<[2], [1], [1], [2], [0, 0, 0, 1, 1, 2], [0], [0]>} : vector<1x8x8xf32>, vector<1x8x32xf32>, vector<1x8x32xf32> -> vector<1x8x32xf32>
    "tpu.trace_stop"() : () -> ()
    %210 = vector.shape_cast %209 : vector<1x8x32xf32> to vector<8x32xf32>
    %c0_88 = arith.constant 0 : index
    %c96 = arith.constant 96 : index
    %211 = vector.load %arg22[%c0_88, %c96] : memref<8x128xf32, #tpu.memory_space<vmem>>, vector<8x32xf32>
    tpu.vector_store %arg22[%c0_88, %c96], %210 {strides = array<i32>} : memref<8x128xf32, #tpu.memory_space<vmem>>, vector<8x32xf32>,
    %c0_89 = arith.constant 0 : index
    %c0_90 = arith.constant 0 : index
    %212 = vector.load %arg22[%c0_89, %c0_90] : memref<8x128xf32, #tpu.memory_space<vmem>>, vector<8x128xf32>
    %213 = arith.truncf %212 : vector<8x128xf32> to vector<8x128xbf16>
    %c0_91 = arith.constant 0 : index
    %c0_92 = arith.constant 0 : index
    %c0_93 = arith.constant 0 : index
    %214 = vector.load %arg9[%c0_91, %c0_92, %c0_93] : memref<2x128x128xbf16, #tpu.memory_space<vmem>>, vector<1x128x128xbf16>
    %215 = vector.shape_cast %214 : vector<1x128x128xbf16> to vector<128x128xbf16>
    %cst_94 = arith.constant dense<0.000000e+00> : vector<8x128xf32>
    %216 = tpu.matmul %213, %215, %cst_94 {dimension_numbers = #tpu.dot_dimension_numbers<[1], [0], [0], [1], [0, 0, 1, 1], [], []>} : vector<8x128xbf16>, vector<128x128xbf16>, vector<8x128xf32> -> vector<8x128xf32>
    %c0_95 = arith.constant 0 : index
    %c0_96 = arith.constant 0 : index
    %c0_97 = arith.constant 0 : index
    %217 = vector.load %arg10[%c0_95, %c0_96, %c0_97] : memref<2x1x128xf32, #tpu.memory_space<vmem>>, vector<1x1x128xf32>
    %218 = vector.shape_cast %217 : vector<1x1x128xf32> to vector<1x128xf32>
    %219 = vector.broadcast %218 : vector<1x128xf32> to vector<8x128xf32>
    %220 = arith.addf %216, %219 : vector<8x128xf32>
    %221 = arith.addf %90, %220 : vector<8x128xf32>
    %cst_98 = arith.constant dense<0.000000e+00> : vector<8xf32>
    %222 = vector.multi_reduction <add>, %221, %cst_98 [1] : vector<8x128xf32> to vector<8xf32>
    %223 = vector.shape_cast %222 : vector<8xf32> to vector<8x1xf32>
    %cst_99 = arith.constant 1.280000e+02 : f32
    %224 = vector.broadcast %cst_99 : f32 to vector<8x1xf32>
    %225 = arith.divf %223, %224 : vector<8x1xf32>
    %226 = vector.broadcast %225 : vector<8x1xf32> to vector<8x128xf32>
    %227 = arith.subf %221, %226 : vector<8x128xf32>
    %228 = arith.mulf %227, %227 : vector<8x128xf32>
    %cst_100 = arith.constant dense<0.000000e+00> : vector<8xf32>
    %229 = vector.multi_reduction <add>, %228, %cst_100 [1] : vector<8x128xf32> to vector<8xf32>
    %230 = vector.shape_cast %229 : vector<8xf32> to vector<8x1xf32>
    %cst_101 = arith.constant 1.280000e+02 : f32
    %231 = vector.broadcast %cst_101 : f32 to vector<8x1xf32>
    %232 = arith.divf %230, %231 : vector<8x1xf32>
    %233 = vector.broadcast %225 : vector<8x1xf32> to vector<8x128xf32>
    %234 = arith.subf %221, %233 : vector<8x128xf32>
    %cst_102 = arith.constant 9.99999974E-6 : f32
    %235 = vector.broadcast %cst_102 : f32 to vector<8x1xf32>
    %236 = arith.addf %232, %235 : vector<8x1xf32>
    %237 = math.rsqrt %236 : vector<8x1xf32>
    %238 = vector.broadcast %237 : vector<8x1xf32> to vector<8x128xf32>
    %239 = arith.mulf %234, %238 : vector<8x128xf32>
    %240 = vector.broadcast %96 : vector<1x128xf32> to vector<8x128xf32>
    %241 = arith.mulf %239, %240 : vector<8x128xf32>
    %242 = vector.broadcast %98 : vector<1x128xf32> to vector<8x128xf32>
    %243 = arith.addf %241, %242 : vector<8x128xf32>
    %244 = arith.truncf %243 : vector<8x128xf32> to vector<8x128xbf16>
    %c0_103 = arith.constant 0 : index
    %c0_104 = arith.constant 0 : index
    %c0_105 = arith.constant 0 : index
    %245 = vector.load %arg11[%c0_103, %c0_104, %c0_105] : memref<2x128x512xbf16, #tpu.memory_space<vmem>>, vector<1x128x512xbf16>
    %246 = vector.shape_cast %245 : vector<1x128x512xbf16> to vector<128x512xbf16>
    %cst_106 = arith.constant dense<0.000000e+00> : vector<8x512xf32>
    %247 = tpu.matmul %244, %246, %cst_106 {dimension_numbers = #tpu.dot_dimension_numbers<[1], [0], [0], [1], [0, 0, 1, 1], [], []>} : vector<8x128xbf16>, vector<128x512xbf16>, vector<8x512xf32> -> vector<8x512xf32>
    %c0_107 = arith.constant 0 : index
    %c0_108 = arith.constant 0 : index
    %c0_109 = arith.constant 0 : index
    %248 = vector.load %arg12[%c0_107, %c0_108, %c0_109] : memref<2x1x512xf32, #tpu.memory_space<vmem>>, vector<1x1x512xf32>
    %249 = vector.shape_cast %248 : vector<1x1x512xf32> to vector<1x512xf32>
    %250 = vector.broadcast %249 : vector<1x512xf32> to vector<8x512xf32>
    %251 = arith.addf %247, %250 : vector<8x512xf32>
    %cst_110 = arith.constant 5.000000e-01 : f32
    %252 = vector.broadcast %cst_110 : f32 to vector<8x512xf32>
    %253 = arith.mulf %252, %251 : vector<8x512xf32>
    %cst_111 = arith.constant 4.471500e-02 : f32
    %254 = vector.broadcast %cst_111 : f32 to vector<8x512xf32>
    %255 = arith.mulf %254, %251 : vector<8x512xf32>
    %256 = arith.mulf %255, %251 : vector<8x512xf32>
    %257 = arith.mulf %256, %251 : vector<8x512xf32>
    %258 = arith.addf %251, %257 : vector<8x512xf32>
    %cst_112 = arith.constant 0.797884583 : f32
    %259 = vector.broadcast %cst_112 : f32 to vector<8x512xf32>
    %260 = arith.mulf %259, %258 : vector<8x512xf32>
    %261 = math.tanh %260 : vector<8x512xf32>
    %cst_113 = arith.constant 1.000000e+00 : f32
    %262 = vector.broadcast %cst_113 : f32 to vector<8x512xf32>
    %263 = arith.addf %262, %261 : vector<8x512xf32>
    %264 = arith.mulf %253, %263 : vector<8x512xf32>
    %265 = arith.truncf %264 : vector<8x512xf32> to vector<8x512xbf16>
    %c0_114 = arith.constant 0 : index
    %c0_115 = arith.constant 0 : index
    %c0_116 = arith.constant 0 : index
    %266 = vector.load %arg13[%c0_114, %c0_115, %c0_116] : memref<2x512x128xbf16, #tpu.memory_space<vmem>>, vector<1x512x128xbf16>
    %267 = vector.shape_cast %266 : vector<1x512x128xbf16> to vector<512x128xbf16>
    %cst_117 = arith.constant dense<0.000000e+00> : vector<8x128xf32>
    %268 = tpu.matmul %265, %267, %cst_117 {dimension_numbers = #tpu.dot_dimension_numbers<[1], [0], [0], [1], [0, 0, 1, 1], [], []>} : vector<8x512xbf16>, vector<512x128xbf16>, vector<8x128xf32> -> vector<8x128xf32>
    %c0_118 = arith.constant 0 : index
    %c0_119 = arith.constant 0 : index
    %c0_120 = arith.constant 0 : index
    %269 = vector.load %arg14[%c0_118, %c0_119, %c0_120] : memref<2x1x128xf32, #tpu.memory_space<vmem>>, vector<1x1x128xf32>
    %270 = vector.shape_cast %269 : vector<1x1x128xf32> to vector<1x128xf32>
    %271 = vector.broadcast %270 : vector<1x128xf32> to vector<8x128xf32>
    %272 = arith.addf %268, %271 : vector<8x128xf32>
    %273 = arith.addf %221, %272 : vector<8x128xf32>
    %c1_121 = arith.constant 1 : index
    %c0_122 = arith.constant 0 : index
    %c0_123 = arith.constant 0 : index
    %274 = vector.load %arg6[%c1_121, %c0_122, %c0_123] : memref<2x4x128xf32, #tpu.memory_space<vmem>>, vector<1x1x128xf32>
    %275 = vector.shape_cast %274 : vector<1x1x128xf32> to vector<1x128xf32>
    %c1_124 = arith.constant 1 : index
    %c1_125 = arith.constant 1 : index
    %c0_126 = arith.constant 0 : index
    %276 = vector.load %arg6[%c1_124, %c1_125, %c0_126] : memref<2x4x128xf32, #tpu.memory_space<vmem>>, vector<1x1x128xf32>
    %277 = vector.shape_cast %276 : vector<1x1x128xf32> to vector<1x128xf32>
    %c1_127 = arith.constant 1 : index
    %c2_128 = arith.constant 2 : index
    %c0_129 = arith.constant 0 : index
    %278 = vector.load %arg6[%c1_127, %c2_128, %c0_129] : memref<2x4x128xf32, #tpu.memory_space<vmem>>, vector<1x1x128xf32>
    %279 = vector.shape_cast %278 : vector<1x1x128xf32> to vector<1x128xf32>
    %c1_130 = arith.constant 1 : index
    %c3_131 = arith.constant 3 : index
    %c0_132 = arith.constant 0 : index
    %280 = vector.load %arg6[%c1_130, %c3_131, %c0_132] : memref<2x4x128xf32, #tpu.memory_space<vmem>>, vector<1x1x128xf32>
    %281 = vector.shape_cast %280 : vector<1x1x128xf32> to vector<1x128xf32>
    %cst_133 = arith.constant dense<0.000000e+00> : vector<8xf32>
    %282 = vector.multi_reduction <add>, %273, %cst_133 [1] : vector<8x128xf32> to vector<8xf32>
    %283 = vector.shape_cast %282 : vector<8xf32> to vector<8x1xf32>
    %cst_134 = arith.constant 1.280000e+02 : f32
    %284 = vector.broadcast %cst_134 : f32 to vector<8x1xf32>
    %285 = arith.divf %283, %284 : vector<8x1xf32>
    %286 = vector.broadcast %285 : vector<8x1xf32> to vector<8x128xf32>
    %287 = arith.subf %273, %286 : vector<8x128xf32>
    %288 = arith.mulf %287, %287 : vector<8x128xf32>
    %cst_135 = arith.constant dense<0.000000e+00> : vector<8xf32>
    %289 = vector.multi_reduction <add>, %288, %cst_135 [1] : vector<8x128xf32> to vector<8xf32>
    %290 = vector.shape_cast %289 : vector<8xf32> to vector<8x1xf32>
    %cst_136 = arith.constant 1.280000e+02 : f32
    %291 = vector.broadcast %cst_136 : f32 to vector<8x1xf32>
    %292 = arith.divf %290, %291 : vector<8x1xf32>
    %293 = vector.broadcast %285 : vector<8x1xf32> to vector<8x128xf32>
    %294 = arith.subf %273, %293 : vector<8x128xf32>
    %cst_137 = arith.constant 9.99999974E-6 : f32
    %295 = vector.broadcast %cst_137 : f32 to vector<8x1xf32>
    %296 = arith.addf %292, %295 : vector<8x1xf32>
    %297 = math.rsqrt %296 : vector<8x1xf32>
    %298 = vector.broadcast %297 : vector<8x1xf32> to vector<8x128xf32>
    %299 = arith.mulf %294, %298 : vector<8x128xf32>
    %300 = vector.broadcast %275 : vector<1x128xf32> to vector<8x128xf32>
    %301 = arith.mulf %299, %300 : vector<8x128xf32>
    %302 = vector.broadcast %277 : vector<1x128xf32> to vector<8x128xf32>
    %303 = arith.addf %301, %302 : vector<8x128xf32>
    %304 = arith.truncf %303 : vector<8x128xf32> to vector<8x128xbf16>
    %c1_138 = arith.constant 1 : index
    %c0_139 = arith.constant 0 : index
    %c0_140 = arith.constant 0 : index
    %305 = vector.load %arg7[%c1_138, %c0_139, %c0_140] : memref<2x128x384xbf16, #tpu.memory_space<vmem>>, vector<1x128x384xbf16>
    %306 = vector.shape_cast %305 : vector<1x128x384xbf16> to vector<128x384xbf16>
    %cst_141 = arith.constant dense<0.000000e+00> : vector<8x384xf32>
    %307 = tpu.matmul %304, %306, %cst_141 {dimension_numbers = #tpu.dot_dimension_numbers<[1], [0], [0], [1], [0, 0, 1, 1], [], []>} : vector<8x128xbf16>, vector<128x384xbf16>, vector<8x384xf32> -> vector<8x384xf32>
    %c1_142 = arith.constant 1 : index
    %c0_143 = arith.constant 0 : index
    %c0_144 = arith.constant 0 : index
    %308 = vector.load %arg8[%c1_142, %c0_143, %c0_144] : memref<2x1x384xf32, #tpu.memory_space<vmem>>, vector<1x1x384xf32>
    %309 = vector.shape_cast %308 : vector<1x1x384xf32> to vector<1x384xf32>
    %310 = vector.broadcast %309 : vector<1x384xf32> to vector<8x384xf32>
    %311 = arith.addf %307, %310 : vector<8x384xf32>
    %312 = vector.extract_strided_slice %311 {offsets = [0, 0], sizes = [8, 128], strides = [1, 1]} : vector<8x384xf32> to vector<8x128xf32>
    %313 = vector.extract_strided_slice %311 {offsets = [0, 128], sizes = [8, 128], strides = [1, 1]} : vector<8x384xf32> to vector<8x128xf32>
    %314 = vector.extract_strided_slice %311 {offsets = [0, 256], sizes = [8, 128], strides = [1, 1]} : vector<8x384xf32> to vector<8x128xf32>
    %315 = vector.extract_strided_slice %312 {offsets = [0, 0], sizes = [8, 32], strides = [1, 1]} : vector<8x128xf32> to vector<8x32xf32>
    %316 = vector.shape_cast %315 : vector<8x32xf32> to vector<1x8x32xf32>
    %317 = vector.extract_strided_slice %313 {offsets = [0, 0], sizes = [8, 32], strides = [1, 1]} : vector<8x128xf32> to vector<8x32xf32>
    %318 = vector.shape_cast %317 : vector<8x32xf32> to vector<1x8x32xf32>
    %319 = vector.extract_strided_slice %314 {offsets = [0, 0], sizes = [8, 32], strides = [1, 1]} : vector<8x128xf32> to vector<8x32xf32>
    %320 = vector.shape_cast %319 : vector<8x32xf32> to vector<1x8x32xf32>
    "tpu.trace_start"() <{level = 10 : i32, message = "bqd,bkd->bqk"}> : () -> ()
    %cst_145 = arith.constant dense<0.000000e+00> : vector<1x8x8xf32>
    %321 = tpu.matmul %316, %318, %cst_145 {dimension_numbers = #tpu.dot_dimension_numbers<[2], [2], [1], [1], [0, 0, 0, 1, 1, 1], [0], [0]>} : vector<1x8x32xf32>, vector<1x8x32xf32>, vector<1x8x8xf32> -> vector<1x8x8xf32>
    "tpu.trace_stop"() : () -> ()
    %cst_146 = arith.constant dense<0xFF800000> : vector<1x8xf32>
    %322 = vector.multi_reduction <maximumf>, %321, %cst_146 [2] : vector<1x8x8xf32> to vector<1x8xf32>
    %323 = vector.shape_cast %322 : vector<1x8xf32> to vector<1x8x1xf32>
    %324 = vector.broadcast %323 : vector<1x8x1xf32> to vector<1x8x8xf32>
    %325 = arith.subf %321, %324 : vector<1x8x8xf32>
    %326 = math.exp %325 : vector<1x8x8xf32>
    %cst_147 = arith.constant dense<0.000000e+00> : vector<1x8xf32>
    %327 = vector.multi_reduction <add>, %326, %cst_147 [2] : vector<1x8x8xf32> to vector<1x8xf32>
    %328 = vector.shape_cast %327 : vector<1x8xf32> to vector<1x8x1xf32>
    %329 = tpu.reciprocal %328 {approx = true} : vector<1x8x1xf32> -> vector<1x8x1xf32>
    %330 = vector.broadcast %329 : vector<1x8x1xf32> to vector<1x8x8xf32>
    %331 = arith.mulf %326, %330 : vector<1x8x8xf32>
    "tpu.trace_start"() <{level = 10 : i32, message = "bqk,bkd->bqd"}> : () -> ()
    %cst_148 = arith.constant dense<0.000000e+00> : vector<1x8x32xf32>
    %332 = tpu.matmul %331, %320, %cst_148 {dimension_numbers = #tpu.dot_dimension_numbers<[2], [1], [1], [2], [0, 0, 0, 1, 1, 2], [0], [0]>} : vector<1x8x8xf32>, vector<1x8x32xf32>, vector<1x8x32xf32> -> vector<1x8x32xf32>
    "tpu.trace_stop"() : () -> ()
    %333 = vector.shape_cast %332 : vector<1x8x32xf32> to vector<8x32xf32>
    %c0_149 = arith.constant 0 : index
    %c0_150 = arith.constant 0 : index
    %334 = vector.load %arg22[%c0_149, %c0_150] : memref<8x128xf32, #tpu.memory_space<vmem>>, vector<8x32xf32>
    tpu.vector_store %arg22[%c0_149, %c0_150], %333 {strides = array<i32>} : memref<8x128xf32, #tpu.memory_space<vmem>>, vector<8x32xf32>,
    %335 = vector.extract_strided_slice %312 {offsets = [0, 32], sizes = [8, 32], strides = [1, 1]} : vector<8x128xf32> to vector<8x32xf32>
    %336 = vector.shape_cast %335 : vector<8x32xf32> to vector<1x8x32xf32>
    %337 = vector.extract_strided_slice %313 {offsets = [0, 32], sizes = [8, 32], strides = [1, 1]} : vector<8x128xf32> to vector<8x32xf32>
    %338 = vector.shape_cast %337 : vector<8x32xf32> to vector<1x8x32xf32>
    %339 = vector.extract_strided_slice %314 {offsets = [0, 32], sizes = [8, 32], strides = [1, 1]} : vector<8x128xf32> to vector<8x32xf32>
    %340 = vector.shape_cast %339 : vector<8x32xf32> to vector<1x8x32xf32>
    "tpu.trace_start"() <{level = 10 : i32, message = "bqd,bkd->bqk"}> : () -> ()
    %cst_151 = arith.constant dense<0.000000e+00> : vector<1x8x8xf32>
    %341 = tpu.matmul %336, %338, %cst_151 {dimension_numbers = #tpu.dot_dimension_numbers<[2], [2], [1], [1], [0, 0, 0, 1, 1, 1], [0], [0]>} : vector<1x8x32xf32>, vector<1x8x32xf32>, vector<1x8x8xf32> -> vector<1x8x8xf32>
    "tpu.trace_stop"() : () -> ()
    %cst_152 = arith.constant dense<0xFF800000> : vector<1x8xf32>
    %342 = vector.multi_reduction <maximumf>, %341, %cst_152 [2] : vector<1x8x8xf32> to vector<1x8xf32>
    %343 = vector.shape_cast %342 : vector<1x8xf32> to vector<1x8x1xf32>
    %344 = vector.broadcast %343 : vector<1x8x1xf32> to vector<1x8x8xf32>
    %345 = arith.subf %341, %344 : vector<1x8x8xf32>
    %346 = math.exp %345 : vector<1x8x8xf32>
    %cst_153 = arith.constant dense<0.000000e+00> : vector<1x8xf32>
    %347 = vector.multi_reduction <add>, %346, %cst_153 [2] : vector<1x8x8xf32> to vector<1x8xf32>
    %348 = vector.shape_cast %347 : vector<1x8xf32> to vector<1x8x1xf32>
    %349 = tpu.reciprocal %348 {approx = true} : vector<1x8x1xf32> -> vector<1x8x1xf32>
    %350 = vector.broadcast %349 : vector<1x8x1xf32> to vector<1x8x8xf32>
    %351 = arith.mulf %346, %350 : vector<1x8x8xf32>
    "tpu.trace_start"() <{level = 10 : i32, message = "bqk,bkd->bqd"}> : () -> ()
    %cst_154 = arith.constant dense<0.000000e+00> : vector<1x8x32xf32>
    %352 = tpu.matmul %351, %340, %cst_154 {dimension_numbers = #tpu.dot_dimension_numbers<[2], [1], [1], [2], [0, 0, 0, 1, 1, 2], [0], [0]>} : vector<1x8x8xf32>, vector<1x8x32xf32>, vector<1x8x32xf32> -> vector<1x8x32xf32>
    "tpu.trace_stop"() : () -> ()
    %353 = vector.shape_cast %352 : vector<1x8x32xf32> to vector<8x32xf32>
    %c0_155 = arith.constant 0 : index
    %c32_156 = arith.constant 32 : index
    %354 = vector.load %arg22[%c0_155, %c32_156] : memref<8x128xf32, #tpu.memory_space<vmem>>, vector<8x32xf32>
    tpu.vector_store %arg22[%c0_155, %c32_156], %353 {strides = array<i32>} : memref<8x128xf32, #tpu.memory_space<vmem>>, vector<8x32xf32>,
    %355 = vector.extract_strided_slice %312 {offsets = [0, 64], sizes = [8, 32], strides = [1, 1]} : vector<8x128xf32> to vector<8x32xf32>
    %356 = vector.shape_cast %355 : vector<8x32xf32> to vector<1x8x32xf32>
    %357 = vector.extract_strided_slice %313 {offsets = [0, 64], sizes = [8, 32], strides = [1, 1]} : vector<8x128xf32> to vector<8x32xf32>
    %358 = vector.shape_cast %357 : vector<8x32xf32> to vector<1x8x32xf32>
    %359 = vector.extract_strided_slice %314 {offsets = [0, 64], sizes = [8, 32], strides = [1, 1]} : vector<8x128xf32> to vector<8x32xf32>
    %360 = vector.shape_cast %359 : vector<8x32xf32> to vector<1x8x32xf32>
    "tpu.trace_start"() <{level = 10 : i32, message = "bqd,bkd->bqk"}> : () -> ()
    %cst_157 = arith.constant dense<0.000000e+00> : vector<1x8x8xf32>
    %361 = tpu.matmul %356, %358, %cst_157 {dimension_numbers = #tpu.dot_dimension_numbers<[2], [2], [1], [1], [0, 0, 0, 1, 1, 1], [0], [0]>} : vector<1x8x32xf32>, vector<1x8x32xf32>, vector<1x8x8xf32> -> vector<1x8x8xf32>
    "tpu.trace_stop"() : () -> ()
    %cst_158 = arith.constant dense<0xFF800000> : vector<1x8xf32>
    %362 = vector.multi_reduction <maximumf>, %361, %cst_158 [2] : vector<1x8x8xf32> to vector<1x8xf32>
    %363 = vector.shape_cast %362 : vector<1x8xf32> to vector<1x8x1xf32>
    %364 = vector.broadcast %363 : vector<1x8x1xf32> to vector<1x8x8xf32>
    %365 = arith.subf %361, %364 : vector<1x8x8xf32>
    %366 = math.exp %365 : vector<1x8x8xf32>
    %cst_159 = arith.constant dense<0.000000e+00> : vector<1x8xf32>
    %367 = vector.multi_reduction <add>, %366, %cst_159 [2] : vector<1x8x8xf32> to vector<1x8xf32>
    %368 = vector.shape_cast %367 : vector<1x8xf32> to vector<1x8x1xf32>
    %369 = tpu.reciprocal %368 {approx = true} : vector<1x8x1xf32> -> vector<1x8x1xf32>
    %370 = vector.broadcast %369 : vector<1x8x1xf32> to vector<1x8x8xf32>
    %371 = arith.mulf %366, %370 : vector<1x8x8xf32>
    "tpu.trace_start"() <{level = 10 : i32, message = "bqk,bkd->bqd"}> : () -> ()
    %cst_160 = arith.constant dense<0.000000e+00> : vector<1x8x32xf32>
    %372 = tpu.matmul %371, %360, %cst_160 {dimension_numbers = #tpu.dot_dimension_numbers<[2], [1], [1], [2], [0, 0, 0, 1, 1, 2], [0], [0]>} : vector<1x8x8xf32>, vector<1x8x32xf32>, vector<1x8x32xf32> -> vector<1x8x32xf32>
    "tpu.trace_stop"() : () -> ()
    %373 = vector.shape_cast %372 : vector<1x8x32xf32> to vector<8x32xf32>
    %c0_161 = arith.constant 0 : index
    %c64_162 = arith.constant 64 : index
    %374 = vector.load %arg22[%c0_161, %c64_162] : memref<8x128xf32, #tpu.memory_space<vmem>>, vector<8x32xf32>
    tpu.vector_store %arg22[%c0_161, %c64_162], %373 {strides = array<i32>} : memref<8x128xf32, #tpu.memory_space<vmem>>, vector<8x32xf32>,
    %375 = vector.extract_strided_slice %312 {offsets = [0, 96], sizes = [8, 32], strides = [1, 1]} : vector<8x128xf32> to vector<8x32xf32>
    %376 = vector.shape_cast %375 : vector<8x32xf32> to vector<1x8x32xf32>
    %377 = vector.extract_strided_slice %313 {offsets = [0, 96], sizes = [8, 32], strides = [1, 1]} : vector<8x128xf32> to vector<8x32xf32>
    %378 = vector.shape_cast %377 : vector<8x32xf32> to vector<1x8x32xf32>
    %379 = vector.extract_strided_slice %314 {offsets = [0, 96], sizes = [8, 32], strides = [1, 1]} : vector<8x128xf32> to vector<8x32xf32>
    %380 = vector.shape_cast %379 : vector<8x32xf32> to vector<1x8x32xf32>
    "tpu.trace_start"() <{level = 10 : i32, message = "bqd,bkd->bqk"}> : () -> ()
    %cst_163 = arith.constant dense<0.000000e+00> : vector<1x8x8xf32>
    %381 = tpu.matmul %376, %378, %cst_163 {dimension_numbers = #tpu.dot_dimension_numbers<[2], [2], [1], [1], [0, 0, 0, 1, 1, 1], [0], [0]>} : vector<1x8x32xf32>, vector<1x8x32xf32>, vector<1x8x8xf32> -> vector<1x8x8xf32>
    "tpu.trace_stop"() : () -> ()
    %cst_164 = arith.constant dense<0xFF800000> : vector<1x8xf32>
    %382 = vector.multi_reduction <maximumf>, %381, %cst_164 [2] : vector<1x8x8xf32> to vector<1x8xf32>
    %383 = vector.shape_cast %382 : vector<1x8xf32> to vector<1x8x1xf32>
    %384 = vector.broadcast %383 : vector<1x8x1xf32> to vector<1x8x8xf32>
    %385 = arith.subf %381, %384 : vector<1x8x8xf32>
    %386 = math.exp %385 : vector<1x8x8xf32>
    %cst_165 = arith.constant dense<0.000000e+00> : vector<1x8xf32>
    %387 = vector.multi_reduction <add>, %386, %cst_165 [2] : vector<1x8x8xf32> to vector<1x8xf32>
    %388 = vector.shape_cast %387 : vector<1x8xf32> to vector<1x8x1xf32>
    %389 = tpu.reciprocal %388 {approx = true} : vector<1x8x1xf32> -> vector<1x8x1xf32>
    %390 = vector.broadcast %389 : vector<1x8x1xf32> to vector<1x8x8xf32>
    %391 = arith.mulf %386, %390 : vector<1x8x8xf32>
    "tpu.trace_start"() <{level = 10 : i32, message = "bqk,bkd->bqd"}> : () -> ()
    %cst_166 = arith.constant dense<0.000000e+00> : vector<1x8x32xf32>
    %392 = tpu.matmul %391, %380, %cst_166 {dimension_numbers = #tpu.dot_dimension_numbers<[2], [1], [1], [2], [0, 0, 0, 1, 1, 2], [0], [0]>} : vector<1x8x8xf32>, vector<1x8x32xf32>, vector<1x8x32xf32> -> vector<1x8x32xf32>
    "tpu.trace_stop"() : () -> ()
    %393 = vector.shape_cast %392 : vector<1x8x32xf32> to vector<8x32xf32>
    %c0_167 = arith.constant 0 : index
    %c96_168 = arith.constant 96 : index
    %394 = vector.load %arg22[%c0_167, %c96_168] : memref<8x128xf32, #tpu.memory_space<vmem>>, vector<8x32xf32>
    tpu.vector_store %arg22[%c0_167, %c96_168], %393 {strides = array<i32>} : memref<8x128xf32, #tpu.memory_space<vmem>>, vector<8x32xf32>,
    %c0_169 = arith.constant 0 : index
    %c0_170 = arith.constant 0 : index
    %395 = vector.load %arg22[%c0_169, %c0_170] : memref<8x128xf32, #tpu.memory_space<vmem>>, vector<8x128xf32>
    %396 = arith.truncf %395 : vector<8x128xf32> to vector<8x128xbf16>
    %c1_171 = arith.constant 1 : index
    %c0_172 = arith.constant 0 : index
    %c0_173 = arith.constant 0 : index
    %397 = vector.load %arg9[%c1_171, %c0_172, %c0_173] : memref<2x128x128xbf16, #tpu.memory_space<vmem>>, vector<1x128x128xbf16>
    %398 = vector.shape_cast %397 : vector<1x128x128xbf16> to vector<128x128xbf16>
    %cst_174 = arith.constant dense<0.000000e+00> : vector<8x128xf32>
    %399 = tpu.matmul %396, %398, %cst_174 {dimension_numbers = #tpu.dot_dimension_numbers<[1], [0], [0], [1], [0, 0, 1, 1], [], []>} : vector<8x128xbf16>, vector<128x128xbf16>, vector<8x128xf32> -> vector<8x128xf32>
    %c1_175 = arith.constant 1 : index
    %c0_176 = arith.constant 0 : index
    %c0_177 = arith.constant 0 : index
    %400 = vector.load %arg10[%c1_175, %c0_176, %c0_177] : memref<2x1x128xf32, #tpu.memory_space<vmem>>, vector<1x1x128xf32>
    %401 = vector.shape_cast %400 : vector<1x1x128xf32> to vector<1x128xf32>
    %402 = vector.broadcast %401 : vector<1x128xf32> to vector<8x128xf32>
    %403 = arith.addf %399, %402 : vector<8x128xf32>
    %404 = arith.addf %273, %403 : vector<8x128xf32>
    %cst_178 = arith.constant dense<0.000000e+00> : vector<8xf32>
    %405 = vector.multi_reduction <add>, %404, %cst_178 [1] : vector<8x128xf32> to vector<8xf32>
    %406 = vector.shape_cast %405 : vector<8xf32> to vector<8x1xf32>
    %cst_179 = arith.constant 1.280000e+02 : f32
    %407 = vector.broadcast %cst_179 : f32 to vector<8x1xf32>
    %408 = arith.divf %406, %407 : vector<8x1xf32>
    %409 = vector.broadcast %408 : vector<8x1xf32> to vector<8x128xf32>
    %410 = arith.subf %404, %409 : vector<8x128xf32>
    %411 = arith.mulf %410, %410 : vector<8x128xf32>
    %cst_180 = arith.constant dense<0.000000e+00> : vector<8xf32>
    %412 = vector.multi_reduction <add>, %411, %cst_180 [1] : vector<8x128xf32> to vector<8xf32>
    %413 = vector.shape_cast %412 : vector<8xf32> to vector<8x1xf32>
    %cst_181 = arith.constant 1.280000e+02 : f32
    %414 = vector.broadcast %cst_181 : f32 to vector<8x1xf32>
    %415 = arith.divf %413, %414 : vector<8x1xf32>
    %416 = vector.broadcast %408 : vector<8x1xf32> to vector<8x128xf32>
    %417 = arith.subf %404, %416 : vector<8x128xf32>
    %cst_182 = arith.constant 9.99999974E-6 : f32
    %418 = vector.broadcast %cst_182 : f32 to vector<8x1xf32>
    %419 = arith.addf %415, %418 : vector<8x1xf32>
    %420 = math.rsqrt %419 : vector<8x1xf32>
    %421 = vector.broadcast %420 : vector<8x1xf32> to vector<8x128xf32>
    %422 = arith.mulf %417, %421 : vector<8x128xf32>
    %423 = vector.broadcast %279 : vector<1x128xf32> to vector<8x128xf32>
    %424 = arith.mulf %422, %423 : vector<8x128xf32>
    %425 = vector.broadcast %281 : vector<1x128xf32> to vector<8x128xf32>
    %426 = arith.addf %424, %425 : vector<8x128xf32>
    %427 = arith.truncf %426 : vector<8x128xf32> to vector<8x128xbf16>
    %c1_183 = arith.constant 1 : index
    %c0_184 = arith.constant 0 : index
    %c0_185 = arith.constant 0 : index
    %428 = vector.load %arg11[%c1_183, %c0_184, %c0_185] : memref<2x128x512xbf16, #tpu.memory_space<vmem>>, vector<1x128x512xbf16>
    %429 = vector.shape_cast %428 : vector<1x128x512xbf16> to vector<128x512xbf16>
    %cst_186 = arith.constant dense<0.000000e+00> : vector<8x512xf32>
    %430 = tpu.matmul %427, %429, %cst_186 {dimension_numbers = #tpu.dot_dimension_numbers<[1], [0], [0], [1], [0, 0, 1, 1], [], []>} : vector<8x128xbf16>, vector<128x512xbf16>, vector<8x512xf32> -> vector<8x512xf32>
    %c1_187 = arith.constant 1 : index
    %c0_188 = arith.constant 0 : index
    %c0_189 = arith.constant 0 : index
    %431 = vector.load %arg12[%c1_187, %c0_188, %c0_189] : memref<2x1x512xf32, #tpu.memory_space<vmem>>, vector<1x1x512xf32>
    %432 = vector.shape_cast %431 : vector<1x1x512xf32> to vector<1x512xf32>
    %433 = vector.broadcast %432 : vector<1x512xf32> to vector<8x512xf32>
    %434 = arith.addf %430, %433 : vector<8x512xf32>
    %cst_190 = arith.constant 5.000000e-01 : f32
    %435 = vector.broadcast %cst_190 : f32 to vector<8x512xf32>
    %436 = arith.mulf %435, %434 : vector<8x512xf32>
    %cst_191 = arith.constant 4.471500e-02 : f32
    %437 = vector.broadcast %cst_191 : f32 to vector<8x512xf32>
    %438 = arith.mulf %437, %434 : vector<8x512xf32>
    %439 = arith.mulf %438, %434 : vector<8x512xf32>
    %440 = arith.mulf %439, %434 : vector<8x512xf32>
    %441 = arith.addf %434, %440 : vector<8x512xf32>
    %cst_192 = arith.constant 0.797884583 : f32
    %442 = vector.broadcast %cst_192 : f32 to vector<8x512xf32>
    %443 = arith.mulf %442, %441 : vector<8x512xf32>
    %444 = math.tanh %443 : vector<8x512xf32>
    %cst_193 = arith.constant 1.000000e+00 : f32
    %445 = vector.broadcast %cst_193 : f32 to vector<8x512xf32>
    %446 = arith.addf %445, %444 : vector<8x512xf32>
    %447 = arith.mulf %436, %446 : vector<8x512xf32>
    %448 = arith.truncf %447 : vector<8x512xf32> to vector<8x512xbf16>
    %c1_194 = arith.constant 1 : index
    %c0_195 = arith.constant 0 : index
    %c0_196 = arith.constant 0 : index
    %449 = vector.load %arg13[%c1_194, %c0_195, %c0_196] : memref<2x512x128xbf16, #tpu.memory_space<vmem>>, vector<1x512x128xbf16>
    %450 = vector.shape_cast %449 : vector<1x512x128xbf16> to vector<512x128xbf16>
    %cst_197 = arith.constant dense<0.000000e+00> : vector<8x128xf32>
    %451 = tpu.matmul %448, %450, %cst_197 {dimension_numbers = #tpu.dot_dimension_numbers<[1], [0], [0], [1], [0, 0, 1, 1], [], []>} : vector<8x512xbf16>, vector<512x128xbf16>, vector<8x128xf32> -> vector<8x128xf32>
    %c1_198 = arith.constant 1 : index
    %c0_199 = arith.constant 0 : index
    %c0_200 = arith.constant 0 : index
    %452 = vector.load %arg14[%c1_198, %c0_199, %c0_200] : memref<2x1x128xf32, #tpu.memory_space<vmem>>, vector<1x1x128xf32>
    %453 = vector.shape_cast %452 : vector<1x1x128xf32> to vector<1x128xf32>
    %454 = vector.broadcast %453 : vector<1x128xf32> to vector<8x128xf32>
    %455 = arith.addf %451, %454 : vector<8x128xf32>
    %456 = arith.addf %404, %455 : vector<8x128xf32>
    %457 = vector.shape_cast %456 : vector<8x128xf32> to vector<1x8x128xf32>
    %cst_201 = arith.constant dense<0.000000e+00> : vector<1x128xf32>
    %458 = vector.multi_reduction <add>, %457, %cst_201 [1] : vector<1x8x128xf32> to vector<1x128xf32>
    %cst_202 = arith.constant 1.250000e-01 : f32
    %459 = vector.broadcast %cst_202 : f32 to vector<1x128xf32>
    %460 = arith.mulf %458, %459 : vector<1x128xf32>
    %c0_203 = arith.constant 0 : index
    %c0_204 = arith.constant 0 : index
    %c0_205 = arith.constant 0 : index
    %461 = vector.load %arg15[%c0_203, %c0_204, %c0_205] : memref<2x128x256xbf16, #tpu.memory_space<vmem>>, vector<1x128x256xbf16>
    %462 = vector.shape_cast %461 : vector<1x128x256xbf16> to vector<128x256xbf16>
    %c0_206 = arith.constant 0 : index
    %c0_207 = arith.constant 0 : index
    %c0_208 = arith.constant 0 : index
    %463 = vector.load %arg16[%c0_206, %c0_207, %c0_208] : memref<2x1x256xf32, #tpu.memory_space<vmem>>, vector<1x1x256xf32>
    %464 = vector.shape_cast %463 : vector<1x1x256xf32> to vector<1x256xf32>
    %465 = arith.truncf %460 : vector<1x128xf32> to vector<1x128xbf16>
    %cst_209 = arith.constant dense<0.000000e+00> : vector<1x256xf32>
    %466 = tpu.matmul %465, %462, %cst_209 {dimension_numbers = #tpu.dot_dimension_numbers<[1], [0], [0], [1], [0, 0, 1, 1], [], []>} : vector<1x128xbf16>, vector<128x256xbf16>, vector<1x256xf32> -> vector<1x256xf32>
    %467 = arith.addf %466, %464 : vector<1x256xf32>
    %cst_210 = arith.constant 5.000000e-01 : f32
    %468 = vector.broadcast %cst_210 : f32 to vector<1x256xf32>
    %469 = arith.mulf %468, %467 : vector<1x256xf32>
    %cst_211 = arith.constant 4.471500e-02 : f32
    %470 = vector.broadcast %cst_211 : f32 to vector<1x256xf32>
    %471 = arith.mulf %470, %467 : vector<1x256xf32>
    %472 = arith.mulf %471, %467 : vector<1x256xf32>
    %473 = arith.mulf %472, %467 : vector<1x256xf32>
    %474 = arith.addf %467, %473 : vector<1x256xf32>
    %cst_212 = arith.constant 0.797884583 : f32
    %475 = vector.broadcast %cst_212 : f32 to vector<1x256xf32>
    %476 = arith.mulf %475, %474 : vector<1x256xf32>
    %477 = math.tanh %476 : vector<1x256xf32>
    %cst_213 = arith.constant 1.000000e+00 : f32
    %478 = vector.broadcast %cst_213 : f32 to vector<1x256xf32>
    %479 = arith.addf %478, %477 : vector<1x256xf32>
    %480 = arith.mulf %469, %479 : vector<1x256xf32>
    %c0_214 = arith.constant 0 : index
    %c0_215 = arith.constant 0 : index
    %c0_216 = arith.constant 0 : index
    %481 = vector.load %arg17[%c0_214, %c0_215, %c0_216] : memref<2x256x128xbf16, #tpu.memory_space<vmem>>, vector<1x256x128xbf16>
    %482 = vector.shape_cast %481 : vector<1x256x128xbf16> to vector<256x128xbf16>
    %c0_217 = arith.constant 0 : index
    %c0_218 = arith.constant 0 : index
    %c0_219 = arith.constant 0 : index
    %483 = vector.load %arg18[%c0_217, %c0_218, %c0_219] : memref<2x1x128xf32, #tpu.memory_space<vmem>>, vector<1x1x128xf32>
    %484 = vector.shape_cast %483 : vector<1x1x128xf32> to vector<1x128xf32>
    %485 = arith.truncf %480 : vector<1x256xf32> to vector<1x256xbf16>
    %cst_220 = arith.constant dense<0.000000e+00> : vector<1x128xf32>
    %486 = tpu.matmul %485, %482, %cst_220 {dimension_numbers = #tpu.dot_dimension_numbers<[1], [0], [0], [1], [0, 0, 1, 1], [], []>} : vector<1x256xbf16>, vector<256x128xbf16>, vector<1x128xf32> -> vector<1x128xf32>
    %487 = arith.addf %486, %484 : vector<1x128xf32>
    %cst_221 = arith.constant 5.000000e-01 : f32
    %488 = vector.broadcast %cst_221 : f32 to vector<1x128xf32>
    %489 = arith.mulf %488, %487 : vector<1x128xf32>
    %cst_222 = arith.constant 4.471500e-02 : f32
    %490 = vector.broadcast %cst_222 : f32 to vector<1x128xf32>
    %491 = arith.mulf %490, %487 : vector<1x128xf32>
    %492 = arith.mulf %491, %487 : vector<1x128xf32>
    %493 = arith.mulf %492, %487 : vector<1x128xf32>
    %494 = arith.addf %487, %493 : vector<1x128xf32>
    %cst_223 = arith.constant 0.797884583 : f32
    %495 = vector.broadcast %cst_223 : f32 to vector<1x128xf32>
    %496 = arith.mulf %495, %494 : vector<1x128xf32>
    %497 = math.tanh %496 : vector<1x128xf32>
    %cst_224 = arith.constant 1.000000e+00 : f32
    %498 = vector.broadcast %cst_224 : f32 to vector<1x128xf32>
    %499 = arith.addf %498, %497 : vector<1x128xf32>
    %500 = arith.mulf %489, %499 : vector<1x128xf32>
    %501 = arith.addf %460, %500 : vector<1x128xf32>
    %c1_225 = arith.constant 1 : index
    %c0_226 = arith.constant 0 : index
    %c0_227 = arith.constant 0 : index
    %502 = vector.load %arg15[%c1_225, %c0_226, %c0_227] : memref<2x128x256xbf16, #tpu.memory_space<vmem>>, vector<1x128x256xbf16>
    %503 = vector.shape_cast %502 : vector<1x128x256xbf16> to vector<128x256xbf16>
    %c1_228 = arith.constant 1 : index
    %c0_229 = arith.constant 0 : index
    %c0_230 = arith.constant 0 : index
    %504 = vector.load %arg16[%c1_228, %c0_229, %c0_230] : memref<2x1x256xf32, #tpu.memory_space<vmem>>, vector<1x1x256xf32>
    %505 = vector.shape_cast %504 : vector<1x1x256xf32> to vector<1x256xf32>
    %506 = arith.truncf %501 : vector<1x128xf32> to vector<1x128xbf16>
    %cst_231 = arith.constant dense<0.000000e+00> : vector<1x256xf32>
    %507 = tpu.matmul %506, %503, %cst_231 {dimension_numbers = #tpu.dot_dimension_numbers<[1], [0], [0], [1], [0, 0, 1, 1], [], []>} : vector<1x128xbf16>, vector<128x256xbf16>, vector<1x256xf32> -> vector<1x256xf32>
    %508 = arith.addf %507, %505 : vector<1x256xf32>
    %cst_232 = arith.constant 5.000000e-01 : f32
    %509 = vector.broadcast %cst_232 : f32 to vector<1x256xf32>
    %510 = arith.mulf %509, %508 : vector<1x256xf32>
    %cst_233 = arith.constant 4.471500e-02 : f32
    %511 = vector.broadcast %cst_233 : f32 to vector<1x256xf32>
    %512 = arith.mulf %511, %508 : vector<1x256xf32>
    %513 = arith.mulf %512, %508 : vector<1x256xf32>
    %514 = arith.mulf %513, %508 : vector<1x256xf32>
    %515 = arith.addf %508, %514 : vector<1x256xf32>
    %cst_234 = arith.constant 0.797884583 : f32
    %516 = vector.broadcast %cst_234 : f32 to vector<1x256xf32>
    %517 = arith.mulf %516, %515 : vector<1x256xf32>
    %518 = math.tanh %517 : vector<1x256xf32>
    %cst_235 = arith.constant 1.000000e+00 : f32
    %519 = vector.broadcast %cst_235 : f32 to vector<1x256xf32>
    %520 = arith.addf %519, %518 : vector<1x256xf32>
    %521 = arith.mulf %510, %520 : vector<1x256xf32>
    %c1_236 = arith.constant 1 : index
    %c0_237 = arith.constant 0 : index
    %c0_238 = arith.constant 0 : index
    %522 = vector.load %arg17[%c1_236, %c0_237, %c0_238] : memref<2x256x128xbf16, #tpu.memory_space<vmem>>, vector<1x256x128xbf16>
    %523 = vector.shape_cast %522 : vector<1x256x128xbf16> to vector<256x128xbf16>
    %c1_239 = arith.constant 1 : index
    %c0_240 = arith.constant 0 : index
    %c0_241 = arith.constant 0 : index
    %524 = vector.load %arg18[%c1_239, %c0_240, %c0_241] : memref<2x1x128xf32, #tpu.memory_space<vmem>>, vector<1x1x128xf32>
    %525 = vector.shape_cast %524 : vector<1x1x128xf32> to vector<1x128xf32>
    %526 = arith.truncf %521 : vector<1x256xf32> to vector<1x256xbf16>
    %cst_242 = arith.constant dense<0.000000e+00> : vector<1x128xf32>
    %527 = tpu.matmul %526, %523, %cst_242 {dimension_numbers = #tpu.dot_dimension_numbers<[1], [0], [0], [1], [0, 0, 1, 1], [], []>} : vector<1x256xbf16>, vector<256x128xbf16>, vector<1x128xf32> -> vector<1x128xf32>
    %528 = arith.addf %527, %525 : vector<1x128xf32>
    %cst_243 = arith.constant 5.000000e-01 : f32
    %529 = vector.broadcast %cst_243 : f32 to vector<1x128xf32>
    %530 = arith.mulf %529, %528 : vector<1x128xf32>
    %cst_244 = arith.constant 4.471500e-02 : f32
    %531 = vector.broadcast %cst_244 : f32 to vector<1x128xf32>
    %532 = arith.mulf %531, %528 : vector<1x128xf32>
    %533 = arith.mulf %532, %528 : vector<1x128xf32>
    %534 = arith.mulf %533, %528 : vector<1x128xf32>
    %535 = arith.addf %528, %534 : vector<1x128xf32>
    %cst_245 = arith.constant 0.797884583 : f32
    %536 = vector.broadcast %cst_245 : f32 to vector<1x128xf32>
    %537 = arith.mulf %536, %535 : vector<1x128xf32>
    %538 = math.tanh %537 : vector<1x128xf32>
    %cst_246 = arith.constant 1.000000e+00 : f32
    %539 = vector.broadcast %cst_246 : f32 to vector<1x128xf32>
    %540 = arith.addf %539, %538 : vector<1x128xf32>
    %541 = arith.mulf %530, %540 : vector<1x128xf32>
    %c0_247 = arith.constant 0 : index
    %c0_248 = arith.constant 0 : index
    %542 = vector.load %arg19[%c0_247, %c0_248] : memref<128x128xbf16, #tpu.memory_space<vmem>>, vector<128x128xbf16>
    %c0_249 = arith.constant 0 : index
    %c0_250 = arith.constant 0 : index
    %543 = vector.load %arg20[%c0_249, %c0_250] : memref<1x128xf32, #tpu.memory_space<vmem>>, vector<1x128xf32>
    %544 = arith.truncf %541 : vector<1x128xf32> to vector<1x128xbf16>
    %cst_251 = arith.constant dense<0.000000e+00> : vector<1x128xf32>
    %545 = tpu.matmul %544, %542, %cst_251 {dimension_numbers = #tpu.dot_dimension_numbers<[1], [0], [0], [1], [0, 0, 1, 1], [], []>} : vector<1x128xbf16>, vector<128x128xbf16>, vector<1x128xf32> -> vector<1x128xf32>
    %546 = arith.addf %545, %543 : vector<1x128xf32>
    %547 = vector.shape_cast %546 : vector<1x128xf32> to vector<1x1x128xf32>
    %c0_252 = arith.constant 0 : index
    %c0_253 = arith.constant 0 : index
    %c0_254 = arith.constant 0 : index
    %548 = vector.load %arg21[%c0_252, %c0_253, %c0_254] : memref<1x1x128xf32, #tpu.memory_space<vmem>>, vector<1x1x128xf32>
    tpu.vector_store %arg21[%c0_252, %c0_253, %c0_254], %547 {strides = array<i32>} : memref<1x1x128xf32, #tpu.memory_space<vmem>>, vector<1x1x128xf32>,
    return
  }
  func.func @transform_0(%arg0: i32) -> (i32, i32, i32) {
    %c0_i32 = arith.constant 0 : i32
    %c0_i32_0 = arith.constant 0 : i32
    %c0_i32_1 = arith.constant 0 : i32
    return %arg0, %c0_i32, %c0_i32_0 : i32, i32, i32
  }
  func.func @transform_1(%arg0: i32) -> (i32, i32, i32) {
    %c0_i32 = arith.constant 0 : i32
    %c0_i32_0 = arith.constant 0 : i32
    %c0_i32_1 = arith.constant 0 : i32
    %c0_i32_2 = arith.constant 0 : i32
    return %c0_i32, %c0_i32_0, %c0_i32_1 : i32, i32, i32
  }
  func.func @transform_2(%arg0: i32) -> (i32, i32) {
    %c0_i32 = arith.constant 0 : i32
    %c0_i32_0 = arith.constant 0 : i32
    %c0_i32_1 = arith.constant 0 : i32
    return %c0_i32, %c0_i32_0 : i32, i32
  }
  func.func @transform_3(%arg0: i32) -> (i32, i32, i32) {
    %c0_i32 = arith.constant 0 : i32
    %c0_i32_0 = arith.constant 0 : i32
    %c0_i32_1 = arith.constant 0 : i32
    %c0_i32_2 = arith.constant 0 : i32
    return %c0_i32, %c0_i32_0, %c0_i32_1 : i32, i32, i32
  }
  func.func @transform_4(%arg0: i32) -> (i32, i32) {
    %c0_i32 = arith.constant 0 : i32
    %c0_i32_0 = arith.constant 0 : i32
    %c0_i32_1 = arith.constant 0 : i32
    return %c0_i32, %c0_i32_0 : i32, i32
  }
  func.func @transform_5(%arg0: i32) -> (i32, i32, i32) {
    %c0_i32 = arith.constant 0 : i32
    %c0_i32_0 = arith.constant 0 : i32
    %c0_i32_1 = arith.constant 0 : i32
    %c0_i32_2 = arith.constant 0 : i32
    return %c0_i32, %c0_i32_0, %c0_i32_1 : i32, i32, i32
  }
  func.func @transform_6(%arg0: i32) -> (i32, i32, i32) {
    %c0_i32 = arith.constant 0 : i32
    %c0_i32_0 = arith.constant 0 : i32
    %c0_i32_1 = arith.constant 0 : i32
    %c0_i32_2 = arith.constant 0 : i32
    return %c0_i32, %c0_i32_0, %c0_i32_1 : i32, i32, i32
  }
  func.func @transform_7(%arg0: i32) -> (i32, i32, i32) {
    %c0_i32 = arith.constant 0 : i32
    %c0_i32_0 = arith.constant 0 : i32
    %c0_i32_1 = arith.constant 0 : i32
    %c0_i32_2 = arith.constant 0 : i32
    return %c0_i32, %c0_i32_0, %c0_i32_1 : i32, i32, i32
  }
  func.func @transform_8(%arg0: i32) -> (i32, i32, i32) {
    %c0_i32 = arith.constant 0 : i32
    %c0_i32_0 = arith.constant 0 : i32
    %c0_i32_1 = arith.constant 0 : i32
    %c0_i32_2 = arith.constant 0 : i32
    return %c0_i32, %c0_i32_0, %c0_i32_1 : i32, i32, i32
  }
  func.func @transform_9(%arg0: i32) -> (i32, i32, i32) {
    %c0_i32 = arith.constant 0 : i32
    %c0_i32_0 = arith.constant 0 : i32
    %c0_i32_1 = arith.constant 0 : i32
    %c0_i32_2 = arith.constant 0 : i32
    return %c0_i32, %c0_i32_0, %c0_i32_1 : i32, i32, i32
  }
  func.func @transform_10(%arg0: i32) -> (i32, i32, i32) {
    %c0_i32 = arith.constant 0 : i32
    %c0_i32_0 = arith.constant 0 : i32
    %c0_i32_1 = arith.constant 0 : i32
    %c0_i32_2 = arith.constant 0 : i32
    return %c0_i32, %c0_i32_0, %c0_i32_1 : i32, i32, i32
  }
  func.func @transform_11(%arg0: i32) -> (i32, i32, i32) {
    %c0_i32 = arith.constant 0 : i32
    %c0_i32_0 = arith.constant 0 : i32
    %c0_i32_1 = arith.constant 0 : i32
    %c0_i32_2 = arith.constant 0 : i32
    return %c0_i32, %c0_i32_0, %c0_i32_1 : i32, i32, i32
  }
  func.func @transform_12(%arg0: i32) -> (i32, i32, i32) {
    %c0_i32 = arith.constant 0 : i32
    %c0_i32_0 = arith.constant 0 : i32
    %c0_i32_1 = arith.constant 0 : i32
    %c0_i32_2 = arith.constant 0 : i32
    return %c0_i32, %c0_i32_0, %c0_i32_1 : i32, i32, i32
  }
  func.func @transform_13(%arg0: i32) -> (i32, i32, i32) {
    %c0_i32 = arith.constant 0 : i32
    %c0_i32_0 = arith.constant 0 : i32
    %c0_i32_1 = arith.constant 0 : i32
    %c0_i32_2 = arith.constant 0 : i32
    return %c0_i32, %c0_i32_0, %c0_i32_1 : i32, i32, i32
  }
  func.func @transform_14(%arg0: i32) -> (i32, i32, i32) {
    %c0_i32 = arith.constant 0 : i32
    %c0_i32_0 = arith.constant 0 : i32
    %c0_i32_1 = arith.constant 0 : i32
    %c0_i32_2 = arith.constant 0 : i32
    return %c0_i32, %c0_i32_0, %c0_i32_1 : i32, i32, i32
  }
  func.func @transform_15(%arg0: i32) -> (i32, i32, i32) {
    %c0_i32 = arith.constant 0 : i32
    %c0_i32_0 = arith.constant 0 : i32
    %c0_i32_1 = arith.constant 0 : i32
    %c0_i32_2 = arith.constant 0 : i32
    return %c0_i32, %c0_i32_0, %c0_i32_1 : i32, i32, i32
  }
  func.func @transform_16(%arg0: i32) -> (i32, i32, i32) {
    %c0_i32 = arith.constant 0 : i32
    %c0_i32_0 = arith.constant 0 : i32
    %c0_i32_1 = arith.constant 0 : i32
    %c0_i32_2 = arith.constant 0 : i32
    return %c0_i32, %c0_i32_0, %c0_i32_1 : i32, i32, i32
  }
  func.func @transform_17(%arg0: i32) -> (i32, i32, i32) {
    %c0_i32 = arith.constant 0 : i32
    %c0_i32_0 = arith.constant 0 : i32
    %c0_i32_1 = arith.constant 0 : i32
    %c0_i32_2 = arith.constant 0 : i32
    return %c0_i32, %c0_i32_0, %c0_i32_1 : i32, i32, i32
  }
  func.func @transform_18(%arg0: i32) -> (i32, i32) {
    %c0_i32 = arith.constant 0 : i32
    %c0_i32_0 = arith.constant 0 : i32
    %c0_i32_1 = arith.constant 0 : i32
    return %c0_i32, %c0_i32_0 : i32, i32
  }
  func.func @transform_19(%arg0: i32) -> (i32, i32) {
    %c0_i32 = arith.constant 0 : i32
    %c0_i32_0 = arith.constant 0 : i32
    %c0_i32_1 = arith.constant 0 : i32
    return %c0_i32, %c0_i32_0 : i32, i32
  }
  func.func @transform_20(%arg0: i32) -> (i32, i32, i32) {
    %c0_i32 = arith.constant 0 : i32
    %c0_i32_0 = arith.constant 0 : i32
    %c0_i32_1 = arith.constant 0 : i32
    return %arg0, %c0_i32, %c0_i32_0 : i32, i32, i32
  }
}

</mosaic_0001>

<llo_original>
// kernel: tpu_custom_call.1
$region0: #{tpu_custom_call.1}
  #allocation0 [shape = 'u32[]', space=smem, size = 0x4, offset = 0x4, fixed_abs, tag = 'smem constant byte address 0x4 - core index']
  #allocation1 [shape = 'u32[72,128]{1,0:T(1,128)}', space=vmem, size = 0x9000, scoped, tag = 'internal scratch']
  #allocation2 [shape = 'f32[8,128]{1,0:T(8,128)}', space=vmem, size = 0x1000, scoped, tag = 'scratch operand']
  %s0 = inlined_call_operand.vmem [shape: f32[2,8,3], index: 0, kind: input, shape index: {}]
  %s1 = inlined_call_operand.vmem [shape: f32[3,3,128], index: 1, kind: input, shape index: {}]
  %s2 = inlined_call_operand.hbm [shape: f32[1,128], index: 2, kind: input, shape index: {}]
  %s3 = inlined_call_operand.hbm [shape: bf16[3,128,128], index: 3, kind: input, shape index: {}]
  %s4 = inlined_call_operand.hbm [shape: f32[1,128], index: 4, kind: input, shape index: {}]
  %s5 = inlined_call_operand.vmem [shape: f32[2,4,128], index: 5, kind: input, shape index: {}]
  %s6 = inlined_call_operand.hbm [shape: bf16[2,128,384], index: 6, kind: input, shape index: {}]
  %s7 = inlined_call_operand.hbm [shape: f32[2,1,384], index: 7, kind: input, shape index: {}]
  %s8 = inlined_call_operand.hbm [shape: bf16[2,128,128], index: 8, kind: input, shape index: {}]
  %s9 = inlined_call_operand.hbm [shape: f32[2,1,128], index: 9, kind: input, shape index: {}]
  %s10 = inlined_call_operand.hbm [shape: bf16[2,128,512], index: 10, kind: input, shape index: {}]
  %s11 = inlined_call_operand.vmem [shape: f32[2,1,512], index: 11, kind: input, shape index: {}]
  %s12 = inlined_call_operand.hbm [shape: bf16[2,512,128], index: 12, kind: input, shape index: {}]
  %s13 = inlined_call_operand.vmem [shape: f32[2,1,128], index: 13, kind: input, shape index: {}]
  %s14 = inlined_call_operand.hbm [shape: bf16[2,128,256], index: 14, kind: input, shape index: {}]
  %s15 = inlined_call_operand.vmem [shape: f32[2,1,256], index: 15, kind: input, shape index: {}]
  %s16 = inlined_call_operand.hbm [shape: bf16[2,256,128], index: 16, kind: input, shape index: {}]
  %s17 = inlined_call_operand.vmem [shape: f32[2,1,128], index: 17, kind: input, shape index: {}]
  %s18 = inlined_call_operand.hbm [shape: bf16[128,128], index: 18, kind: input, shape index: {}]
  %s19 = inlined_call_operand.vmem [shape: f32[1,128], index: 19, kind: input, shape index: {}]
  %s20 = inlined_call_operand.hbm [shape: f32[2,1,128], index: 20, kind: output, shape index: {}]
  %s21 = sld [smem:[#allocation0]]
  $region161: #{tpu_custom_call.1} parent=0
    _
  %s23 = ssub.s32 1, %s21
  %s24 = scalar_select 0, %s23, %s21
  $region1: #{tpu_custom_call.1} parent=0
    #allocation3 [shape = 'u8[512]{0}', space=vmem, size = 0x400, scoped, tag = 'input window, operand 2, single buffered']
    #allocation4 [shape = 's32[2]{0}', space=sflag, size = 0x8, scoped, tag = 'scoped memory for tpu_custom_call.1']
    #allocation5 [shape = 's32[2]{0}', space=sflag, size = 0x8, scoped, tag = 'scoped memory for tpu_custom_call.1']
    #allocation6 [shape = 'u8[98304]{0}', space=vmem, size = 0x18000, scoped, tag = 'input window, operand 3, single buffered']
    #allocation7 [shape = 's32[1]{0}', space=sflag, size = 0x4, scoped, tag = 'scoped memory for tpu_custom_call.1']
    #allocation8 [shape = 'u8[512]{0}', space=vmem, size = 0x400, scoped, tag = 'input window, operand 4, single buffered']
    #allocation9 [shape = 'u8[196608]{0}', space=vmem, size = 0x30000, scoped, tag = 'input window, operand 6, single buffered']
    #allocation10 [shape = 's32[1]{0}', space=sflag, size = 0x4, scoped, tag = 'scoped memory for tpu_custom_call.1']
    #allocation11 [shape = 'u8[3072]{0}', space=vmem, size = 0xc00, scoped, tag = 'input window, operand 7, single buffered']
    #allocation12 [shape = 'u8[65536]{0}', space=vmem, size = 0x10000, scoped, tag = 'input window, operand 8, single buffered']
    #allocation13 [shape = 's32[1]{0}', space=sflag, size = 0x4, scoped, tag = 'scoped memory for tpu_custom_call.1']
    #allocation14 [shape = 'u8[1024]{0}', space=vmem, size = 0x400, scoped, tag = 'input window, operand 9, single buffered']
    #allocation15 [shape = 'u8[262144]{0}', space=vmem, size = 0x40000, scoped, tag = 'input window, operand 10, single buffered']
    #allocation16 [shape = 's32[1]{0}', space=sflag, size = 0x4, scoped, tag = 'scoped memory for tpu_custom_call.1']
    #allocation17 [shape = 'u8[262144]{0}', space=vmem, size = 0x40000, scoped, tag = 'input window, operand 12, single buffered']
    #allocation18 [shape = 'u8[131072]{0}', space=vmem, size = 0x20000, scoped, tag = 'input window, operand 14, single buffered']
    #allocation19 [shape = 's32[1]{0}', space=sflag, size = 0x4, scoped, tag = 'scoped memory for tpu_custom_call.1']
    #allocation20 [shape = 'u8[131072]{0}', space=vmem, size = 0x20000, scoped, tag = 'input window, operand 16, single buffered']
    #allocation21 [shape = 'u8[32768]{0}', space=vmem, size = 0x8000, scoped, tag = 'input window, operand 18, single buffered']
    #allocation22 [shape = 's32[1]{0}', space=sflag, size = 0x4, scoped, tag = 'scoped memory for tpu_custom_call.1']
    #allocation23 [shape = 'u8[1024]{0}', space=vmem, size = 0x400, scoped, tag = 'output window, operand 0']
    %25 = vsyncpa [#allocation4], 0
    %26 = vsyncpa [#allocation7], 0
    %27 = vsyncpa [#allocation10], 0
    %28 = vsyncpa [#allocation13], 0
    %29 = vsyncpa [#allocation16], 0
    %30 = vsyncpa [#allocation19], 0
    %31 = vsyncpa [#allocation22], 0
    %32 = vsyncpa [#allocation5], 0
    %s33 = scalar_lea.sflag [#allocation5], 1
    %34 = vsyncpa %s33, 0
    loop: start=0, step=1, limit=4
    $region2: #{tpu_custom_call.1} parent=1 // loop_pre_header
      _
    $region3: #{tpu_custom_call.1} parent=1 // loop_header
      %s36 = sphi 0, %s40
      %p37 = scmp.ge.s32.totalorder %s36, 4
      %s46 = sphi 0, %s48
      %s49 = sphi 0, %s46
      %s50 = sphi 0, %s49
      %s66 = sphi 0, %s50
      %s70 = sphi 0, %s70
      %s72 = sphi 0, %s70
      %s73 = sphi 0, %s72
      %s87 = sphi 0, %s73
      %s91 = sphi 0, %s91
      %s93 = sphi 0, %s91
      %s94 = sphi 0, %s93
      %s108 = sphi 0, %s94
      %s112 = sphi 0, %s112
      %s114 = sphi 0, %s112
      %s115 = sphi 0, %s114
      %s129 = sphi 0, %s115
      %s133 = sphi 0, %s133
      %s135 = sphi 0, %s133
      %s136 = sphi 0, %s135
      %s150 = sphi 0, %s136
      %s154 = sphi 0, %s154
      %s156 = sphi 0, %s154
      %s157 = sphi 0, %s156
      %s171 = sphi 0, %s157
      %s175 = sphi 0, %s175
      %s177 = sphi 0, %s175
      %s178 = sphi 0, %s177
      %s192 = sphi 0, %s178
      %s196 = sphi 0, %s196
      %s198 = sphi 0, %s196
      %s199 = sphi 0, %s198
      %s213 = sphi 0, %s199
      %s217 = sphi 0, %s217
      %s219 = sphi 0, %s217
      %s220 = sphi 0, %s219
      %s234 = sphi 0, %s220
      %s238 = sphi 0, %s238
      %s240 = sphi 0, %s238
      %s241 = sphi 0, %s240
      %s255 = sphi 0, %s241
      %s259 = sphi 0, %s259
      %s261 = sphi 0, %s259
      %s262 = sphi 0, %s261
      %s276 = sphi 0, %s262
      %s280 = sphi 0, %s280
      %s282 = sphi 0, %s280
      %s283 = sphi 0, %s282
      %s297 = sphi 0, %s283
      %s301 = sphi 0, %s301
      %s303 = sphi 0, %s301
      %s304 = sphi 0, %s303
      %s318 = sphi 0, %s304
      %s322 = sphi 0, %s322
      %s324 = sphi 0, %s322
      %s325 = sphi 0, %s324
      %s339 = sphi 0, %s325
      %s343 = sphi 0, %s343
      %s345 = sphi 0, %s343
      %s346 = sphi 0, %s345
      %s360 = sphi 0, %s346
      %s364 = sphi 0, %s364
      %s366 = sphi 0, %s364
      %s367 = sphi 0, %s366
      %s381 = sphi 0, %s367
      %s385 = sphi 0, %s385
      %s387 = sphi 0, %s385
      %s388 = sphi 0, %s387
      %s402 = sphi 0, %s388
      %s406 = sphi 0, %s406
      %s408 = sphi 0, %s406
      %s409 = sphi 0, %s408
      %s423 = sphi 0, %s409
      %s427 = sphi 0, %s427
      %s429 = sphi 0, %s427
      %s430 = sphi 0, %s429
      %s444 = sphi 0, %s430
      %s448 = sphi 0, %s448
      %s450 = sphi 0, %s448
      %s451 = sphi 0, %s450
      %s465 = sphi 0, %s451
      %s471 = sphi 0, %s473
      %s474 = sphi 0, %s471
      %s475 = sphi 0, %s474
      %s491 = sphi 0, %s475
    $region4: #{tpu_custom_call.1} parent=1 // loop_header_branch
      %39 = sbr.rel (%p37) target = $region8
    $region5: #{tpu_custom_call.1} parent=1 // loop_body
      %s41 = ssub.s32 %s36, 1
      %s42 = ssub.s32 %s36, 2
      %s43 = sadd.s32 %s36, 1
      %s44 = ssub.s32 %s36, %s43
      %p45 = scmp.eq.s32.totalorder %s44, 0
      %s47 = sadd.s32 %s46, 1
      %s48 = scalar_select %p45, %s46, %s47
      %p51 = pneg %p45
      %p52 = scmp.eq.s32.totalorder %s36, 1
      %p53 = por %p51, %p52
      %p54 = scmp.ne.s32.totalorder %s46, %s49
      %p55 = scmp.eq.s32.totalorder %s36, 0
      %p56 = por %p54, %p55
      %p57 = scmp.ne.s32.totalorder %s46, %s49
      %p58 = scmp.eq.s32.totalorder %s41, 1
      %p59 = por %p57, %p58
      %p60 = scmp.ne.s32.totalorder %s49, %s50
      %p61 = scmp.eq.s32.totalorder %s41, 0
      %p62 = por %p60, %p61
      %p63 = scmp.ne.s32.totalorder %s49, %s50
      %p64 = scmp.eq.s32.totalorder %s42, 1
      %p65 = por %p63, %p64
      %p67 = scmp.ne.s32.totalorder %s50, %s66
      %p68 = scmp.eq.s32.totalorder %s42, 0
      %p69 = por %p67, %p68
      %s71 = sadd.s32 %s70, 1
      %p74 = scmp.eq.s32.totalorder %s36, 1
      %p75 = scmp.ne.s32.totalorder %s70, %s72
      %p76 = scmp.eq.s32.totalorder %s36, 0
      %p77 = por %p75, %p76
      %p78 = scmp.ne.s32.totalorder %s70, %s72
      %p79 = scmp.eq.s32.totalorder %s41, 1
      %p80 = por %p78, %p79
      %p81 = scmp.ne.s32.totalorder %s72, %s73
      %p82 = scmp.eq.s32.totalorder %s41, 0
      %p83 = por %p81, %p82
      %p84 = scmp.ne.s32.totalorder %s72, %s73
      %p85 = scmp.eq.s32.totalorder %s42, 1
      %p86 = por %p84, %p85
      %p88 = scmp.ne.s32.totalorder %s73, %s87
      %p89 = scmp.eq.s32.totalorder %s42, 0
      %p90 = por %p88, %p89
      %s92 = sadd.s32 %s91, 1
      %p95 = scmp.eq.s32.totalorder %s36, 1
      %p96 = scmp.ne.s32.totalorder %s91, %s93
      %p97 = scmp.eq.s32.totalorder %s36, 0
      %p98 = por %p96, %p97
      %p99 = scmp.ne.s32.totalorder %s91, %s93
      %p100 = scmp.eq.s32.totalorder %s41, 1
      %p101 = por %p99, %p100
      %p102 = scmp.ne.s32.totalorder %s93, %s94
      %p103 = scmp.eq.s32.totalorder %s41, 0
      %p104 = por %p102, %p103
      %p105 = scmp.ne.s32.totalorder %s93, %s94
      %p106 = scmp.eq.s32.totalorder %s42, 1
      %p107 = por %p105, %p106
      %p109 = scmp.ne.s32.totalorder %s94, %s108
      %p110 = scmp.eq.s32.totalorder %s42, 0
      %p111 = por %p109, %p110
      %s113 = sadd.s32 %s112, 1
      %p116 = scmp.eq.s32.totalorder %s36, 1
      %p117 = scmp.ne.s32.totalorder %s112, %s114
      %p118 = scmp.eq.s32.totalorder %s36, 0
      %p119 = por %p117, %p118
      %p120 = scmp.ne.s32.totalorder %s112, %s114
      %p121 = scmp.eq.s32.totalorder %s41, 1
      %p122 = por %p120, %p121
      %p123 = scmp.ne.s32.totalorder %s114, %s115
      %p124 = scmp.eq.s32.totalorder %s41, 0
      %p125 = por %p123, %p124
      %p126 = scmp.ne.s32.totalorder %s114, %s115
      %p127 = scmp.eq.s32.totalorder %s42, 1
      %p128 = por %p126, %p127
      %p130 = scmp.ne.s32.totalorder %s115, %s129
      %p131 = scmp.eq.s32.totalorder %s42, 0
      %p132 = por %p130, %p131
      %s134 = sadd.s32 %s133, 1
      %p137 = scmp.eq.s32.totalorder %s36, 1
      %p138 = scmp.ne.s32.totalorder %s133, %s135
      %p139 = scmp.eq.s32.totalorder %s36, 0
      %p140 = por %p138, %p139
      %p141 = scmp.ne.s32.totalorder %s133, %s135
      %p142 = scmp.eq.s32.totalorder %s41, 1
      %p143 = por %p141, %p142
      %p144 = scmp.ne.s32.totalorder %s135, %s136
      %p145 = scmp.eq.s32.totalorder %s41, 0
      %p146 = por %p144, %p145
      %p147 = scmp.ne.s32.totalorder %s135, %s136
      %p148 = scmp.eq.s32.totalorder %s42, 1
      %p149 = por %p147, %p148
      %p151 = scmp.ne.s32.totalorder %s136, %s150
      %p152 = scmp.eq.s32.totalorder %s42, 0
      %p153 = por %p151, %p152
      %s155 = sadd.s32 %s154, 1
      %p158 = scmp.eq.s32.totalorder %s36, 1
      %p159 = scmp.ne.s32.totalorder %s154, %s156
      %p160 = scmp.eq.s32.totalorder %s36, 0
      %p161 = por %p159, %p160
      %p162 = scmp.ne.s32.totalorder %s154, %s156
      %p163 = scmp.eq.s32.totalorder %s41, 1
      %p164 = por %p162, %p163
      %p165 = scmp.ne.s32.totalorder %s156, %s157
      %p166 = scmp.eq.s32.totalorder %s41, 0
      %p167 = por %p165, %p166
      %p168 = scmp.ne.s32.totalorder %s156, %s157
      %p169 = scmp.eq.s32.totalorder %s42, 1
      %p170 = por %p168, %p169
      %p172 = scmp.ne.s32.totalorder %s157, %s171
      %p173 = scmp.eq.s32.totalorder %s42, 0
      %p174 = por %p172, %p173
      %s176 = sadd.s32 %s175, 1
      %p179 = scmp.eq.s32.totalorder %s36, 1
      %p180 = scmp.ne.s32.totalorder %s175, %s177
      %p181 = scmp.eq.s32.totalorder %s36, 0
      %p182 = por %p180, %p181
      %p183 = scmp.ne.s32.totalorder %s175, %s177
      %p184 = scmp.eq.s32.totalorder %s41, 1
      %p185 = por %p183, %p184
      %p186 = scmp.ne.s32.totalorder %s177, %s178
      %p187 = scmp.eq.s32.totalorder %s41, 0
      %p188 = por %p186, %p187
      %p189 = scmp.ne.s32.totalorder %s177, %s178
      %p190 = scmp.eq.s32.totalorder %s42, 1
      %p191 = por %p189, %p190
      %p193 = scmp.ne.s32.totalorder %s178, %s192
      %p194 = scmp.eq.s32.totalorder %s42, 0
      %p195 = por %p193, %p194
      %s197 = sadd.s32 %s196, 1
      %p200 = scmp.eq.s32.totalorder %s36, 1
      %p201 = scmp.ne.s32.totalorder %s196, %s198
      %p202 = scmp.eq.s32.totalorder %s36, 0
      %p203 = por %p201, %p202
      %p204 = scmp.ne.s32.totalorder %s196, %s198
      %p205 = scmp.eq.s32.totalorder %s41, 1
      %p206 = por %p204, %p205
      %p207 = scmp.ne.s32.totalorder %s198, %s199
      %p208 = scmp.eq.s32.totalorder %s41, 0
      %p209 = por %p207, %p208
      %p210 = scmp.ne.s32.totalorder %s198, %s199
      %p211 = scmp.eq.s32.totalorder %s42, 1
      %p212 = por %p210, %p211
      %p214 = scmp.ne.s32.totalorder %s199, %s213
      %p215 = scmp.eq.s32.totalorder %s42, 0
      %p216 = por %p214, %p215
      %s218 = sadd.s32 %s217, 1
      %p221 = scmp.eq.s32.totalorder %s36, 1
      %p222 = scmp.ne.s32.totalorder %s217, %s219
      %p223 = scmp.eq.s32.totalorder %s36, 0
      %p224 = por %p222, %p223
      %p225 = scmp.ne.s32.totalorder %s217, %s219
      %p226 = scmp.eq.s32.totalorder %s41, 1
      %p227 = por %p225, %p226
      %p228 = scmp.ne.s32.totalorder %s219, %s220
      %p229 = scmp.eq.s32.totalorder %s41, 0
      %p230 = por %p228, %p229
      %p231 = scmp.ne.s32.totalorder %s219, %s220
      %p232 = scmp.eq.s32.totalorder %s42, 1
      %p233 = por %p231, %p232
      %p235 = scmp.ne.s32.totalorder %s220, %s234
      %p236 = scmp.eq.s32.totalorder %s42, 0
      %p237 = por %p235, %p236
      %s239 = sadd.s32 %s238, 1
      %p242 = scmp.eq.s32.totalorder %s36, 1
      %p243 = scmp.ne.s32.totalorder %s238, %s240
      %p244 = scmp.eq.s32.totalorder %s36, 0
      %p245 = por %p243, %p244
      %p246 = scmp.ne.s32.totalorder %s238, %s240
      %p247 = scmp.eq.s32.totalorder %s41, 1
      %p248 = por %p246, %p247
      %p249 = scmp.ne.s32.totalorder %s240, %s241
      %p250 = scmp.eq.s32.totalorder %s41, 0
      %p251 = por %p249, %p250
      %p252 = scmp.ne.s32.totalorder %s240, %s241
      %p253 = scmp.eq.s32.totalorder %s42, 1
      %p254 = por %p252, %p253
      %p256 = scmp.ne.s32.totalorder %s241, %s255
      %p257 = scmp.eq.s32.totalorder %s42, 0
      %p258 = por %p256, %p257
      %s260 = sadd.s32 %s259, 1
      %p263 = scmp.eq.s32.totalorder %s36, 1
      %p264 = scmp.ne.s32.totalorder %s259, %s261
      %p265 = scmp.eq.s32.totalorder %s36, 0
      %p266 = por %p264, %p265
      %p267 = scmp.ne.s32.totalorder %s259, %s261
      %p268 = scmp.eq.s32.totalorder %s41, 1
      %p269 = por %p267, %p268
      %p270 = scmp.ne.s32.totalorder %s261, %s262
      %p271 = scmp.eq.s32.totalorder %s41, 0
      %p272 = por %p270, %p271
      %p273 = scmp.ne.s32.totalorder %s261, %s262
      %p274 = scmp.eq.s32.totalorder %s42, 1
      %p275 = por %p273, %p274
      %p277 = scmp.ne.s32.totalorder %s262, %s276
      %p278 = scmp.eq.s32.totalorder %s42, 0
      %p279 = por %p277, %p278
      %s281 = sadd.s32 %s280, 1
      %p284 = scmp.eq.s32.totalorder %s36, 1
      %p285 = scmp.ne.s32.totalorder %s280, %s282
      %p286 = scmp.eq.s32.totalorder %s36, 0
      %p287 = por %p285, %p286
      %p288 = scmp.ne.s32.totalorder %s280, %s282
      %p289 = scmp.eq.s32.totalorder %s41, 1
      %p290 = por %p288, %p289
      %p291 = scmp.ne.s32.totalorder %s282, %s283
      %p292 = scmp.eq.s32.totalorder %s41, 0
      %p293 = por %p291, %p292
      %p294 = scmp.ne.s32.totalorder %s282, %s283
      %p295 = scmp.eq.s32.totalorder %s42, 1
      %p296 = por %p294, %p295
      %p298 = scmp.ne.s32.totalorder %s283, %s297
      %p299 = scmp.eq.s32.totalorder %s42, 0
      %p300 = por %p298, %p299
      %s302 = sadd.s32 %s301, 1
      %p305 = scmp.eq.s32.totalorder %s36, 1
      %p306 = scmp.ne.s32.totalorder %s301, %s303
      %p307 = scmp.eq.s32.totalorder %s36, 0
      %p308 = por %p306, %p307
      %p309 = scmp.ne.s32.totalorder %s301, %s303
      %p310 = scmp.eq.s32.totalorder %s41, 1
      %p311 = por %p309, %p310
      %p312 = scmp.ne.s32.totalorder %s303, %s304
      %p313 = scmp.eq.s32.totalorder %s41, 0
      %p314 = por %p312, %p313
      %p315 = scmp.ne.s32.totalorder %s303, %s304
      %p316 = scmp.eq.s32.totalorder %s42, 1
      %p317 = por %p315, %p316
      %p319 = scmp.ne.s32.totalorder %s304, %s318
      %p320 = scmp.eq.s32.totalorder %s42, 0
      %p321 = por %p319, %p320
      %s323 = sadd.s32 %s322, 1
      %p326 = scmp.eq.s32.totalorder %s36, 1
      %p327 = scmp.ne.s32.totalorder %s322, %s324
      %p328 = scmp.eq.s32.totalorder %s36, 0
      %p329 = por %p327, %p328
      %p330 = scmp.ne.s32.totalorder %s322, %s324
      %p331 = scmp.eq.s32.totalorder %s41, 1
      %p332 = por %p330, %p331
      %p333 = scmp.ne.s32.totalorder %s324, %s325
      %p334 = scmp.eq.s32.totalorder %s41, 0
      %p335 = por %p333, %p334
      %p336 = scmp.ne.s32.totalorder %s324, %s325
      %p337 = scmp.eq.s32.totalorder %s42, 1
      %p338 = por %p336, %p337
      %p340 = scmp.ne.s32.totalorder %s325, %s339
      %p341 = scmp.eq.s32.totalorder %s42, 0
      %p342 = por %p340, %p341
      %s344 = sadd.s32 %s343, 1
      %p347 = scmp.eq.s32.totalorder %s36, 1
      %p348 = scmp.ne.s32.totalorder %s343, %s345
      %p349 = scmp.eq.s32.totalorder %s36, 0
      %p350 = por %p348, %p349
      %p351 = scmp.ne.s32.totalorder %s343, %s345
      %p352 = scmp.eq.s32.totalorder %s41, 1
      %p353 = por %p351, %p352
      %p354 = scmp.ne.s32.totalorder %s345, %s346
      %p355 = scmp.eq.s32.totalorder %s41, 0
      %p356 = por %p354, %p355
      %p357 = scmp.ne.s32.totalorder %s345, %s346
      %p358 = scmp.eq.s32.totalorder %s42, 1
      %p359 = por %p357, %p358
      %p361 = scmp.ne.s32.totalorder %s346, %s360
      %p362 = scmp.eq.s32.totalorder %s42, 0
      %p363 = por %p361, %p362
      %s365 = sadd.s32 %s364, 1
      %p368 = scmp.eq.s32.totalorder %s36, 1
      %p369 = scmp.ne.s32.totalorder %s364, %s366
      %p370 = scmp.eq.s32.totalorder %s36, 0
      %p371 = por %p369, %p370
      %p372 = scmp.ne.s32.totalorder %s364, %s366
      %p373 = scmp.eq.s32.totalorder %s41, 1
      %p374 = por %p372, %p373
      %p375 = scmp.ne.s32.totalorder %s366, %s367
      %p376 = scmp.eq.s32.totalorder %s41, 0
      %p377 = por %p375, %p376
      %p378 = scmp.ne.s32.totalorder %s366, %s367
      %p379 = scmp.eq.s32.totalorder %s42, 1
      %p380 = por %p378, %p379
      %p382 = scmp.ne.s32.totalorder %s367, %s381
      %p383 = scmp.eq.s32.totalorder %s42, 0
      %p384 = por %p382, %p383
      %s386 = sadd.s32 %s385, 1
      %p389 = scmp.eq.s32.totalorder %s36, 1
      %p390 = scmp.ne.s32.totalorder %s385, %s387
      %p391 = scmp.eq.s32.totalorder %s36, 0
      %p392 = por %p390, %p391
      %p393 = scmp.ne.s32.totalorder %s385, %s387
      %p394 = scmp.eq.s32.totalorder %s41, 1
      %p395 = por %p393, %p394
      %p396 = scmp.ne.s32.totalorder %s387, %s388
      %p397 = scmp.eq.s32.totalorder %s41, 0
      %p398 = por %p396, %p397
      %p399 = scmp.ne.s32.totalorder %s387, %s388
      %p400 = scmp.eq.s32.totalorder %s42, 1
      %p401 = por %p399, %p400
      %p403 = scmp.ne.s32.totalorder %s388, %s402
      %p404 = scmp.eq.s32.totalorder %s42, 0
      %p405 = por %p403, %p404
      %s407 = sadd.s32 %s406, 1
      %p410 = scmp.eq.s32.totalorder %s36, 1
      %p411 = scmp.ne.s32.totalorder %s406, %s408
      %p412 = scmp.eq.s32.totalorder %s36, 0
      %p413 = por %p411, %p412
      %p414 = scmp.ne.s32.totalorder %s406, %s408
      %p415 = scmp.eq.s32.totalorder %s41, 1
      %p416 = por %p414, %p415
      %p417 = scmp.ne.s32.totalorder %s408, %s409
      %p418 = scmp.eq.s32.totalorder %s41, 0
      %p419 = por %p417, %p418
      %p420 = scmp.ne.s32.totalorder %s408, %s409
      %p421 = scmp.eq.s32.totalorder %s42, 1
      %p422 = por %p420, %p421
      %p424 = scmp.ne.s32.totalorder %s409, %s423
      %p425 = scmp.eq.s32.totalorder %s42, 0
      %p426 = por %p424, %p425
      %s428 = sadd.s32 %s427, 1
      %p431 = scmp.eq.s32.totalorder %s36, 1
      %p432 = scmp.ne.s32.totalorder %s427, %s429
      %p433 = scmp.eq.s32.totalorder %s36, 0
      %p434 = por %p432, %p433
      %p435 = scmp.ne.s32.totalorder %s427, %s429
      %p436 = scmp.eq.s32.totalorder %s41, 1
      %p437 = por %p435, %p436
      %p438 = scmp.ne.s32.totalorder %s429, %s430
      %p439 = scmp.eq.s32.totalorder %s41, 0
      %p440 = por %p438, %p439
      %p441 = scmp.ne.s32.totalorder %s429, %s430
      %p442 = scmp.eq.s32.totalorder %s42, 1
      %p443 = por %p441, %p442
      %p445 = scmp.ne.s32.totalorder %s430, %s444
      %p446 = scmp.eq.s32.totalorder %s42, 0
      %p447 = por %p445, %p446
      %s449 = sadd.s32 %s448, 1
      %p452 = scmp.eq.s32.totalorder %s36, 1
      %p453 = scmp.ne.s32.totalorder %s448, %s450
      %p454 = scmp.eq.s32.totalorder %s36, 0
      %p455 = por %p453, %p454
      %p456 = scmp.ne.s32.totalorder %s448, %s450
      %p457 = scmp.eq.s32.totalorder %s41, 1
      %p458 = por %p456, %p457
      %p459 = scmp.ne.s32.totalorder %s450, %s451
      %p460 = scmp.eq.s32.totalorder %s41, 0
      %p461 = por %p459, %p460
      %p462 = scmp.ne.s32.totalorder %s450, %s451
      %p463 = scmp.eq.s32.totalorder %s42, 1
      %p464 = por %p462, %p463
      %p466 = scmp.ne.s32.totalorder %s451, %s465
      %p467 = scmp.eq.s32.totalorder %s42, 0
      %p468 = por %p466, %p467
      %s469 = ssub.s32 %s36, %s43
      %p470 = scmp.eq.s32.totalorder %s469, 0
      %s472 = sadd.s32 %s471, 1
      %s473 = scalar_select %p470, %s471, %s472
      %p476 = pneg %p470
      %p477 = scmp.eq.s32.totalorder %s36, 1
      %p478 = por %p476, %p477
      %p479 = scmp.ne.s32.totalorder %s471, %s474
      %p480 = scmp.eq.s32.totalorder %s36, 0
      %p481 = por %p479, %p480
      %p482 = scmp.ne.s32.totalorder %s471, %s474
      %p483 = scmp.eq.s32.totalorder %s41, 1
      %p484 = por %p482, %p483
      %p485 = scmp.ne.s32.totalorder %s474, %s475
      %p486 = scmp.eq.s32.totalorder %s41, 0
      %p487 = por %p485, %p486
      %p488 = scmp.ne.s32.totalorder %s474, %s475
      %p489 = scmp.eq.s32.totalorder %s42, 1
      %p490 = por %p488, %p489
      %p492 = scmp.ne.s32.totalorder %s475, %s491
      %p493 = scmp.eq.s32.totalorder %s42, 0
      %p494 = por %p492, %p493
      %p495 = scmp.le.s32.totalorder 1, %s36
      %p496 = scmp.lt.s32.totalorder %s36, 3
      %p497 = pnand %p495, %p496
      %p498 = pneg %p497
      // Predicated region
      $region9: #{tpu_custom_call.1} parent=5 // pred_check
        _
      $region10: #{tpu_custom_call.1} parent=5 // pred_check_branch
        %500 = sbr.rel (%p497) target = $region12
      $region11: #{tpu_custom_call.1} parent=5 // pred_region
        %s501 = ssub.s32 %s36, 1
        // Predicated region
        $region13: #{tpu_custom_call.1} parent=11 // pred_check
          %p502 = pneg %p83
        $region14: #{tpu_custom_call.1} parent=11 // pred_check_branch
          %504 = sbr.rel (%p502) target = $region16
        $region15: #{tpu_custom_call.1} parent=11 // pred_region
          _
        $region16: #{tpu_custom_call.1} parent=11 // pred_fallthru
          _
        // Predicated region
        $region17: #{tpu_custom_call.1} parent=11 // pred_check
          %p505 = pneg %p104
        $region18: #{tpu_custom_call.1} parent=11 // pred_check_branch
          %507 = sbr.rel (%p505) target = $region20
        $region19: #{tpu_custom_call.1} parent=11 // pred_region
          %509 = vsyncadd [#allocation4], 0
          %s511 = sshll.u32 %s2, 4
          %s512 = int_to_ptr.hbm [resolvable:$true] %s511
          %s513 = sshll.u32 [#allocation3], 4
          %s514 = int_to_ptr.vmem [resolvable:$true] %s513
          %516 = dma.hbm_to_vmem [thread:$0]  %s512, 16, %s514, [#allocation4]
        $region20: #{tpu_custom_call.1} parent=11 // pred_fallthru
          _
        // Predicated region
        $region21: #{tpu_custom_call.1} parent=11 // pred_check
          %p517 = pneg %p125
        $region22: #{tpu_custom_call.1} parent=11 // pred_check_branch
          %519 = sbr.rel (%p517) target = $region24
        $region23: #{tpu_custom_call.1} parent=11 // pred_region
          %521 = vsyncadd [#allocation7], 0
          %s522 = sshll.u32 %s3, 4
          %s523 = int_to_ptr.hbm [resolvable:$true] %s522
          %s524 = sshll.u32 [#allocation6], 4
          %s525 = int_to_ptr.vmem [resolvable:$true] %s524
          %530 = dma.hbm_to_vmem [thread:$0]  %s523, 3072, %s525, [#allocation7], 64, 64, 4
        $region24: #{tpu_custom_call.1} parent=11 // pred_fallthru
          _
        // Predicated region
        $region25: #{tpu_custom_call.1} parent=11 // pred_check
          %p531 = pneg %p146
        $region26: #{tpu_custom_call.1} parent=11 // pred_check_branch
          %533 = sbr.rel (%p531) target = $region28
        $region27: #{tpu_custom_call.1} parent=11 // pred_region
          %535 = vsyncadd [#allocation7], 0
          %s537 = sshll.u32 %s4, 4
          %s538 = int_to_ptr.hbm [resolvable:$true] %s537
          %s539 = sshll.u32 [#allocation8], 4
          %s540 = int_to_ptr.vmem [resolvable:$true] %s539
          %542 = dma.hbm_to_vmem [thread:$0]  %s538, 16, %s540, [#allocation7]
        $region28: #{tpu_custom_call.1} parent=11 // pred_fallthru
          _
        // Predicated region
        $region29: #{tpu_custom_call.1} parent=11 // pred_check
          %p543 = pneg %p167
        $region30: #{tpu_custom_call.1} parent=11 // pred_check_branch
          %545 = sbr.rel (%p543) target = $region32
        $region31: #{tpu_custom_call.1} parent=11 // pred_region
          _
        $region32: #{tpu_custom_call.1} parent=11 // pred_fallthru
          _
        // Predicated region
        $region33: #{tpu_custom_call.1} parent=11 // pred_check
          %p546 = pneg %p188
        $region34: #{tpu_custom_call.1} parent=11 // pred_check_branch
          %548 = sbr.rel (%p546) target = $region36
        $region35: #{tpu_custom_call.1} parent=11 // pred_region
          %550 = vsyncadd [#allocation10], 0
          %s551 = sshll.u32 %s6, 4
          %s552 = int_to_ptr.hbm [resolvable:$true] %s551
          %s553 = sshll.u32 [#allocation9], 4
          %s554 = int_to_ptr.vmem [resolvable:$true] %s553
          %559 = dma.hbm_to_vmem [thread:$0]  %s552, 6144, %s554, [#allocation10], 192, 192, 12
        $region36: #{tpu_custom_call.1} parent=11 // pred_fallthru
          _
        // Predicated region
        $region37: #{tpu_custom_call.1} parent=11 // pred_check
          %p560 = pneg %p209
        $region38: #{tpu_custom_call.1} parent=11 // pred_check_branch
          %562 = sbr.rel (%p560) target = $region40
        $region39: #{tpu_custom_call.1} parent=11 // pred_region
          %564 = vsyncadd [#allocation10], 0
          %s565 = sshll.u32 %s7, 4
          %s566 = int_to_ptr.hbm [resolvable:$true] %s565
          %s567 = sshll.u32 [#allocation11], 4
          %s568 = int_to_ptr.vmem [resolvable:$true] %s567
          %573 = dma.hbm_to_vmem [thread:$0]  %s566, 96, %s568, [#allocation10], 48, 48, 3
        $region40: #{tpu_custom_call.1} parent=11 // pred_fallthru
          _
        // Predicated region
        $region41: #{tpu_custom_call.1} parent=11 // pred_check
          %p574 = pneg %p230
        $region42: #{tpu_custom_call.1} parent=11 // pred_check_branch
          %576 = sbr.rel (%p574) target = $region44
        $region43: #{tpu_custom_call.1} parent=11 // pred_region
          %578 = vsyncadd [#allocation13], 0
          %s579 = sshll.u32 %s8, 4
          %s580 = int_to_ptr.hbm [resolvable:$true] %s579
          %s581 = sshll.u32 [#allocation12], 4
          %s582 = int_to_ptr.vmem [resolvable:$true] %s581
          %587 = dma.hbm_to_vmem [thread:$0]  %s580, 2048, %s582, [#allocation13], 64, 64, 4
        $region44: #{tpu_custom_call.1} parent=11 // pred_fallthru
          _
        // Predicated region
        $region45: #{tpu_custom_call.1} parent=11 // pred_check
          %p588 = pneg %p251
        $region46: #{tpu_custom_call.1} parent=11 // pred_check_branch
          %590 = sbr.rel (%p588) target = $region48
        $region47: #{tpu_custom_call.1} parent=11 // pred_region
          %592 = vsyncadd [#allocation13], 0
          %s593 = sshll.u32 %s9, 4
          %s594 = int_to_ptr.hbm [resolvable:$true] %s593
          %s595 = sshll.u32 [#allocation14], 4
          %s596 = int_to_ptr.vmem [resolvable:$true] %s595
          %601 = dma.hbm_to_vmem [thread:$0]  %s594, 32, %s596, [#allocation13], 16, 16, 1
        $region48: #{tpu_custom_call.1} parent=11 // pred_fallthru
          _
        // Predicated region
        $region49: #{tpu_custom_call.1} parent=11 // pred_check
          %p602 = pneg %p272
        $region50: #{tpu_custom_call.1} parent=11 // pred_check_branch
          %604 = sbr.rel (%p602) target = $region52
        $region51: #{tpu_custom_call.1} parent=11 // pred_region
          %606 = vsyncadd [#allocation16], 0
          %s607 = sshll.u32 %s10, 4
          %s608 = int_to_ptr.hbm [resolvable:$true] %s607
          %s609 = sshll.u32 [#allocation15], 4
          %s610 = int_to_ptr.vmem [resolvable:$true] %s609
          %615 = dma.hbm_to_vmem [thread:$0]  %s608, 8192, %s610, [#allocation16], 256, 256, 16
        $region52: #{tpu_custom_call.1} parent=11 // pred_fallthru
          _
        // Predicated region
        $region53: #{tpu_custom_call.1} parent=11 // pred_check
          %p616 = pneg %p293
        $region54: #{tpu_custom_call.1} parent=11 // pred_check_branch
          %618 = sbr.rel (%p616) target = $region56
        $region55: #{tpu_custom_call.1} parent=11 // pred_region
          _
        $region56: #{tpu_custom_call.1} parent=11 // pred_fallthru
          _
        // Predicated region
        $region57: #{tpu_custom_call.1} parent=11 // pred_check
          %p619 = pneg %p314
        $region58: #{tpu_custom_call.1} parent=11 // pred_check_branch
          %621 = sbr.rel (%p619) target = $region60
        $region59: #{tpu_custom_call.1} parent=11 // pred_region
          %623 = vsyncadd [#allocation16], 0
          %s624 = sshll.u32 %s12, 4
          %s625 = int_to_ptr.hbm [resolvable:$true] %s624
          %s626 = sshll.u32 [#allocation17], 4
          %s627 = int_to_ptr.vmem [resolvable:$true] %s626
          %632 = dma.hbm_to_vmem [thread:$0]  %s625, 8192, %s627, [#allocation16], 64, 64, 4
        $region60: #{tpu_custom_call.1} parent=11 // pred_fallthru
          _
        // Predicated region
        $region61: #{tpu_custom_call.1} parent=11 // pred_check
          %p633 = pneg %p335
        $region62: #{tpu_custom_call.1} parent=11 // pred_check_branch
          %635 = sbr.rel (%p633) target = $region64
        $region63: #{tpu_custom_call.1} parent=11 // pred_region
          _
        $region64: #{tpu_custom_call.1} parent=11 // pred_fallthru
          _
        // Predicated region
        $region65: #{tpu_custom_call.1} parent=11 // pred_check
          %p636 = pneg %p356
        $region66: #{tpu_custom_call.1} parent=11 // pred_check_branch
          %638 = sbr.rel (%p636) target = $region68
        $region67: #{tpu_custom_call.1} parent=11 // pred_region
          %640 = vsyncadd [#allocation19], 0
          %s641 = sshll.u32 %s14, 4
          %s642 = int_to_ptr.hbm [resolvable:$true] %s641
          %s643 = sshll.u32 [#allocation18], 4
          %s644 = int_to_ptr.vmem [resolvable:$true] %s643
          %649 = dma.hbm_to_vmem [thread:$0]  %s642, 4096, %s644, [#allocation19], 128, 128, 8
        $region68: #{tpu_custom_call.1} parent=11 // pred_fallthru
          _
        // Predicated region
        $region69: #{tpu_custom_call.1} parent=11 // pred_check
          %p650 = pneg %p377
        $region70: #{tpu_custom_call.1} parent=11 // pred_check_branch
          %652 = sbr.rel (%p650) target = $region72
        $region71: #{tpu_custom_call.1} parent=11 // pred_region
          _
        $region72: #{tpu_custom_call.1} parent=11 // pred_fallthru
          _
        // Predicated region
        $region73: #{tpu_custom_call.1} parent=11 // pred_check
          %p653 = pneg %p398
        $region74: #{tpu_custom_call.1} parent=11 // pred_check_branch
          %655 = sbr.rel (%p653) target = $region76
        $region75: #{tpu_custom_call.1} parent=11 // pred_region
          %657 = vsyncadd [#allocation19], 0
          %s658 = sshll.u32 %s16, 4
          %s659 = int_to_ptr.hbm [resolvable:$true] %s658
          %s660 = sshll.u32 [#allocation20], 4
          %s661 = int_to_ptr.vmem [resolvable:$true] %s660
          %666 = dma.hbm_to_vmem [thread:$0]  %s659, 4096, %s661, [#allocation19], 64, 64, 4
        $region76: #{tpu_custom_call.1} parent=11 // pred_fallthru
          _
        // Predicated region
        $region77: #{tpu_custom_call.1} parent=11 // pred_check
          %p667 = pneg %p419
        $region78: #{tpu_custom_call.1} parent=11 // pred_check_branch
          %669 = sbr.rel (%p667) target = $region80
        $region79: #{tpu_custom_call.1} parent=11 // pred_region
          _
        $region80: #{tpu_custom_call.1} parent=11 // pred_fallthru
          _
        // Predicated region
        $region81: #{tpu_custom_call.1} parent=11 // pred_check
          %p670 = pneg %p440
        $region82: #{tpu_custom_call.1} parent=11 // pred_check_branch
          %672 = sbr.rel (%p670) target = $region84
        $region83: #{tpu_custom_call.1} parent=11 // pred_region
          %674 = vsyncadd [#allocation22], 0
          %s675 = sshll.u32 %s18, 4
          %s676 = int_to_ptr.hbm [resolvable:$true] %s675
          %s677 = sshll.u32 [#allocation21], 4
          %s678 = int_to_ptr.vmem [resolvable:$true] %s677
          %683 = dma.hbm_to_vmem [thread:$0]  %s676, 1024, %s678, [#allocation22], 64, 64, 4
        $region84: #{tpu_custom_call.1} parent=11 // pred_fallthru
          _
        // Predicated region
        $region85: #{tpu_custom_call.1} parent=11 // pred_check
          %p684 = pneg %p461
        $region86: #{tpu_custom_call.1} parent=11 // pred_check_branch
          %686 = sbr.rel (%p684) target = $region88
        $region87: #{tpu_custom_call.1} parent=11 // pred_region
          _
        $region88: #{tpu_custom_call.1} parent=11 // pred_fallthru
          _
      $region12: #{tpu_custom_call.1} parent=5 // pred_fallthru
        _
      %p687 = scmp.lt.s32.totalorder %s36, 2
      // Predicated region
      $region89: #{tpu_custom_call.1} parent=5 // pred_check
        %p688 = pneg %p687
      $region90: #{tpu_custom_call.1} parent=5 // pred_check_branch
        %690 = sbr.rel (%p688) target = $region92
      $region91: #{tpu_custom_call.1} parent=5 // pred_region
        // Predicated region
        $region93: #{tpu_custom_call.1} parent=91 // pred_check
          %p691 = pneg %p56
        $region94: #{tpu_custom_call.1} parent=91 // pred_check_branch
          %693 = sbr.rel (%p691) target = $region96
        $region95: #{tpu_custom_call.1} parent=91 // pred_region
          %p694 = scmp.lt.s32.totalorder %s36, 1
          %s695 = scalar_select %p694, %s36, 1
          %s696 = smul.addr %s695, 8
          %s697 = scalar_lea.vmem %s0, %s696
        $region96: #{tpu_custom_call.1} parent=91 // pred_fallthru
          _
      $region92: #{tpu_custom_call.1} parent=5 // pred_fallthru
        _
      %p698 = scmp.le.s32.totalorder 1, %s36
      %p699 = scmp.lt.s32.totalorder %s36, 3
      %p700 = pnand %p698, %p699
      %p701 = pneg %p700
      // Predicated region
      $region97: #{tpu_custom_call.1} parent=5 // pred_check
        _
      $region98: #{tpu_custom_call.1} parent=5 // pred_check_branch
        %703 = sbr.rel (%p700) target = $region100
      $region99: #{tpu_custom_call.1} parent=5 // pred_region
        %s704 = ssub.s32 %s36, 1
        // Predicated region
        $region101: #{tpu_custom_call.1} parent=99 // pred_check
          %p705 = pneg %p104
        $region102: #{tpu_custom_call.1} parent=99 // pred_check_branch
          %707 = sbr.rel (%p705) target = $region104
        $region103: #{tpu_custom_call.1} parent=99 // pred_region
          %709 = dma.done [#allocation4], 16
        $region104: #{tpu_custom_call.1} parent=99 // pred_fallthru
          _
        // Predicated region
        $region105: #{tpu_custom_call.1} parent=99 // pred_check
          %p710 = pneg %p125
        $region106: #{tpu_custom_call.1} parent=99 // pred_check_branch
          %712 = sbr.rel (%p710) target = $region108
        $region107: #{tpu_custom_call.1} parent=99 // pred_region
          %714 = dma.done [#allocation7], 3072
        $region108: #{tpu_custom_call.1} parent=99 // pred_fallthru
          _
        // Predicated region
        $region109: #{tpu_custom_call.1} parent=99 // pred_check
          %p715 = pneg %p146
        $region110: #{tpu_custom_call.1} parent=99 // pred_check_branch
          %717 = sbr.rel (%p715) target = $region112
        $region111: #{tpu_custom_call.1} parent=99 // pred_region
          %719 = dma.done [#allocation7], 16
        $region112: #{tpu_custom_call.1} parent=99 // pred_fallthru
          _
        // Predicated region
        $region113: #{tpu_custom_call.1} parent=99 // pred_check
          %p720 = pneg %p188
        $region114: #{tpu_custom_call.1} parent=99 // pred_check_branch
          %722 = sbr.rel (%p720) target = $region116
        $region115: #{tpu_custom_call.1} parent=99 // pred_region
          %724 = dma.done [#allocation10], 6144
        $region116: #{tpu_custom_call.1} parent=99 // pred_fallthru
          _
        // Predicated region
        $region117: #{tpu_custom_call.1} parent=99 // pred_check
          %p725 = pneg %p209
        $region118: #{tpu_custom_call.1} parent=99 // pred_check_branch
          %727 = sbr.rel (%p725) target = $region120
        $region119: #{tpu_custom_call.1} parent=99 // pred_region
          %729 = dma.done [#allocation10], 96
        $region120: #{tpu_custom_call.1} parent=99 // pred_fallthru
          _
        // Predicated region
        $region121: #{tpu_custom_call.1} parent=99 // pred_check
          %p730 = pneg %p230
        $region122: #{tpu_custom_call.1} parent=99 // pred_check_branch
          %732 = sbr.rel (%p730) target = $region124
        $region123: #{tpu_custom_call.1} parent=99 // pred_region
          %734 = dma.done [#allocation13], 2048
        $region124: #{tpu_custom_call.1} parent=99 // pred_fallthru
          _
        // Predicated region
        $region125: #{tpu_custom_call.1} parent=99 // pred_check
          %p735 = pneg %p251
        $region126: #{tpu_custom_call.1} parent=99 // pred_check_branch
          %737 = sbr.rel (%p735) target = $region128
        $region127: #{tpu_custom_call.1} parent=99 // pred_region
          %739 = dma.done [#allocation13], 32
        $region128: #{tpu_custom_call.1} parent=99 // pred_fallthru
          _
        // Predicated region
        $region129: #{tpu_custom_call.1} parent=99 // pred_check
          %p740 = pneg %p272
        $region130: #{tpu_custom_call.1} parent=99 // pred_check_branch
          %742 = sbr.rel (%p740) target = $region132
        $region131: #{tpu_custom_call.1} parent=99 // pred_region
          %744 = dma.done [#allocation16], 8192
        $region132: #{tpu_custom_call.1} parent=99 // pred_fallthru
          _
        // Predicated region
        $region133: #{tpu_custom_call.1} parent=99 // pred_check
          %p745 = pneg %p314
        $region134: #{tpu_custom_call.1} parent=99 // pred_check_branch
          %747 = sbr.rel (%p745) target = $region136
        $region135: #{tpu_custom_call.1} parent=99 // pred_region
          %749 = dma.done [#allocation16], 8192
        $region136: #{tpu_custom_call.1} parent=99 // pred_fallthru
          _
        // Predicated region
        $region137: #{tpu_custom_call.1} parent=99 // pred_check
          %p750 = pneg %p356
        $region138: #{tpu_custom_call.1} parent=99 // pred_check_branch
          %752 = sbr.rel (%p750) target = $region140
        $region139: #{tpu_custom_call.1} parent=99 // pred_region
          %754 = dma.done [#allocation19], 4096
        $region140: #{tpu_custom_call.1} parent=99 // pred_fallthru
          _
        // Predicated region
        $region141: #{tpu_custom_call.1} parent=99 // pred_check
          %p755 = pneg %p398
        $region142: #{tpu_custom_call.1} parent=99 // pred_check_branch
          %757 = sbr.rel (%p755) target = $region144
        $region143: #{tpu_custom_call.1} parent=99 // pred_region
          %759 = dma.done [#allocation19], 4096
        $region144: #{tpu_custom_call.1} parent=99 // pred_fallthru
          _
        // Predicated region
        $region145: #{tpu_custom_call.1} parent=99 // pred_check
          %p760 = pneg %p440
        $region146: #{tpu_custom_call.1} parent=99 // pred_check_branch
          %762 = sbr.rel (%p760) target = $region148
        $region147: #{tpu_custom_call.1} parent=99 // pred_region
          %764 = dma.done [#allocation22], 1024
        $region148: #{tpu_custom_call.1} parent=99 // pred_fallthru
          _
        %p765 = scmp.lt.s32.totalorder %s41, 1
        %s766 = scalar_select %p765, %s41, 1
        %s767 = smul.addr %s766, 8
        %s768 = scalar_lea.vmem %s0, %s767
        %p769 = pneg %p62
        %p770 = pneg %p59
        %p771 = pneg %p83
        %p772 = pneg %p80
        %p773 = pneg %p104
        %p774 = pneg %p101
        %p775 = pneg %p125
        %p776 = pneg %p122
        %p777 = pneg %p146
        %p778 = pneg %p143
        %p779 = pneg %p167
        %p780 = pneg %p164
        %p781 = pneg %p188
        %p782 = pneg %p185
        %p783 = pneg %p209
        %p784 = pneg %p206
        %p785 = pneg %p230
        %p786 = pneg %p227
        %p787 = pneg %p251
        %p788 = pneg %p248
        %p789 = pneg %p272
        %p790 = pneg %p269
        %p791 = pneg %p293
        %p792 = pneg %p290
        %p793 = pneg %p314
        %p794 = pneg %p311
        %p795 = pneg %p335
        %p796 = pneg %p332
        %p797 = pneg %p356
        %p798 = pneg %p353
        %p799 = pneg %p377
        %p800 = pneg %p374
        %p801 = pneg %p398
        %p802 = pneg %p395
        %p803 = pneg %p419
        %p804 = pneg %p416
        %p805 = pneg %p440
        %p806 = pneg %p437
        %p807 = pneg %p461
        %p808 = pneg %p458
        %p809 = pneg %p487
        %p810 = pneg %p484
        %s811 = sand.u32 %s474, 1
        %s812 = scalar_lea.sflag [#allocation5], %s811
        %s813 = sand.u32 %s474, 1
        %s814 = scalar_lea.vmem [#allocation23], %s813
        %p815 = scmp.lt.s32.totalorder %s41, 1
        %s816 = scalar_select %p815, %s41, 1
        %s817 = smul.addr %s816, 8
        %s818 = scalar_lea.vmem %s0, %s817
        %v819 = vld [vmem:[%s818] sm:$0xff]
        %v820 = vld [vmem:[#allocation3] sm:$0x1]
        %v821 = vld [vmem:[%s1] sm:$0x7]
        %vm822 = vcmask 23552
        %v824 = vsel %vm822, %v819, 0
        %vm826 = vcmask 1042432
        %v828 = vsel %vm826, %v821, 0
        %830 = vmatpush.msra.mxu0 0.0
        %831 = vmatpush.msra.mxu0 0.0
        %832 = vmatpush.msra.mxu0 0.0
        %833 = vmatpush.msra.mxu0 0.0
        %834 = vmatpush.msra.mxu0 0.0
        %835 = vmatpush.msra.mxu0 0.0
        %836 = vmatpush.msra.mxu0 0.0
        %837 = vmatpush.msra.mxu0 0.0
        %838 = vmatpush.msra.mxu0 0.0
        %839 = vmatpush.msra.mxu0 0.0
        %840 = vmatpush.msra.mxu0 0.0
        %841 = vmatpush.msra.mxu0 0.0
        %842 = vmatpush.msra.mxu0 0.0
        %843 = vmatpush.msra.mxu0 0.0
        %844 = vmatpush.msra.mxu0 0.0
        %845 = vmatpush.msra.mxu0 %v828
        %846 = vmatmul.f32.gmra.mxu0 %v824
        %v847 = vpop.f32.mrf.mxu0
        %v848 = vadd.f32 0.0, %v847
        %849 = vdwg.mxu0
        %s850 = scalar_lea.vmem %s1, 4
        %v851 = vld [vmem:[%s850] sm:$0x7]
        %v853 = vsel %vm826, %v851, 0
        %855 = vmatpush.msra.mxu0 0.0
        %856 = vmatpush.msra.mxu0 0.0
        %857 = vmatpush.msra.mxu0 0.0
        %858 = vmatpush.msra.mxu0 0.0
        %859 = vmatpush.msra.mxu0 0.0
        %860 = vmatpush.msra.mxu0 0.0
        %861 = vmatpush.msra.mxu0 0.0
        %862 = vmatpush.msra.mxu0 0.0
        %863 = vmatpush.msra.mxu0 0.0
        %864 = vmatpush.msra.mxu0 0.0
        %865 = vmatpush.msra.mxu0 0.0
        %866 = vmatpush.msra.mxu0 0.0
        %867 = vmatpush.msra.mxu0 0.0
        %868 = vmatpush.msra.mxu0 0.0
        %869 = vmatpush.msra.mxu0 0.0
        %870 = vmatpush.msra.mxu0 %v853
        %871 = vmatmul.f32.gmra.mxu0 %v824
        %v872 = vpop.f32.mrf.mxu0
        %v873 = vadd.f32 0.0, %v872
        %874 = vdwg.mxu0
        %s875 = scalar_lea.vmem %s1, 8
        %v876 = vld [vmem:[%s875] sm:$0x7]
        %v878 = vsel %vm826, %v876, 0
        %880 = vmatpush.msra.mxu0 0.0
        %881 = vmatpush.msra.mxu0 0.0
        %882 = vmatpush.msra.mxu0 0.0
        %883 = vmatpush.msra.mxu0 0.0
        %884 = vmatpush.msra.mxu0 0.0
        %885 = vmatpush.msra.mxu0 0.0
        %886 = vmatpush.msra.mxu0 0.0
        %887 = vmatpush.msra.mxu0 0.0
        %888 = vmatpush.msra.mxu0 0.0
        %889 = vmatpush.msra.mxu0 0.0
        %890 = vmatpush.msra.mxu0 0.0
        %891 = vmatpush.msra.mxu0 0.0
        %892 = vmatpush.msra.mxu0 0.0
        %893 = vmatpush.msra.mxu0 0.0
        %894 = vmatpush.msra.mxu0 0.0
        %895 = vmatpush.msra.mxu0 %v878
        %896 = vmatmul.f32.gmra.mxu0 %v824
        %v897 = vpop.f32.mrf.mxu0
        %v898 = vadd.f32 0.0, %v897
        %899 = vdwg.mxu0
        %v900 = vrot.slane %v848, 7
        %v901 = vlaneseq
        %v902 = vshrl.u32 %v901, 7
        %vm903 = vcmp.ge.s32.totalorder %v902, 1
        %v904 = vsel %vm903, %v900, 0.0
        %v905 = vadd.f32 %v904, %v873
        %v906 = vrot.slane %v898, 1
        %vm907 = vcmp.lt.s32.totalorder %v902, 7
        %v908 = vsel %vm907, %v906, 0.0
        %v909 = vadd.f32 %v905, %v908
        %v911 = vperm.slane %v820, 0
        %v913 = vadd.f32 %v909, %v911
        %v914 = vmul.f32 %v913, 0.5
        %v915 = vmul.f32 %v913, 0.044715
        %v916 = vmul.f32 %v915, %v913
        %v917 = vmul.f32 %v916, %v913
        %v918 = vadd.f32 %v913, %v917
        %v919 = vmul.f32 %v918, 0.7978846
        %v920 = vtanh.pop %v919
        %v921 = vadd.f32 %v920, 1.0
        %v922 = vmul.f32 %v914, %v921
        %v923 = vld [vmem:[#allocation8] sm:$0x1]
        %v924 = vpack.c.bf16 %v922, %v922
        %v925 = vld [vmem:[#allocation6] sm:$0xf]
        %v926 = vld [vmem:[#allocation6 + $0x4] sm:$0xf]
        %v927 = vld [vmem:[#allocation6 + $0x8] sm:$0xf]
        %v928 = vld [vmem:[#allocation6 + $0xc] sm:$0xf]
        %v929 = vld [vmem:[#allocation6 + $0x10] sm:$0xf]
        %v930 = vld [vmem:[#allocation6 + $0x14] sm:$0xf]
        %v931 = vld [vmem:[#allocation6 + $0x18] sm:$0xf]
        %v932 = vld [vmem:[#allocation6 + $0x1c] sm:$0xf]
        %v933 = vld [vmem:[#allocation6 + $0x20] sm:$0xf]
        %v934 = vld [vmem:[#allocation6 + $0x24] sm:$0xf]
        %v935 = vld [vmem:[#allocation6 + $0x28] sm:$0xf]
        %v936 = vld [vmem:[#allocation6 + $0x2c] sm:$0xf]
        %v937 = vld [vmem:[#allocation6 + $0x30] sm:$0xf]
        %v938 = vld [vmem:[#allocation6 + $0x34] sm:$0xf]
        %v939 = vld [vmem:[#allocation6 + $0x38] sm:$0xf]
        %v940 = vld [vmem:[#allocation6 + $0x3c] sm:$0xf]
        %v957 = vunpack.c.l.b16 %v925
        %v958 = vunpack.c.l.b16 %v926
        %v959 = vunpack.c.l.b16 %v927
        %v960 = vunpack.c.l.b16 %v928
        %v961 = vunpack.c.l.b16 %v929
        %v962 = vunpack.c.l.b16 %v930
        %v963 = vunpack.c.l.b16 %v931
        %v964 = vunpack.c.l.b16 %v932
        %v965 = vunpack.c.l.b16 %v933
        %v966 = vunpack.c.l.b16 %v934
        %v967 = vunpack.c.l.b16 %v935
        %v968 = vunpack.c.l.b16 %v936
        %v969 = vunpack.c.l.b16 %v937
        %v970 = vunpack.c.l.b16 %v938
        %v971 = vunpack.c.l.b16 %v939
        %v972 = vunpack.c.l.b16 %v940
        %v973 = vpack.c.b16 %v958, %v957
        %v974 = vpack.c.b16 %v960, %v959
        %v975 = vpack.c.b16 %v962, %v961
        %v976 = vpack.c.b16 %v964, %v963
        %v977 = vpack.c.b16 %v966, %v965
        %v978 = vpack.c.b16 %v968, %v967
        %v979 = vpack.c.b16 %v970, %v969
        %v980 = vpack.c.b16 %v972, %v971
        %989 = vmatpush.bf16.msra.mxu0 %v980
        %990 = vmatpush.bf16.msra.mxu0 %v979
        %991 = vmatpush.bf16.msra.mxu0 %v978
        %992 = vmatpush.bf16.msra.mxu0 %v977
        %993 = vmatpush.bf16.msra.mxu0 %v976
        %994 = vmatpush.bf16.msra.mxu0 %v975
        %995 = vmatpush.bf16.msra.mxu0 %v974
        %996 = vmatpush.bf16.msra.mxu0 %v973
        %997 = vmatmul.bf16.gmra.mxu0 %v924
        %v998 = vpop.f32.mrf.mxu0
        %v999 = vadd.f32 0.0, %v998
        %v1000 = vpop.f32.mrf.mxu0
        %1001 = vdwg.mxu0
        %s1002 = scalar_lea.vmem [#allocation6], 64
        %v1003 = vld [vmem:[%s1002] sm:$0xf]
        %v1004 = vld [vmem:[%s1002 + $0x4] sm:$0xf]
        %v1005 = vld [vmem:[%s1002 + $0x8] sm:$0xf]
        %v1006 = vld [vmem:[%s1002 + $0xc] sm:$0xf]
        %v1007 = vld [vmem:[%s1002 + $0x10] sm:$0xf]
        %v1008 = vld [vmem:[%s1002 + $0x14] sm:$0xf]
        %v1009 = vld [vmem:[%s1002 + $0x18] sm:$0xf]
        %v1010 = vld [vmem:[%s1002 + $0x1c] sm:$0xf]
        %v1011 = vld [vmem:[%s1002 + $0x20] sm:$0xf]
        %v1012 = vld [vmem:[%s1002 + $0x24] sm:$0xf]
        %v1013 = vld [vmem:[%s1002 + $0x28] sm:$0xf]
        %v1014 = vld [vmem:[%s1002 + $0x2c] sm:$0xf]
        %v1015 = vld [vmem:[%s1002 + $0x30] sm:$0xf]
        %v1016 = vld [vmem:[%s1002 + $0x34] sm:$0xf]
        %v1017 = vld [vmem:[%s1002 + $0x38] sm:$0xf]
        %v1018 = vld [vmem:[%s1002 + $0x3c] sm:$0xf]
        %v1035 = vunpack.c.l.b16 %v1003
        %v1036 = vunpack.c.l.b16 %v1004
        %v1037 = vunpack.c.l.b16 %v1005
        %v1038 = vunpack.c.l.b16 %v1006
        %v1039 = vunpack.c.l.b16 %v1007
        %v1040 = vunpack.c.l.b16 %v1008
        %v1041 = vunpack.c.l.b16 %v1009
        %v1042 = vunpack.c.l.b16 %v1010
        %v1043 = vunpack.c.l.b16 %v1011
        %v1044 = vunpack.c.l.b16 %v1012
        %v1045 = vunpack.c.l.b16 %v1013
        %v1046 = vunpack.c.l.b16 %v1014
        %v1047 = vunpack.c.l.b16 %v1015
        %v1048 = vunpack.c.l.b16 %v1016
        %v1049 = vunpack.c.l.b16 %v1017
        %v1050 = vunpack.c.l.b16 %v1018
        %v1051 = vpack.c.b16 %v1036, %v1035
        %v1052 = vpack.c.b16 %v1038, %v1037
        %v1053 = vpack.c.b16 %v1040, %v1039
        %v1054 = vpack.c.b16 %v1042, %v1041
        %v1055 = vpack.c.b16 %v1044, %v1043
        %v1056 = vpack.c.b16 %v1046, %v1045
        %v1057 = vpack.c.b16 %v1048, %v1047
        %v1058 = vpack.c.b16 %v1050, %v1049
        %1067 = vmatpush.bf16.msra.mxu0 %v1058
        %1068 = vmatpush.bf16.msra.mxu0 %v1057
        %1069 = vmatpush.bf16.msra.mxu0 %v1056
        %1070 = vmatpush.bf16.msra.mxu0 %v1055
        %1071 = vmatpush.bf16.msra.mxu0 %v1054
        %1072 = vmatpush.bf16.msra.mxu0 %v1053
        %1073 = vmatpush.bf16.msra.mxu0 %v1052
        %1074 = vmatpush.bf16.msra.mxu0 %v1051
        %1075 = vmatmul.bf16.gmra.mxu0 %v924
        %v1076 = vpop.f32.mrf.mxu0
        %v1077 = vadd.f32 0.0, %v1076
        %v1078 = vpop.f32.mrf.mxu0
        %1079 = vdwg.mxu0
        %s1080 = scalar_lea.vmem [#allocation6], 128
        %v1081 = vld [vmem:[%s1080] sm:$0xf]
        %v1082 = vld [vmem:[%s1080 + $0x4] sm:$0xf]
        %v1083 = vld [vmem:[%s1080 + $0x8] sm:$0xf]
        %v1084 = vld [vmem:[%s1080 + $0xc] sm:$0xf]
        %v1085 = vld [vmem:[%s1080 + $0x10] sm:$0xf]
        %v1086 = vld [vmem:[%s1080 + $0x14] sm:$0xf]
        %v1087 = vld [vmem:[%s1080 + $0x18] sm:$0xf]
        %v1088 = vld [vmem:[%s1080 + $0x1c] sm:$0xf]
        %v1089 = vld [vmem:[%s1080 + $0x20] sm:$0xf]
        %v1090 = vld [vmem:[%s1080 + $0x24] sm:$0xf]
        %v1091 = vld [vmem:[%s1080 + $0x28] sm:$0xf]
        %v1092 = vld [vmem:[%s1080 + $0x2c] sm:$0xf]
        %v1093 = vld [vmem:[%s1080 + $0x30] sm:$0xf]
        %v1094 = vld [vmem:[%s1080 + $0x34] sm:$0xf]
        %v1095 = vld [vmem:[%s1080 + $0x38] sm:$0xf]
        %v1096 = vld [vmem:[%s1080 + $0x3c] sm:$0xf]
        %v1113 = vunpack.c.l.b16 %v1081
        %v1114 = vunpack.c.l.b16 %v1082
        %v1115 = vunpack.c.l.b16 %v1083
        %v1116 = vunpack.c.l.b16 %v1084
        %v1117 = vunpack.c.l.b16 %v1085
        %v1118 = vunpack.c.l.b16 %v1086
        %v1119 = vunpack.c.l.b16 %v1087
        %v1120 = vunpack.c.l.b16 %v1088
        %v1121 = vunpack.c.l.b16 %v1089
        %v1122 = vunpack.c.l.b16 %v1090
        %v1123 = vunpack.c.l.b16 %v1091
        %v1124 = vunpack.c.l.b16 %v1092
        %v1125 = vunpack.c.l.b16 %v1093
        %v1126 = vunpack.c.l.b16 %v1094
        %v1127 = vunpack.c.l.b16 %v1095
        %v1128 = vunpack.c.l.b16 %v1096
        %v1129 = vpack.c.b16 %v1114, %v1113
        %v1130 = vpack.c.b16 %v1116, %v1115
        %v1131 = vpack.c.b16 %v1118, %v1117
        %v1132 = vpack.c.b16 %v1120, %v1119
        %v1133 = vpack.c.b16 %v1122, %v1121
        %v1134 = vpack.c.b16 %v1124, %v1123
        %v1135 = vpack.c.b16 %v1126, %v1125
        %v1136 = vpack.c.b16 %v1128, %v1127
        %1145 = vmatpush.bf16.msra.mxu0 %v1136
        %1146 = vmatpush.bf16.msra.mxu0 %v1135
        %1147 = vmatpush.bf16.msra.mxu0 %v1134
        %1148 = vmatpush.bf16.msra.mxu0 %v1133
        %1149 = vmatpush.bf16.msra.mxu0 %v1132
        %1150 = vmatpush.bf16.msra.mxu0 %v1131
        %1151 = vmatpush.bf16.msra.mxu0 %v1130
        %1152 = vmatpush.bf16.msra.mxu0 %v1129
        %1153 = vmatmul.bf16.gmra.mxu0 %v924
        %v1154 = vpop.f32.mrf.mxu0
        %v1155 = vadd.f32 0.0, %v1154
        %v1156 = vpop.f32.mrf.mxu0
        %1157 = vdwg.mxu0
        %v1158 = vrot.slane %v999, 7
        %v1159 = vsel %vm903, %v1158, 0.0
        %v1160 = vadd.f32 %v1159, %v1077
        %v1161 = vrot.slane %v1155, 1
        %v1162 = vsel %vm907, %v1161, 0.0
        %v1163 = vadd.f32 %v1160, %v1162
        %v1165 = vperm.slane %v923, 0
        %v1167 = vadd.f32 %v1163, %v1165
        %v1168 = vmul.f32 %v1167, 0.5
        %v1169 = vmul.f32 %v1167, 0.044715
        %v1170 = vmul.f32 %v1169, %v1167
        %v1171 = vmul.f32 %v1170, %v1167
        %v1172 = vadd.f32 %v1167, %v1171
        %v1173 = vmul.f32 %v1172, 0.7978846
        %v1174 = vtanh.pop %v1173
        %v1175 = vadd.f32 %v1174, 1.0
        %v1176 = vmul.f32 %v1168, %v1175
        %v1177 = vld [vmem:[%s5] sm:$0x1]
        %v1178 = vld [vmem:[%s5 + $0x1] sm:$0x1]
        %v1179 = vld [vmem:[%s5 + $0x2] sm:$0x1]
        %v1180 = vld [vmem:[%s5 + $0x3] sm:$0x1]
        %1181 = vadd.xlane.f32.xlu0 %v1176
        %v1182 = vpop.xlane.xlu0 %1181
        %v1183 = vrcp.pop 128.0
        %v1184 = vmul.f32 128.0, %v1183
        %v1185 = vsub.f32 1.0, %v1184
        %v1186 = vmul.f32 %v1183, %v1185
        %v1187 = vadd.f32 %v1183, %v1186
        %vm1188 = vweird.f32 %v1183
        %v1189 = vsel %vm1188, %v1183, %v1187
        %v1190 = vmul.f32 %v1182, %v1189
        %v1191 = vsub.f32 %v1176, %v1190
        %v1192 = vmul.f32 %v1191, %v1191
        %1193 = vadd.xlane.f32.xlu0 %v1192
        %v1194 = vpop.xlane.xlu0 %1193
        %v1195 = vmul.f32 %v1194, %v1189
        %v1196 = vadd.f32 %v1195, 1e-05
        %v1197 = vrsqrt.pop %v1196
        %v1198 = vmul.f32 %v1197, %v1196
        %v1199 = vmul.f32 %v1198, %v1197
        %v1200 = vmul.f32 0.5, %v1199
        %v1201 = vsub.f32 1.5, %v1200
        %v1202 = vmul.f32 %v1197, %v1201
        %vm1203 = vweird.f32 %v1196
        %vm1204 = vweird.f32 %v1197
        %vm1205 = vmor %vm1203, %vm1204
        %v1206 = vsel %vm1205, %v1197, %v1202
        %v1207 = vmul.f32 %v1191, %v1206
        %v1208 = vperm.slane %v1177, 0
        %v1209 = vmul.f32 %v1207, %v1208
        %v1210 = vperm.slane %v1178, 0
        %v1211 = vadd.f32 %v1209, %v1210
        %v1212 = vpack.c.bf16 %v1211, %v1211
        %v1213 = vld [vmem:[#allocation9] sm:$0xff]
        %v1214 = vld [vmem:[#allocation9 + $0x8] sm:$0xf]
        %v1215 = vld [vmem:[#allocation9 + $0xc] sm:$0xff]
        %v1216 = vld [vmem:[#allocation9 + $0x14] sm:$0xf]
        %v1217 = vld [vmem:[#allocation9 + $0x18] sm:$0xff]
        %v1218 = vld [vmem:[#allocation9 + $0x20] sm:$0xf]
        %v1219 = vld [vmem:[#allocation9 + $0x24] sm:$0xff]
        %v1220 = vld [vmem:[#allocation9 + $0x2c] sm:$0xf]
        %v1221 = vld [vmem:[#allocation9 + $0x30] sm:$0xff]
        %v1222 = vld [vmem:[#allocation9 + $0x38] sm:$0xf]
        %v1223 = vld [vmem:[#allocation9 + $0x3c] sm:$0xff]
        %v1224 = vld [vmem:[#allocation9 + $0x44] sm:$0xf]
        %v1225 = vld [vmem:[#allocation9 + $0x48] sm:$0xff]
        %v1226 = vld [vmem:[#allocation9 + $0x50] sm:$0xf]
        %v1227 = vld [vmem:[#allocation9 + $0x54] sm:$0xff]
        %v1228 = vld [vmem:[#allocation9 + $0x5c] sm:$0xf]
        %v1229 = vld [vmem:[#allocation9 + $0x60] sm:$0xff]
        %v1230 = vld [vmem:[#allocation9 + $0x68] sm:$0xf]
        %v1231 = vld [vmem:[#allocation9 + $0x6c] sm:$0xff]
        %v1232 = vld [vmem:[#allocation9 + $0x74] sm:$0xf]
        %v1233 = vld [vmem:[#allocation9 + $0x78] sm:$0xff]
        %v1234 = vld [vmem:[#allocation9 + $0x80] sm:$0xf]
        %v1235 = vld [vmem:[#allocation9 + $0x84] sm:$0xff]
        %v1236 = vld [vmem:[#allocation9 + $0x8c] sm:$0xf]
        %v1237 = vld [vmem:[#allocation9 + $0x90] sm:$0xff]
        %v1238 = vld [vmem:[#allocation9 + $0x98] sm:$0xf]
        %v1239 = vld [vmem:[#allocation9 + $0x9c] sm:$0xff]
        %v1240 = vld [vmem:[#allocation9 + $0xa4] sm:$0xf]
        %v1241 = vld [vmem:[#allocation9 + $0xa8] sm:$0xff]
        %v1242 = vld [vmem:[#allocation9 + $0xb0] sm:$0xf]
        %v1243 = vld [vmem:[#allocation9 + $0xb4] sm:$0xff]
        %v1244 = vld [vmem:[#allocation9 + $0xbc] sm:$0xf]
        %v1245 = vld [vmem:[#allocation11] sm:$0x7]
        %v1247 = vperm.slane %v1245, 0
        %v1248 = vperm.slane %v1245, 1
        %v1249 = vperm.slane %v1245, 2
        %v1285 = vunpack.c.l.b16 %v1213
        %v1286 = vunpack.c.h.b16 %v1213
        %v1287 = vunpack.c.l.b16 %v1214
        %v1288 = vunpack.c.l.b16 %v1215
        %v1289 = vunpack.c.h.b16 %v1215
        %v1290 = vunpack.c.l.b16 %v1216
        %v1291 = vunpack.c.l.b16 %v1217
        %v1292 = vunpack.c.h.b16 %v1217
        %v1293 = vunpack.c.l.b16 %v1218
        %v1294 = vunpack.c.l.b16 %v1219
        %v1295 = vunpack.c.h.b16 %v1219
        %v1296 = vunpack.c.l.b16 %v1220
        %v1297 = vunpack.c.l.b16 %v1221
        %v1298 = vunpack.c.h.b16 %v1221
        %v1299 = vunpack.c.l.b16 %v1222
        %v1300 = vunpack.c.l.b16 %v1223
        %v1301 = vunpack.c.h.b16 %v1223
        %v1302 = vunpack.c.l.b16 %v1224
        %v1303 = vunpack.c.l.b16 %v1225
        %v1304 = vunpack.c.h.b16 %v1225
        %v1305 = vunpack.c.l.b16 %v1226
        %v1306 = vunpack.c.l.b16 %v1227
        %v1307 = vunpack.c.h.b16 %v1227
        %v1308 = vunpack.c.l.b16 %v1228
        %v1309 = vunpack.c.l.b16 %v1229
        %v1310 = vunpack.c.h.b16 %v1229
        %v1311 = vunpack.c.l.b16 %v1230
        %v1312 = vunpack.c.l.b16 %v1231
        %v1313 = vunpack.c.h.b16 %v1231
        %v1314 = vunpack.c.l.b16 %v1232
        %v1315 = vunpack.c.l.b16 %v1233
        %v1316 = vunpack.c.h.b16 %v1233
        %v1317 = vunpack.c.l.b16 %v1234
        %v1318 = vunpack.c.l.b16 %v1235
        %v1319 = vunpack.c.h.b16 %v1235
        %v1320 = vunpack.c.l.b16 %v1236
        %v1321 = vunpack.c.l.b16 %v1237
        %v1322 = vunpack.c.h.b16 %v1237
        %v1323 = vunpack.c.l.b16 %v1238
        %v1324 = vunpack.c.l.b16 %v1239
        %v1325 = vunpack.c.h.b16 %v1239
        %v1326 = vunpack.c.l.b16 %v1240
        %v1327 = vunpack.c.l.b16 %v1241
        %v1328 = vunpack.c.h.b16 %v1241
        %v1329 = vunpack.c.l.b16 %v1242
        %v1330 = vunpack.c.l.b16 %v1243
        %v1331 = vunpack.c.h.b16 %v1243
        %v1332 = vunpack.c.l.b16 %v1244
        %v1333 = vpack.c.b16 %v1288, %v1285
        %v1334 = vpack.c.b16 %v1289, %v1286
        %v1335 = vpack.c.b16 %v1290, %v1287
        %v1336 = vpack.c.b16 %v1294, %v1291
        %v1337 = vpack.c.b16 %v1295, %v1292
        %v1338 = vpack.c.b16 %v1296, %v1293
        %v1339 = vpack.c.b16 %v1300, %v1297
        %v1340 = vpack.c.b16 %v1301, %v1298
        %v1341 = vpack.c.b16 %v1302, %v1299
        %v1342 = vpack.c.b16 %v1306, %v1303
        %v1343 = vpack.c.b16 %v1307, %v1304
        %v1344 = vpack.c.b16 %v1308, %v1305
        %v1345 = vpack.c.b16 %v1312, %v1309
        %v1346 = vpack.c.b16 %v1313, %v1310
        %v1347 = vpack.c.b16 %v1314, %v1311
        %v1348 = vpack.c.b16 %v1318, %v1315
        %v1349 = vpack.c.b16 %v1319, %v1316
        %v1350 = vpack.c.b16 %v1320, %v1317
        %v1351 = vpack.c.b16 %v1324, %v1321
        %v1352 = vpack.c.b16 %v1325, %v1322
        %v1353 = vpack.c.b16 %v1326, %v1323
        %v1354 = vpack.c.b16 %v1330, %v1327
        %v1355 = vpack.c.b16 %v1331, %v1328
        %v1356 = vpack.c.b16 %v1332, %v1329
        %1381 = vmatpush.bf16.msra.mxu0 %v1354
        %1382 = vmatpush.bf16.msra.mxu0 %v1351
        %1383 = vmatpush.bf16.msra.mxu0 %v1348
        %1384 = vmatpush.bf16.msra.mxu0 %v1345
        %1385 = vmatpush.bf16.msra.mxu0 %v1342
        %1386 = vmatpush.bf16.msra.mxu0 %v1339
        %1387 = vmatpush.bf16.msra.mxu0 %v1336
        %1388 = vmatpush.bf16.msra.mxu0 %v1333
        %1389 = vmatmul.bf16.gmra.mxu0 %v1212
        %v1390 = vpop.f32.mrf.mxu0
        %v1391 = vadd.f32 %v1247, %v1390
        %v1392 = vpop.f32.mrf.mxu0
        %1393 = vdwg.mxu0
        %1394 = vmatpush.bf16.msra.mxu0 %v1355
        %1395 = vmatpush.bf16.msra.mxu0 %v1352
        %1396 = vmatpush.bf16.msra.mxu0 %v1349
        %1397 = vmatpush.bf16.msra.mxu0 %v1346
        %1398 = vmatpush.bf16.msra.mxu0 %v1343
        %1399 = vmatpush.bf16.msra.mxu0 %v1340
        %1400 = vmatpush.bf16.msra.mxu0 %v1337
        %1401 = vmatpush.bf16.msra.mxu0 %v1334
        %1402 = vmatmul.bf16.gmra.mxu0 %v1212
        %v1403 = vpop.f32.mrf.mxu0
        %v1404 = vadd.f32 %v1248, %v1403
        %v1405 = vpop.f32.mrf.mxu0
        %1406 = vdwg.mxu0
        %1407 = vmatpush.bf16.msra.mxu0 %v1356
        %1408 = vmatpush.bf16.msra.mxu0 %v1353
        %1409 = vmatpush.bf16.msra.mxu0 %v1350
        %1410 = vmatpush.bf16.msra.mxu0 %v1347
        %1411 = vmatpush.bf16.msra.mxu0 %v1344
        %1412 = vmatpush.bf16.msra.mxu0 %v1341
        %1413 = vmatpush.bf16.msra.mxu0 %v1338
        %1414 = vmatpush.bf16.msra.mxu0 %v1335
        %1415 = vmatmul.bf16.gmra.mxu0 %v1212
        %v1416 = vpop.f32.mrf.mxu0
        %v1417 = vadd.f32 %v1249, %v1416
        %v1418 = vpop.f32.mrf.mxu0
        %1419 = vdwg.mxu0
        %vm1420 = vcmask 261120
        %v1422 = vsel %vm1420, %v1391, 0
        %v1425 = vsel %vm1420, %v1404, 0
        %1427 = vmatpush.xpose.msra.mxu0 0.0
        %1428 = vmatpush.xpose.msra.mxu0 0.0
        %1429 = vmatpush.xpose.msra.mxu0 0.0
        %1430 = vmatpush.xpose.msra.mxu0 0.0
        %1431 = vmatpush.xpose.msra.mxu0 0.0
        %1432 = vmatpush.xpose.msra.mxu0 0.0
        %1433 = vmatpush.xpose.msra.mxu0 0.0
        %1434 = vmatpush.xpose.msra.mxu0 0.0
        %1435 = vmatpush.xpose.msra.mxu0 0.0
        %1436 = vmatpush.xpose.msra.mxu0 0.0
        %1437 = vmatpush.xpose.msra.mxu0 0.0
        %1438 = vmatpush.xpose.msra.mxu0 0.0
        %1439 = vmatpush.xpose.msra.mxu0 0.0
        %1440 = vmatpush.xpose.msra.mxu0 0.0
        %1441 = vmatpush.xpose.msra.mxu0 0.0
        %1442 = vmatpush.xpose.msra.mxu0 %v1425
        %1443 = vmatmul.f32.gmra.mxu0 %v1422
        %v1444 = vpop.f32.mrf.mxu0
        %v1445 = vadd.f32 0.0, %v1444
        %1446 = vdwg.mxu0
        %vm1447 = vcmask 64512
        %v1448 = vsel %vm1447, %v1445, -inf
        %1449 = vmax.xlane.f32.xlu0 %v1448
        %v1450 = vpop.xlane.xlu0 %1449
        %v1451 = vsub.f32 %v1445, %v1450
        %v1452 = vmul.f32 %v1451, 1.442695
        %v1453 = vpow.pop %v1452
        %v1454 = vsel %vm1447, %v1453, 0.0
        %1455 = vadd.xlane.f32.xlu0 %v1454
        %v1456 = vpop.xlane.xlu0 %1455
        %v1457 = vrcp.pop %v1456
        %v1458 = vmul.f32 %v1453, %v1457
        %v1460 = vsel %vm1447, %v1458, 0
        %1462 = vmatpush.msra.mxu0 0.0
        %1463 = vmatpush.msra.mxu0 0.0
        %1464 = vmatpush.msra.mxu0 0.0
        %1465 = vmatpush.msra.mxu0 0.0
        %1466 = vmatpush.msra.mxu0 0.0
        %1467 = vmatpush.msra.mxu0 0.0
        %1468 = vmatpush.msra.mxu0 0.0
        %1469 = vmatpush.msra.mxu0 0.0
        %1470 = vmatpush.msra.mxu0 0.0
        %1471 = vmatpush.msra.mxu0 0.0
        %1472 = vmatpush.msra.mxu0 0.0
        %1473 = vmatpush.msra.mxu0 0.0
        %1474 = vmatpush.msra.mxu0 0.0
        %1475 = vmatpush.msra.mxu0 0.0
        %1476 = vmatpush.msra.mxu0 0.0
        %1477 = vmatpush.msra.mxu0 %v1417
        %1478 = vmatmul.f32.gmra.mxu0 %v1460
        %v1479 = vpop.f32.mrf.mxu0
        %v1480 = vadd.f32 0.0, %v1479
        %1481 = vdwg.mxu0
        %1482 = vst.msk [vmem:[#allocation2] sm:$0xff] %vm1420, %v1480
        %1483 = vrot.lane.b32.xlu0 %v1391, 96
        %v1484 = vpop.permute.xlu0 %1483
        %1485 = vrot.lane.b32.xlu0 %v1404, 96
        %v1486 = vpop.permute.xlu0 %1485
        %v1487 = vsel %vm1420, %v1484, 0
        %v1489 = vsel %vm1420, %v1486, 0
        %1491 = vmatpush.xpose.msra.mxu0 0.0
        %1492 = vmatpush.xpose.msra.mxu0 0.0
        %1493 = vmatpush.xpose.msra.mxu0 0.0
        %1494 = vmatpush.xpose.msra.mxu0 0.0
        %1495 = vmatpush.xpose.msra.mxu0 0.0
        %1496 = vmatpush.xpose.msra.mxu0 0.0
        %1497 = vmatpush.xpose.msra.mxu0 0.0
        %1498 = vmatpush.xpose.msra.mxu0 0.0
        %1499 = vmatpush.xpose.msra.mxu0 0.0
        %1500 = vmatpush.xpose.msra.mxu0 0.0
        %1501 = vmatpush.xpose.msra.mxu0 0.0
        %1502 = vmatpush.xpose.msra.mxu0 0.0
        %1503 = vmatpush.xpose.msra.mxu0 0.0
        %1504 = vmatpush.xpose.msra.mxu0 0.0
        %1505 = vmatpush.xpose.msra.mxu0 0.0
        %1506 = vmatpush.xpose.msra.mxu0 %v1489
        %1507 = vmatmul.f32.gmra.mxu0 %v1487
        %v1508 = vpop.f32.mrf.mxu0
        %v1509 = vadd.f32 0.0, %v1508
        %1510 = vdwg.mxu0
        %v1511 = vsel %vm1447, %v1509, -inf
        %1512 = vmax.xlane.f32.xlu0 %v1511
        %v1513 = vpop.xlane.xlu0 %1512
        %v1514 = vsub.f32 %v1509, %v1513
        %v1515 = vmul.f32 %v1514, 1.442695
        %v1516 = vpow.pop %v1515
        %v1517 = vsel %vm1447, %v1516, 0.0
        %1518 = vadd.xlane.f32.xlu0 %v1517
        %v1519 = vpop.xlane.xlu0 %1518
        %v1520 = vrcp.pop %v1519
        %v1521 = vmul.f32 %v1516, %v1520
        %1523 = vrot.lane.b32.xlu0 %v1417, 96
        %v1524 = vpop.permute.xlu0 %1523
        %v1527 = vsel %vm1447, %v1521, 0
        %1529 = vmatpush.msra.mxu0 0.0
        %1530 = vmatpush.msra.mxu0 0.0
        %1531 = vmatpush.msra.mxu0 0.0
        %1532 = vmatpush.msra.mxu0 0.0
        %1533 = vmatpush.msra.mxu0 0.0
        %1534 = vmatpush.msra.mxu0 0.0
        %1535 = vmatpush.msra.mxu0 0.0
        %1536 = vmatpush.msra.mxu0 0.0
        %1537 = vmatpush.msra.mxu0 0.0
        %1538 = vmatpush.msra.mxu0 0.0
        %1539 = vmatpush.msra.mxu0 0.0
        %1540 = vmatpush.msra.mxu0 0.0
        %1541 = vmatpush.msra.mxu0 0.0
        %1542 = vmatpush.msra.mxu0 0.0
        %1543 = vmatpush.msra.mxu0 0.0
        %1544 = vmatpush.msra.mxu0 %v1524
        %1545 = vmatmul.f32.gmra.mxu0 %v1527
        %v1546 = vpop.f32.mrf.mxu0
        %v1547 = vadd.f32 0.0, %v1546
        %1548 = vdwg.mxu0
        %1550 = vrot.lane.b32.xlu0 %v1547, 32
        %v1551 = vpop.permute.xlu0 %1550
        %vm1553 = vcmask 523520
        %1554 = vst.msk [vmem:[#allocation2] sm:$0xff] %vm1553, %v1551
        %1555 = vrot.lane.b32.xlu0 %v1391, 64
        %v1556 = vpop.permute.xlu0 %1555
        %1557 = vrot.lane.b32.xlu0 %v1404, 64
        %v1558 = vpop.permute.xlu0 %1557
        %v1559 = vsel %vm1420, %v1556, 0
        %v1561 = vsel %vm1420, %v1558, 0
        %1563 = vmatpush.xpose.msra.mxu0 0.0
        %1564 = vmatpush.xpose.msra.mxu0 0.0
        %1565 = vmatpush.xpose.msra.mxu0 0.0
        %1566 = vmatpush.xpose.msra.mxu0 0.0
        %1567 = vmatpush.xpose.msra.mxu0 0.0
        %1568 = vmatpush.xpose.msra.mxu0 0.0
        %1569 = vmatpush.xpose.msra.mxu0 0.0
        %1570 = vmatpush.xpose.msra.mxu0 0.0
        %1571 = vmatpush.xpose.msra.mxu0 0.0
        %1572 = vmatpush.xpose.msra.mxu0 0.0
        %1573 = vmatpush.xpose.msra.mxu0 0.0
        %1574 = vmatpush.xpose.msra.mxu0 0.0
        %1575 = vmatpush.xpose.msra.mxu0 0.0
        %1576 = vmatpush.xpose.msra.mxu0 0.0
        %1577 = vmatpush.xpose.msra.mxu0 0.0
        %1578 = vmatpush.xpose.msra.mxu0 %v1561
        %1579 = vmatmul.f32.gmra.mxu0 %v1559
        %v1580 = vpop.f32.mrf.mxu0
        %v1581 = vadd.f32 0.0, %v1580
        %1582 = vdwg.mxu0
        %v1583 = vsel %vm1447, %v1581, -inf
        %1584 = vmax.xlane.f32.xlu0 %v1583
        %v1585 = vpop.xlane.xlu0 %1584
        %v1586 = vsub.f32 %v1581, %v1585
        %v1587 = vmul.f32 %v1586, 1.442695
        %v1588 = vpow.pop %v1587
        %v1589 = vsel %vm1447, %v1588, 0.0
        %1590 = vadd.xlane.f32.xlu0 %v1589
        %v1591 = vpop.xlane.xlu0 %1590
        %v1592 = vrcp.pop %v1591
        %v1593 = vmul.f32 %v1588, %v1592
        %1594 = vrot.lane.b32.xlu0 %v1417, 64
        %v1595 = vpop.permute.xlu0 %1594
        %v1598 = vsel %vm1447, %v1593, 0
        %1600 = vmatpush.msra.mxu0 0.0
        %1601 = vmatpush.msra.mxu0 0.0
        %1602 = vmatpush.msra.mxu0 0.0
        %1603 = vmatpush.msra.mxu0 0.0
        %1604 = vmatpush.msra.mxu0 0.0
        %1605 = vmatpush.msra.mxu0 0.0
        %1606 = vmatpush.msra.mxu0 0.0
        %1607 = vmatpush.msra.mxu0 0.0
        %1608 = vmatpush.msra.mxu0 0.0
        %1609 = vmatpush.msra.mxu0 0.0
        %1610 = vmatpush.msra.mxu0 0.0
        %1611 = vmatpush.msra.mxu0 0.0
        %1612 = vmatpush.msra.mxu0 0.0
        %1613 = vmatpush.msra.mxu0 0.0
        %1614 = vmatpush.msra.mxu0 0.0
        %1615 = vmatpush.msra.mxu0 %v1595
        %1616 = vmatmul.f32.gmra.mxu0 %v1598
        %v1617 = vpop.f32.mrf.mxu0
        %v1618 = vadd.f32 0.0, %v1617
        %1619 = vdwg.mxu0
        %1621 = vrot.lane.b32.xlu0 %v1618, 64
        %v1622 = vpop.permute.xlu0 %1621
        %vm1624 = vcmask 785920
        %1625 = vst.msk [vmem:[#allocation2] sm:$0xff] %vm1624, %v1622
        %1626 = vrot.lane.b32.xlu0 %v1391, 32
        %v1627 = vpop.permute.xlu0 %1626
        %1628 = vrot.lane.b32.xlu0 %v1404, 32
        %v1629 = vpop.permute.xlu0 %1628
        %v1630 = vsel %vm1420, %v1627, 0
        %v1632 = vsel %vm1420, %v1629, 0
        %1634 = vmatpush.xpose.msra.mxu0 0.0
        %1635 = vmatpush.xpose.msra.mxu0 0.0
        %1636 = vmatpush.xpose.msra.mxu0 0.0
        %1637 = vmatpush.xpose.msra.mxu0 0.0
        %1638 = vmatpush.xpose.msra.mxu0 0.0
        %1639 = vmatpush.xpose.msra.mxu0 0.0
        %1640 = vmatpush.xpose.msra.mxu0 0.0
        %1641 = vmatpush.xpose.msra.mxu0 0.0
        %1642 = vmatpush.xpose.msra.mxu0 0.0
        %1643 = vmatpush.xpose.msra.mxu0 0.0
        %1644 = vmatpush.xpose.msra.mxu0 0.0
        %1645 = vmatpush.xpose.msra.mxu0 0.0
        %1646 = vmatpush.xpose.msra.mxu0 0.0
        %1647 = vmatpush.xpose.msra.mxu0 0.0
        %1648 = vmatpush.xpose.msra.mxu0 0.0
        %1649 = vmatpush.xpose.msra.mxu0 %v1632
        %1650 = vmatmul.f32.gmra.mxu0 %v1630
        %v1651 = vpop.f32.mrf.mxu0
        %v1652 = vadd.f32 0.0, %v1651
        %1653 = vdwg.mxu0
        %v1654 = vsel %vm1447, %v1652, -inf
        %1655 = vmax.xlane.f32.xlu0 %v1654
        %v1656 = vpop.xlane.xlu0 %1655
        %v1657 = vsub.f32 %v1652, %v1656
        %v1658 = vmul.f32 %v1657, 1.442695
        %v1659 = vpow.pop %v1658
        %v1660 = vsel %vm1447, %v1659, 0.0
        %1661 = vadd.xlane.f32.xlu0 %v1660
        %v1662 = vpop.xlane.xlu0 %1661
        %v1663 = vrcp.pop %v1662
        %v1664 = vmul.f32 %v1659, %v1663
        %1665 = vrot.lane.b32.xlu0 %v1417, 32
        %v1666 = vpop.permute.xlu0 %1665
        %v1669 = vsel %vm1447, %v1664, 0
        %1671 = vmatpush.msra.mxu0 0.0
        %1672 = vmatpush.msra.mxu0 0.0
        %1673 = vmatpush.msra.mxu0 0.0
        %1674 = vmatpush.msra.mxu0 0.0
        %1675 = vmatpush.msra.mxu0 0.0
        %1676 = vmatpush.msra.mxu0 0.0
        %1677 = vmatpush.msra.mxu0 0.0
        %1678 = vmatpush.msra.mxu0 0.0
        %1679 = vmatpush.msra.mxu0 0.0
        %1680 = vmatpush.msra.mxu0 0.0
        %1681 = vmatpush.msra.mxu0 0.0
        %1682 = vmatpush.msra.mxu0 0.0
        %1683 = vmatpush.msra.mxu0 0.0
        %1684 = vmatpush.msra.mxu0 0.0
        %1685 = vmatpush.msra.mxu0 0.0
        %1686 = vmatpush.msra.mxu0 %v1666
        %1687 = vmatmul.f32.gmra.mxu0 %v1669
        %v1688 = vpop.f32.mrf.mxu0
        %v1689 = vadd.f32 0.0, %v1688
        %1690 = vdwg.mxu0
        %1692 = vrot.lane.b32.xlu0 %v1689, 96
        %v1693 = vpop.permute.xlu0 %1692
        %vm1695 = vcmask 1048320
        %1696 = vst.msk [vmem:[#allocation2] sm:$0xff] %vm1695, %v1693
        %v1697 = vld [vmem:[#allocation2] sm:$0xff]
        %v1698 = vpack.c.bf16 %v1697, %v1697
        %v1699 = vld [vmem:[#allocation12] sm:$0xf]
        %v1700 = vld [vmem:[#allocation12 + $0x4] sm:$0xf]
        %v1701 = vld [vmem:[#allocation12 + $0x8] sm:$0xf]
        %v1702 = vld [vmem:[#allocation12 + $0xc] sm:$0xf]
        %v1703 = vld [vmem:[#allocation12 + $0x10] sm:$0xf]
        %v1704 = vld [vmem:[#allocation12 + $0x14] sm:$0xf]
        %v1705 = vld [vmem:[#allocation12 + $0x18] sm:$0xf]
        %v1706 = vld [vmem:[#allocation12 + $0x1c] sm:$0xf]
        %v1707 = vld [vmem:[#allocation12 + $0x20] sm:$0xf]
        %v1708 = vld [vmem:[#allocation12 + $0x24] sm:$0xf]
        %v1709 = vld [vmem:[#allocation12 + $0x28] sm:$0xf]
        %v1710 = vld [vmem:[#allocation12 + $0x2c] sm:$0xf]
        %v1711 = vld [vmem:[#allocation12 + $0x30] sm:$0xf]
        %v1712 = vld [vmem:[#allocation12 + $0x34] sm:$0xf]
        %v1713 = vld [vmem:[#allocation12 + $0x38] sm:$0xf]
        %v1714 = vld [vmem:[#allocation12 + $0x3c] sm:$0xf]
        %v1715 = vld [vmem:[#allocation14] sm:$0x1]
        %v1717 = vperm.slane %v1715, 0
        %v1735 = vunpack.c.l.b16 %v1699
        %v1736 = vunpack.c.l.b16 %v1700
        %v1737 = vunpack.c.l.b16 %v1701
        %v1738 = vunpack.c.l.b16 %v1702
        %v1739 = vunpack.c.l.b16 %v1703
        %v1740 = vunpack.c.l.b16 %v1704
        %v1741 = vunpack.c.l.b16 %v1705
        %v1742 = vunpack.c.l.b16 %v1706
        %v1743 = vunpack.c.l.b16 %v1707
        %v1744 = vunpack.c.l.b16 %v1708
        %v1745 = vunpack.c.l.b16 %v1709
        %v1746 = vunpack.c.l.b16 %v1710
        %v1747 = vunpack.c.l.b16 %v1711
        %v1748 = vunpack.c.l.b16 %v1712
        %v1749 = vunpack.c.l.b16 %v1713
        %v1750 = vunpack.c.l.b16 %v1714
        %v1751 = vpack.c.b16 %v1736, %v1735
        %v1752 = vpack.c.b16 %v1738, %v1737
        %v1753 = vpack.c.b16 %v1740, %v1739
        %v1754 = vpack.c.b16 %v1742, %v1741
        %v1755 = vpack.c.b16 %v1744, %v1743
        %v1756 = vpack.c.b16 %v1746, %v1745
        %v1757 = vpack.c.b16 %v1748, %v1747
        %v1758 = vpack.c.b16 %v1750, %v1749
        %1767 = vmatpush.bf16.msra.mxu0 %v1758
        %1768 = vmatpush.bf16.msra.mxu0 %v1757
        %1769 = vmatpush.bf16.msra.mxu0 %v1756
        %1770 = vmatpush.bf16.msra.mxu0 %v1755
        %1771 = vmatpush.bf16.msra.mxu0 %v1754
        %1772 = vmatpush.bf16.msra.mxu0 %v1753
        %1773 = vmatpush.bf16.msra.mxu0 %v1752
        %1774 = vmatpush.bf16.msra.mxu0 %v1751
        %1775 = vmatmul.bf16.gmra.mxu0 %v1698
        %v1776 = vpop.f32.mrf.mxu0
        %v1777 = vadd.f32 %v1717, %v1776
        %v1778 = vpop.f32.mrf.mxu0
        %1779 = vdwg.mxu0
        %v1780 = vadd.f32 %v1176, %v1777
        %1781 = vadd.xlane.f32.xlu0 %v1780
        %v1782 = vpop.xlane.xlu0 %1781
        %v1783 = vmul.f32 %v1782, %v1189
        %v1784 = vsub.f32 %v1780, %v1783
        %v1785 = vmul.f32 %v1784, %v1784
        %1786 = vadd.xlane.f32.xlu0 %v1785
        %v1787 = vpop.xlane.xlu0 %1786
        %v1788 = vmul.f32 %v1787, %v1189
        %v1789 = vadd.f32 %v1788, 1e-05
        %v1790 = vrsqrt.pop %v1789
        %v1791 = vmul.f32 %v1790, %v1789
        %v1792 = vmul.f32 %v1791, %v1790
        %v1793 = vmul.f32 0.5, %v1792
        %v1794 = vsub.f32 1.5, %v1793
        %v1795 = vmul.f32 %v1790, %v1794
        %vm1796 = vweird.f32 %v1789
        %vm1797 = vweird.f32 %v1790
        %vm1798 = vmor %vm1796, %vm1797
        %v1799 = vsel %vm1798, %v1790, %v1795
        %v1800 = vmul.f32 %v1784, %v1799
        %v1801 = vperm.slane %v1179, 0
        %v1802 = vmul.f32 %v1800, %v1801
        %v1803 = vperm.slane %v1180, 0
        %v1804 = vadd.f32 %v1802, %v1803
        %v1805 = vpack.c.bf16 %v1804, %v1804
        %v1806 = vld [vmem:[#allocation15] sm:$0xff]
        %v1807 = vld [vmem:[#allocation15 + $0x8] sm:$0xff]
        %v1808 = vld [vmem:[#allocation15 + $0x10] sm:$0xff]
        %v1809 = vld [vmem:[#allocation15 + $0x18] sm:$0xff]
        %v1810 = vld [vmem:[#allocation15 + $0x20] sm:$0xff]
        %v1811 = vld [vmem:[#allocation15 + $0x28] sm:$0xff]
        %v1812 = vld [vmem:[#allocation15 + $0x30] sm:$0xff]
        %v1813 = vld [vmem:[#allocation15 + $0x38] sm:$0xff]
        %v1814 = vld [vmem:[#allocation15 + $0x40] sm:$0xff]
        %v1815 = vld [vmem:[#allocation15 + $0x48] sm:$0xff]
        %v1816 = vld [vmem:[#allocation15 + $0x50] sm:$0xff]
        %v1817 = vld [vmem:[#allocation15 + $0x58] sm:$0xff]
        %v1818 = vld [vmem:[#allocation15 + $0x60] sm:$0xff]
        %v1819 = vld [vmem:[#allocation15 + $0x68] sm:$0xff]
        %v1820 = vld [vmem:[#allocation15 + $0x70] sm:$0xff]
        %v1821 = vld [vmem:[#allocation15 + $0x78] sm:$0xff]
        %v1822 = vld [vmem:[#allocation15 + $0x80] sm:$0xff]
        %v1823 = vld [vmem:[#allocation15 + $0x88] sm:$0xff]
        %v1824 = vld [vmem:[#allocation15 + $0x90] sm:$0xff]
        %v1825 = vld [vmem:[#allocation15 + $0x98] sm:$0xff]
        %v1826 = vld [vmem:[#allocation15 + $0xa0] sm:$0xff]
        %v1827 = vld [vmem:[#allocation15 + $0xa8] sm:$0xff]
        %v1828 = vld [vmem:[#allocation15 + $0xb0] sm:$0xff]
        %v1829 = vld [vmem:[#allocation15 + $0xb8] sm:$0xff]
        %v1830 = vld [vmem:[#allocation15 + $0xc0] sm:$0xff]
        %v1831 = vld [vmem:[#allocation15 + $0xc8] sm:$0xff]
        %v1832 = vld [vmem:[#allocation15 + $0xd0] sm:$0xff]
        %v1833 = vld [vmem:[#allocation15 + $0xd8] sm:$0xff]
        %v1834 = vld [vmem:[#allocation15 + $0xe0] sm:$0xff]
        %v1835 = vld [vmem:[#allocation15 + $0xe8] sm:$0xff]
        %v1836 = vld [vmem:[#allocation15 + $0xf0] sm:$0xff]
        %v1837 = vld [vmem:[#allocation15 + $0xf8] sm:$0xff]
        %v1838 = vld [vmem:[%s11] sm:$0xf]
        %v1840 = vperm.slane %v1838, 0
        %v1841 = vperm.slane %v1838, 1
        %v1842 = vperm.slane %v1838, 2
        %v1843 = vperm.slane %v1838, 3
        %v1880 = vunpack.c.l.b16 %v1806
        %v1881 = vunpack.c.h.b16 %v1806
        %v1882 = vunpack.c.l.b16 %v1807
        %v1883 = vunpack.c.h.b16 %v1807
        %v1884 = vunpack.c.l.b16 %v1808
        %v1885 = vunpack.c.h.b16 %v1808
        %v1886 = vunpack.c.l.b16 %v1809
        %v1887 = vunpack.c.h.b16 %v1809
        %v1888 = vunpack.c.l.b16 %v1810
        %v1889 = vunpack.c.h.b16 %v1810
        %v1890 = vunpack.c.l.b16 %v1811
        %v1891 = vunpack.c.h.b16 %v1811
        %v1892 = vunpack.c.l.b16 %v1812
        %v1893 = vunpack.c.h.b16 %v1812
        %v1894 = vunpack.c.l.b16 %v1813
        %v1895 = vunpack.c.h.b16 %v1813
        %v1896 = vunpack.c.l.b16 %v1814
        %v1897 = vunpack.c.h.b16 %v1814
        %v1898 = vunpack.c.l.b16 %v1815
        %v1899 = vunpack.c.h.b16 %v1815
        %v1900 = vunpack.c.l.b16 %v1816
        %v1901 = vunpack.c.h.b16 %v1816
        %v1902 = vunpack.c.l.b16 %v1817
        %v1903 = vunpack.c.h.b16 %v1817
        %v1904 = vunpack.c.l.b16 %v1818
        %v1905 = vunpack.c.h.b16 %v1818
        %v1906 = vunpack.c.l.b16 %v1819
        %v1907 = vunpack.c.h.b16 %v1819
        %v1908 = vunpack.c.l.b16 %v1820
        %v1909 = vunpack.c.h.b16 %v1820
        %v1910 = vunpack.c.l.b16 %v1821
        %v1911 = vunpack.c.h.b16 %v1821
        %v1912 = vunpack.c.l.b16 %v1822
        %v1913 = vunpack.c.h.b16 %v1822
        %v1914 = vunpack.c.l.b16 %v1823
        %v1915 = vunpack.c.h.b16 %v1823
        %v1916 = vunpack.c.l.b16 %v1824
        %v1917 = vunpack.c.h.b16 %v1824
        %v1918 = vunpack.c.l.b16 %v1825
        %v1919 = vunpack.c.h.b16 %v1825
        %v1920 = vunpack.c.l.b16 %v1826
        %v1921 = vunpack.c.h.b16 %v1826
        %v1922 = vunpack.c.l.b16 %v1827
        %v1923 = vunpack.c.h.b16 %v1827
        %v1924 = vunpack.c.l.b16 %v1828
        %v1925 = vunpack.c.h.b16 %v1828
        %v1926 = vunpack.c.l.b16 %v1829
        %v1927 = vunpack.c.h.b16 %v1829
        %v1928 = vunpack.c.l.b16 %v1830
        %v1929 = vunpack.c.h.b16 %v1830
        %v1930 = vunpack.c.l.b16 %v1831
        %v1931 = vunpack.c.h.b16 %v1831
        %v1932 = vunpack.c.l.b16 %v1832
        %v1933 = vunpack.c.h.b16 %v1832
        %v1934 = vunpack.c.l.b16 %v1833
        %v1935 = vunpack.c.h.b16 %v1833
        %v1936 = vunpack.c.l.b16 %v1834
        %v1937 = vunpack.c.h.b16 %v1834
        %v1938 = vunpack.c.l.b16 %v1835
        %v1939 = vunpack.c.h.b16 %v1835
        %v1940 = vunpack.c.l.b16 %v1836
        %v1941 = vunpack.c.h.b16 %v1836
        %v1942 = vunpack.c.l.b16 %v1837
        %v1943 = vunpack.c.h.b16 %v1837
        %v1944 = vpack.c.b16 %v1884, %v1880
        %v1945 = vpack.c.b16 %v1885, %v1881
        %v1946 = vpack.c.b16 %v1886, %v1882
        %v1947 = vpack.c.b16 %v1887, %v1883
        %v1948 = vpack.c.b16 %v1892, %v1888
        %v1949 = vpack.c.b16 %v1893, %v1889
        %v1950 = vpack.c.b16 %v1894, %v1890
        %v1951 = vpack.c.b16 %v1895, %v1891
        %v1952 = vpack.c.b16 %v1900, %v1896
        %v1953 = vpack.c.b16 %v1901, %v1897
        %v1954 = vpack.c.b16 %v1902, %v1898
        %v1955 = vpack.c.b16 %v1903, %v1899
        %v1956 = vpack.c.b16 %v1908, %v1904
        %v1957 = vpack.c.b16 %v1909, %v1905
        %v1958 = vpack.c.b16 %v1910, %v1906
        %v1959 = vpack.c.b16 %v1911, %v1907
        %v1960 = vpack.c.b16 %v1916, %v1912
        %v1961 = vpack.c.b16 %v1917, %v1913
        %v1962 = vpack.c.b16 %v1918, %v1914
        %v1963 = vpack.c.b16 %v1919, %v1915
        %v1964 = vpack.c.b16 %v1924, %v1920
        %v1965 = vpack.c.b16 %v1925, %v1921
        %v1966 = vpack.c.b16 %v1926, %v1922
        %v1967 = vpack.c.b16 %v1927, %v1923
        %v1968 = vpack.c.b16 %v1932, %v1928
        %v1969 = vpack.c.b16 %v1933, %v1929
        %v1970 = vpack.c.b16 %v1934, %v1930
        %v1971 = vpack.c.b16 %v1935, %v1931
        %v1972 = vpack.c.b16 %v1940, %v1936
        %v1973 = vpack.c.b16 %v1941, %v1937
        %v1974 = vpack.c.b16 %v1942, %v1938
        %v1975 = vpack.c.b16 %v1943, %v1939
        %2008 = vmatpush.bf16.msra.mxu0 %v1972
        %2009 = vmatpush.bf16.msra.mxu0 %v1968
        %2010 = vmatpush.bf16.msra.mxu0 %v1964
        %2011 = vmatpush.bf16.msra.mxu0 %v1960
        %2012 = vmatpush.bf16.msra.mxu0 %v1956
        %2013 = vmatpush.bf16.msra.mxu0 %v1952
        %2014 = vmatpush.bf16.msra.mxu0 %v1948
        %2015 = vmatpush.bf16.msra.mxu0 %v1944
        %2016 = vmatmul.bf16.gmra.mxu0 %v1805
        %v2017 = vpop.f32.mrf.mxu0
        %v2018 = vadd.f32 %v1840, %v2017
        %v2019 = vpop.f32.mrf.mxu0
        %2020 = vdwg.mxu0
        %2021 = vmatpush.bf16.msra.mxu0 %v1973
        %2022 = vmatpush.bf16.msra.mxu0 %v1969
        %2023 = vmatpush.bf16.msra.mxu0 %v1965
        %2024 = vmatpush.bf16.msra.mxu0 %v1961
        %2025 = vmatpush.bf16.msra.mxu0 %v1957
        %2026 = vmatpush.bf16.msra.mxu0 %v1953
        %2027 = vmatpush.bf16.msra.mxu0 %v1949
        %2028 = vmatpush.bf16.msra.mxu0 %v1945
        %2029 = vmatmul.bf16.gmra.mxu0 %v1805
        %v2030 = vpop.f32.mrf.mxu0
        %v2031 = vadd.f32 %v1841, %v2030
        %v2032 = vpop.f32.mrf.mxu0
        %2033 = vdwg.mxu0
        %2034 = vmatpush.bf16.msra.mxu0 %v1974
        %2035 = vmatpush.bf16.msra.mxu0 %v1970
        %2036 = vmatpush.bf16.msra.mxu0 %v1966
        %2037 = vmatpush.bf16.msra.mxu0 %v1962
        %2038 = vmatpush.bf16.msra.mxu0 %v1958
        %2039 = vmatpush.bf16.msra.mxu0 %v1954
        %2040 = vmatpush.bf16.msra.mxu0 %v1950
        %2041 = vmatpush.bf16.msra.mxu0 %v1946
        %2042 = vmatmul.bf16.gmra.mxu0 %v1805
        %v2043 = vpop.f32.mrf.mxu0
        %v2044 = vadd.f32 %v1842, %v2043
        %v2045 = vpop.f32.mrf.mxu0
        %2046 = vdwg.mxu0
        %2047 = vmatpush.bf16.msra.mxu0 %v1975
        %2048 = vmatpush.bf16.msra.mxu0 %v1971
        %2049 = vmatpush.bf16.msra.mxu0 %v1967
        %2050 = vmatpush.bf16.msra.mxu0 %v1963
        %2051 = vmatpush.bf16.msra.mxu0 %v1959
        %2052 = vmatpush.bf16.msra.mxu0 %v1955
        %2053 = vmatpush.bf16.msra.mxu0 %v1951
        %2054 = vmatpush.bf16.msra.mxu0 %v1947
        %2055 = vmatmul.bf16.gmra.mxu0 %v1805
        %v2056 = vpop.f32.mrf.mxu0
        %v2057 = vadd.f32 %v1843, %v2056
        %v2058 = vpop.f32.mrf.mxu0
        %2059 = vdwg.mxu0
        %v2060 = vmul.f32 %v2018, 0.5
        %v2061 = vmul.f32 %v2031, 0.5
        %v2062 = vmul.f32 %v2044, 0.5
        %v2063 = vmul.f32 %v2057, 0.5
        %v2064 = vmul.f32 %v2018, 0.044715
        %v2065 = vmul.f32 %v2031, 0.044715
        %v2066 = vmul.f32 %v2044, 0.044715
        %v2067 = vmul.f32 %v2057, 0.044715
        %v2068 = vmul.f32 %v2064, %v2018
        %v2069 = vmul.f32 %v2065, %v2031
        %v2070 = vmul.f32 %v2066, %v2044
        %v2071 = vmul.f32 %v2067, %v2057
        %v2072 = vmul.f32 %v2068, %v2018
        %v2073 = vmul.f32 %v2069, %v2031
        %v2074 = vmul.f32 %v2070, %v2044
        %v2075 = vmul.f32 %v2071, %v2057
        %v2076 = vadd.f32 %v2018, %v2072
        %v2077 = vadd.f32 %v2031, %v2073
        %v2078 = vadd.f32 %v2044, %v2074
        %v2079 = vadd.f32 %v2057, %v2075
        %v2080 = vmul.f32 %v2076, 0.7978846
        %v2081 = vmul.f32 %v2077, 0.7978846
        %v2082 = vmul.f32 %v2078, 0.7978846
        %v2083 = vmul.f32 %v2079, 0.7978846
        %v2084 = vtanh.pop %v2080
        %v2085 = vtanh.pop %v2081
        %v2086 = vtanh.pop %v2082
        %v2087 = vtanh.pop %v2083
        %v2088 = vadd.f32 %v2084, 1.0
        %v2089 = vadd.f32 %v2085, 1.0
        %v2090 = vadd.f32 %v2086, 1.0
        %v2091 = vadd.f32 %v2087, 1.0
        %v2092 = vmul.f32 %v2060, %v2088
        %v2093 = vmul.f32 %v2061, %v2089
        %v2094 = vmul.f32 %v2062, %v2090
        %v2095 = vmul.f32 %v2063, %v2091
        %v2096 = vpack.c.bf16 %v2092, %v2092
        %v2097 = vpack.c.bf16 %v2093, %v2093
        %v2098 = vpack.c.bf16 %v2094, %v2094
        %v2099 = vpack.c.bf16 %v2095, %v2095
        %v2100 = vld [vmem:[#allocation17] sm:$0xf]
        %v2101 = vld [vmem:[#allocation17 + $0x4] sm:$0xf]
        %v2102 = vld [vmem:[#allocation17 + $0x8] sm:$0xf]
        %v2103 = vld [vmem:[#allocation17 + $0xc] sm:$0xf]
        %v2104 = vld [vmem:[#allocation17 + $0x10] sm:$0xf]
        %v2105 = vld [vmem:[#allocation17 + $0x14] sm:$0xf]
        %v2106 = vld [vmem:[#allocation17 + $0x18] sm:$0xf]
        %v2107 = vld [vmem:[#allocation17 + $0x1c] sm:$0xf]
        %v2108 = vld [vmem:[#allocation17 + $0x20] sm:$0xf]
        %v2109 = vld [vmem:[#allocation17 + $0x24] sm:$0xf]
        %v2110 = vld [vmem:[#allocation17 + $0x28] sm:$0xf]
        %v2111 = vld [vmem:[#allocation17 + $0x2c] sm:$0xf]
        %v2112 = vld [vmem:[#allocation17 + $0x30] sm:$0xf]
        %v2113 = vld [vmem:[#allocation17 + $0x34] sm:$0xf]
        %v2114 = vld [vmem:[#allocation17 + $0x38] sm:$0xf]
        %v2115 = vld [vmem:[#allocation17 + $0x3c] sm:$0xf]
        %v2116 = vld [vmem:[#allocation17 + $0x40] sm:$0xf]
        %v2117 = vld [vmem:[#allocation17 + $0x44] sm:$0xf]
        %v2118 = vld [vmem:[#allocation17 + $0x48] sm:$0xf]
        %v2119 = vld [vmem:[#allocation17 + $0x4c] sm:$0xf]
        %v2120 = vld [vmem:[#allocation17 + $0x50] sm:$0xf]
        %v2121 = vld [vmem:[#allocation17 + $0x54] sm:$0xf]
        %v2122 = vld [vmem:[#allocation17 + $0x58] sm:$0xf]
        %v2123 = vld [vmem:[#allocation17 + $0x5c] sm:$0xf]
        %v2124 = vld [vmem:[#allocation17 + $0x60] sm:$0xf]
        %v2125 = vld [vmem:[#allocation17 + $0x64] sm:$0xf]
        %v2126 = vld [vmem:[#allocation17 + $0x68] sm:$0xf]
        %v2127 = vld [vmem:[#allocation17 + $0x6c] sm:$0xf]
        %v2128 = vld [vmem:[#allocation17 + $0x70] sm:$0xf]
        %v2129 = vld [vmem:[#allocation17 + $0x74] sm:$0xf]
        %v2130 = vld [vmem:[#allocation17 + $0x78] sm:$0xf]
        %v2131 = vld [vmem:[#allocation17 + $0x7c] sm:$0xf]
        %v2132 = vld [vmem:[#allocation17 + $0x80] sm:$0xf]
        %v2133 = vld [vmem:[#allocation17 + $0x84] sm:$0xf]
        %v2134 = vld [vmem:[#allocation17 + $0x88] sm:$0xf]
        %v2135 = vld [vmem:[#allocation17 + $0x8c] sm:$0xf]
        %v2136 = vld [vmem:[#allocation17 + $0x90] sm:$0xf]
        %v2137 = vld [vmem:[#allocation17 + $0x94] sm:$0xf]
        %v2138 = vld [vmem:[#allocation17 + $0x98] sm:$0xf]
        %v2139 = vld [vmem:[#allocation17 + $0x9c] sm:$0xf]
        %v2140 = vld [vmem:[#allocation17 + $0xa0] sm:$0xf]
        %v2141 = vld [vmem:[#allocation17 + $0xa4] sm:$0xf]
        %v2142 = vld [vmem:[#allocation17 + $0xa8] sm:$0xf]
        %v2143 = vld [vmem:[#allocation17 + $0xac] sm:$0xf]
        %v2144 = vld [vmem:[#allocation17 + $0xb0] sm:$0xf]
        %v2145 = vld [vmem:[#allocation17 + $0xb4] sm:$0xf]
        %v2146 = vld [vmem:[#allocation17 + $0xb8] sm:$0xf]
        %v2147 = vld [vmem:[#allocation17 + $0xbc] sm:$0xf]
        %v2148 = vld [vmem:[#allocation17 + $0xc0] sm:$0xf]
        %v2149 = vld [vmem:[#allocation17 + $0xc4] sm:$0xf]
        %v2150 = vld [vmem:[#allocation17 + $0xc8] sm:$0xf]
        %v2151 = vld [vmem:[#allocation17 + $0xcc] sm:$0xf]
        %v2152 = vld [vmem:[#allocation17 + $0xd0] sm:$0xf]
        %v2153 = vld [vmem:[#allocation17 + $0xd4] sm:$0xf]
        %v2154 = vld [vmem:[#allocation17 + $0xd8] sm:$0xf]
        %v2155 = vld [vmem:[#allocation17 + $0xdc] sm:$0xf]
        %v2156 = vld [vmem:[#allocation17 + $0xe0] sm:$0xf]
        %v2157 = vld [vmem:[#allocation17 + $0xe4] sm:$0xf]
        %v2158 = vld [vmem:[#allocation17 + $0xe8] sm:$0xf]
        %v2159 = vld [vmem:[#allocation17 + $0xec] sm:$0xf]
        %v2160 = vld [vmem:[#allocation17 + $0xf0] sm:$0xf]
        %v2161 = vld [vmem:[#allocation17 + $0xf4] sm:$0xf]
        %v2162 = vld [vmem:[#allocation17 + $0xf8] sm:$0xf]
        %v2163 = vld [vmem:[#allocation17 + $0xfc] sm:$0xf]
        %v2164 = vld [vmem:[%s13] sm:$0x1]
        %v2166 = vperm.slane %v2164, 0
        %v2232 = vunpack.c.l.b16 %v2100
        %v2233 = vunpack.c.l.b16 %v2101
        %v2234 = vunpack.c.l.b16 %v2102
        %v2235 = vunpack.c.l.b16 %v2103
        %v2236 = vunpack.c.l.b16 %v2104
        %v2237 = vunpack.c.l.b16 %v2105
        %v2238 = vunpack.c.l.b16 %v2106
        %v2239 = vunpack.c.l.b16 %v2107
        %v2240 = vunpack.c.l.b16 %v2108
        %v2241 = vunpack.c.l.b16 %v2109
        %v2242 = vunpack.c.l.b16 %v2110
        %v2243 = vunpack.c.l.b16 %v2111
        %v2244 = vunpack.c.l.b16 %v2112
        %v2245 = vunpack.c.l.b16 %v2113
        %v2246 = vunpack.c.l.b16 %v2114
        %v2247 = vunpack.c.l.b16 %v2115
        %v2248 = vunpack.c.l.b16 %v2116
        %v2249 = vunpack.c.l.b16 %v2117
        %v2250 = vunpack.c.l.b16 %v2118
        %v2251 = vunpack.c.l.b16 %v2119
        %v2252 = vunpack.c.l.b16 %v2120
        %v2253 = vunpack.c.l.b16 %v2121
        %v2254 = vunpack.c.l.b16 %v2122
        %v2255 = vunpack.c.l.b16 %v2123
        %v2256 = vunpack.c.l.b16 %v2124
        %v2257 = vunpack.c.l.b16 %v2125
        %v2258 = vunpack.c.l.b16 %v2126
        %v2259 = vunpack.c.l.b16 %v2127
        %v2260 = vunpack.c.l.b16 %v2128
        %v2261 = vunpack.c.l.b16 %v2129
        %v2262 = vunpack.c.l.b16 %v2130
        %v2263 = vunpack.c.l.b16 %v2131
        %v2264 = vunpack.c.l.b16 %v2132
        %v2265 = vunpack.c.l.b16 %v2133
        %v2266 = vunpack.c.l.b16 %v2134
        %v2267 = vunpack.c.l.b16 %v2135
        %v2268 = vunpack.c.l.b16 %v2136
        %v2269 = vunpack.c.l.b16 %v2137
        %v2270 = vunpack.c.l.b16 %v2138
        %v2271 = vunpack.c.l.b16 %v2139
        %v2272 = vunpack.c.l.b16 %v2140
        %v2273 = vunpack.c.l.b16 %v2141
        %v2274 = vunpack.c.l.b16 %v2142
        %v2275 = vunpack.c.l.b16 %v2143
        %v2276 = vunpack.c.l.b16 %v2144
        %v2277 = vunpack.c.l.b16 %v2145
        %v2278 = vunpack.c.l.b16 %v2146
        %v2279 = vunpack.c.l.b16 %v2147
        %v2280 = vunpack.c.l.b16 %v2148
        %v2281 = vunpack.c.l.b16 %v2149
        %v2282 = vunpack.c.l.b16 %v2150
        %v2283 = vunpack.c.l.b16 %v2151
        %v2284 = vunpack.c.l.b16 %v2152
        %v2285 = vunpack.c.l.b16 %v2153
        %v2286 = vunpack.c.l.b16 %v2154
        %v2287 = vunpack.c.l.b16 %v2155
        %v2288 = vunpack.c.l.b16 %v2156
        %v2289 = vunpack.c.l.b16 %v2157
        %v2290 = vunpack.c.l.b16 %v2158
        %v2291 = vunpack.c.l.b16 %v2159
        %v2292 = vunpack.c.l.b16 %v2160
        %v2293 = vunpack.c.l.b16 %v2161
        %v2294 = vunpack.c.l.b16 %v2162
        %v2295 = vunpack.c.l.b16 %v2163
        %v2296 = vpack.c.b16 %v2233, %v2232
        %v2297 = vpack.c.b16 %v2235, %v2234
        %v2298 = vpack.c.b16 %v2237, %v2236
        %v2299 = vpack.c.b16 %v2239, %v2238
        %v2300 = vpack.c.b16 %v2241, %v2240
        %v2301 = vpack.c.b16 %v2243, %v2242
        %v2302 = vpack.c.b16 %v2245, %v2244
        %v2303 = vpack.c.b16 %v2247, %v2246
        %v2304 = vpack.c.b16 %v2249, %v2248
        %v2305 = vpack.c.b16 %v2251, %v2250
        %v2306 = vpack.c.b16 %v2253, %v2252
        %v2307 = vpack.c.b16 %v2255, %v2254
        %v2308 = vpack.c.b16 %v2257, %v2256
        %v2309 = vpack.c.b16 %v2259, %v2258
        %v2310 = vpack.c.b16 %v2261, %v2260
        %v2311 = vpack.c.b16 %v2263, %v2262
        %v2312 = vpack.c.b16 %v2265, %v2264
        %v2313 = vpack.c.b16 %v2267, %v2266
        %v2314 = vpack.c.b16 %v2269, %v2268
        %v2315 = vpack.c.b16 %v2271, %v2270
        %v2316 = vpack.c.b16 %v2273, %v2272
        %v2317 = vpack.c.b16 %v2275, %v2274
        %v2318 = vpack.c.b16 %v2277, %v2276
        %v2319 = vpack.c.b16 %v2279, %v2278
        %v2320 = vpack.c.b16 %v2281, %v2280
        %v2321 = vpack.c.b16 %v2283, %v2282
        %v2322 = vpack.c.b16 %v2285, %v2284
        %v2323 = vpack.c.b16 %v2287, %v2286
        %v2324 = vpack.c.b16 %v2289, %v2288
        %v2325 = vpack.c.b16 %v2291, %v2290
        %v2326 = vpack.c.b16 %v2293, %v2292
        %v2327 = vpack.c.b16 %v2295, %v2294
        %2360 = vmatpush.bf16.msra.mxu0 %v2303
        %2361 = vmatpush.bf16.msra.mxu0 %v2302
        %2362 = vmatpush.bf16.msra.mxu0 %v2301
        %2363 = vmatpush.bf16.msra.mxu0 %v2300
        %2364 = vmatpush.bf16.msra.mxu0 %v2299
        %2365 = vmatpush.bf16.msra.mxu0 %v2298
        %2366 = vmatpush.bf16.msra.mxu0 %v2297
        %2367 = vmatpush.bf16.msra.mxu0 %v2296
        %2368 = vmatmul.bf16.gmra.mxu0 %v2096
        %v2369 = vpop.f32.mrf.mxu0
        %v2370 = vadd.f32 %v2166, %v2369
        %v2371 = vpop.f32.mrf.mxu0
        %2372 = vdwg.mxu0
        %2373 = vmatpush.bf16.msra.mxu0 %v2311
        %2374 = vmatpush.bf16.msra.mxu0 %v2310
        %2375 = vmatpush.bf16.msra.mxu0 %v2309
        %2376 = vmatpush.bf16.msra.mxu0 %v2308
        %2377 = vmatpush.bf16.msra.mxu0 %v2307
        %2378 = vmatpush.bf16.msra.mxu0 %v2306
        %2379 = vmatpush.bf16.msra.mxu0 %v2305
        %2380 = vmatpush.bf16.msra.mxu0 %v2304
        %2381 = vmatmul.bf16.gmra.mxu0 %v2097
        %v2382 = vpop.f32.mrf.mxu0
        %v2383 = vadd.f32 %v2370, %v2382
        %v2384 = vpop.f32.mrf.mxu0
        %2385 = vdwg.mxu0
        %2386 = vmatpush.bf16.msra.mxu0 %v2319
        %2387 = vmatpush.bf16.msra.mxu0 %v2318
        %2388 = vmatpush.bf16.msra.mxu0 %v2317
        %2389 = vmatpush.bf16.msra.mxu0 %v2316
        %2390 = vmatpush.bf16.msra.mxu0 %v2315
        %2391 = vmatpush.bf16.msra.mxu0 %v2314
        %2392 = vmatpush.bf16.msra.mxu0 %v2313
        %2393 = vmatpush.bf16.msra.mxu0 %v2312
        %2394 = vmatmul.bf16.gmra.mxu0 %v2098
        %v2395 = vpop.f32.mrf.mxu0
        %v2396 = vadd.f32 %v2383, %v2395
        %v2397 = vpop.f32.mrf.mxu0
        %2398 = vdwg.mxu0
        %2399 = vmatpush.bf16.msra.mxu0 %v2327
        %2400 = vmatpush.bf16.msra.mxu0 %v2326
        %2401 = vmatpush.bf16.msra.mxu0 %v2325
        %2402 = vmatpush.bf16.msra.mxu0 %v2324
        %2403 = vmatpush.bf16.msra.mxu0 %v2323
        %2404 = vmatpush.bf16.msra.mxu0 %v2322
        %2405 = vmatpush.bf16.msra.mxu0 %v2321
        %2406 = vmatpush.bf16.msra.mxu0 %v2320
        %2407 = vmatmul.bf16.gmra.mxu0 %v2099
        %v2408 = vpop.f32.mrf.mxu0
        %v2409 = vadd.f32 %v2396, %v2408
        %v2410 = vpop.f32.mrf.mxu0
        %2411 = vdwg.mxu0
        %v2412 = vadd.f32 %v1780, %v2409
        %s2413 = scalar_lea.vmem %s5, 4
        %v2414 = vld [vmem:[%s2413] sm:$0x1]
        %v2415 = vld [vmem:[%s2413 + $0x1] sm:$0x1]
        %v2416 = vld [vmem:[%s2413 + $0x2] sm:$0x1]
        %v2417 = vld [vmem:[%s2413 + $0x3] sm:$0x1]
        %2418 = vadd.xlane.f32.xlu0 %v2412
        %v2419 = vpop.xlane.xlu0 %2418
        %v2420 = vmul.f32 %v2419, %v1189
        %v2421 = vsub.f32 %v2412, %v2420
        %v2422 = vmul.f32 %v2421, %v2421
        %2423 = vadd.xlane.f32.xlu0 %v2422
        %v2424 = vpop.xlane.xlu0 %2423
        %v2425 = vmul.f32 %v2424, %v1189
        %v2426 = vadd.f32 %v2425, 1e-05
        %v2427 = vrsqrt.pop %v2426
        %v2428 = vmul.f32 %v2427, %v2426
        %v2429 = vmul.f32 %v2428, %v2427
        %v2430 = vmul.f32 0.5, %v2429
        %v2431 = vsub.f32 1.5, %v2430
        %v2432 = vmul.f32 %v2427, %v2431
        %vm2433 = vweird.f32 %v2426
        %vm2434 = vweird.f32 %v2427
        %vm2435 = vmor %vm2433, %vm2434
        %v2436 = vsel %vm2435, %v2427, %v2432
        %v2437 = vmul.f32 %v2421, %v2436
        %v2438 = vperm.slane %v2414, 0
        %v2439 = vmul.f32 %v2437, %v2438
        %v2440 = vperm.slane %v2415, 0
        %v2441 = vadd.f32 %v2439, %v2440
        %v2442 = vpack.c.bf16 %v2441, %v2441
        %s2443 = scalar_lea.vmem [#allocation9], 192
        %v2444 = vld [vmem:[%s2443] sm:$0xff]
        %v2445 = vld [vmem:[%s2443 + $0x8] sm:$0xf]
        %v2446 = vld [vmem:[%s2443 + $0xc] sm:$0xff]
        %v2447 = vld [vmem:[%s2443 + $0x14] sm:$0xf]
        %v2448 = vld [vmem:[%s2443 + $0x18] sm:$0xff]
        %v2449 = vld [vmem:[%s2443 + $0x20] sm:$0xf]
        %v2450 = vld [vmem:[%s2443 + $0x24] sm:$0xff]
        %v2451 = vld [vmem:[%s2443 + $0x2c] sm:$0xf]
        %v2452 = vld [vmem:[%s2443 + $0x30] sm:$0xff]
        %v2453 = vld [vmem:[%s2443 + $0x38] sm:$0xf]
        %v2454 = vld [vmem:[%s2443 + $0x3c] sm:$0xff]
        %v2455 = vld [vmem:[%s2443 + $0x44] sm:$0xf]
        %v2456 = vld [vmem:[%s2443 + $0x48] sm:$0xff]
        %v2457 = vld [vmem:[%s2443 + $0x50] sm:$0xf]
        %v2458 = vld [vmem:[%s2443 + $0x54] sm:$0xff]
        %v2459 = vld [vmem:[%s2443 + $0x5c] sm:$0xf]
        %v2460 = vld [vmem:[%s2443 + $0x60] sm:$0xff]
        %v2461 = vld [vmem:[%s2443 + $0x68] sm:$0xf]
        %v2462 = vld [vmem:[%s2443 + $0x6c] sm:$0xff]
        %v2463 = vld [vmem:[%s2443 + $0x74] sm:$0xf]
        %v2464 = vld [vmem:[%s2443 + $0x78] sm:$0xff]
        %v2465 = vld [vmem:[%s2443 + $0x80] sm:$0xf]
        %v2466 = vld [vmem:[%s2443 + $0x84] sm:$0xff]
        %v2467 = vld [vmem:[%s2443 + $0x8c] sm:$0xf]
        %v2468 = vld [vmem:[%s2443 + $0x90] sm:$0xff]
        %v2469 = vld [vmem:[%s2443 + $0x98] sm:$0xf]
        %v2470 = vld [vmem:[%s2443 + $0x9c] sm:$0xff]
        %v2471 = vld [vmem:[%s2443 + $0xa4] sm:$0xf]
        %v2472 = vld [vmem:[%s2443 + $0xa8] sm:$0xff]
        %v2473 = vld [vmem:[%s2443 + $0xb0] sm:$0xf]
        %v2474 = vld [vmem:[%s2443 + $0xb4] sm:$0xff]
        %v2475 = vld [vmem:[%s2443 + $0xbc] sm:$0xf]
        %s2476 = scalar_lea.vmem [#allocation11], 3
        %v2477 = vld [vmem:[%s2476] sm:$0x7]
        %v2479 = vperm.slane %v2477, 0
        %v2480 = vperm.slane %v2477, 1
        %v2481 = vperm.slane %v2477, 2
        %v2517 = vunpack.c.l.b16 %v2444
        %v2518 = vunpack.c.h.b16 %v2444
        %v2519 = vunpack.c.l.b16 %v2445
        %v2520 = vunpack.c.l.b16 %v2446
        %v2521 = vunpack.c.h.b16 %v2446
        %v2522 = vunpack.c.l.b16 %v2447
        %v2523 = vunpack.c.l.b16 %v2448
        %v2524 = vunpack.c.h.b16 %v2448
        %v2525 = vunpack.c.l.b16 %v2449
        %v2526 = vunpack.c.l.b16 %v2450
        %v2527 = vunpack.c.h.b16 %v2450
        %v2528 = vunpack.c.l.b16 %v2451
        %v2529 = vunpack.c.l.b16 %v2452
        %v2530 = vunpack.c.h.b16 %v2452
        %v2531 = vunpack.c.l.b16 %v2453
        %v2532 = vunpack.c.l.b16 %v2454
        %v2533 = vunpack.c.h.b16 %v2454
        %v2534 = vunpack.c.l.b16 %v2455
        %v2535 = vunpack.c.l.b16 %v2456
        %v2536 = vunpack.c.h.b16 %v2456
        %v2537 = vunpack.c.l.b16 %v2457
        %v2538 = vunpack.c.l.b16 %v2458
        %v2539 = vunpack.c.h.b16 %v2458
        %v2540 = vunpack.c.l.b16 %v2459
        %v2541 = vunpack.c.l.b16 %v2460
        %v2542 = vunpack.c.h.b16 %v2460
        %v2543 = vunpack.c.l.b16 %v2461
        %v2544 = vunpack.c.l.b16 %v2462
        %v2545 = vunpack.c.h.b16 %v2462
        %v2546 = vunpack.c.l.b16 %v2463
        %v2547 = vunpack.c.l.b16 %v2464
        %v2548 = vunpack.c.h.b16 %v2464
        %v2549 = vunpack.c.l.b16 %v2465
        %v2550 = vunpack.c.l.b16 %v2466
        %v2551 = vunpack.c.h.b16 %v2466
        %v2552 = vunpack.c.l.b16 %v2467
        %v2553 = vunpack.c.l.b16 %v2468
        %v2554 = vunpack.c.h.b16 %v2468
        %v2555 = vunpack.c.l.b16 %v2469
        %v2556 = vunpack.c.l.b16 %v2470
        %v2557 = vunpack.c.h.b16 %v2470
        %v2558 = vunpack.c.l.b16 %v2471
        %v2559 = vunpack.c.l.b16 %v2472
        %v2560 = vunpack.c.h.b16 %v2472
        %v2561 = vunpack.c.l.b16 %v2473
        %v2562 = vunpack.c.l.b16 %v2474
        %v2563 = vunpack.c.h.b16 %v2474
        %v2564 = vunpack.c.l.b16 %v2475
        %v2565 = vpack.c.b16 %v2520, %v2517
        %v2566 = vpack.c.b16 %v2521, %v2518
        %v2567 = vpack.c.b16 %v2522, %v2519
        %v2568 = vpack.c.b16 %v2526, %v2523
        %v2569 = vpack.c.b16 %v2527, %v2524
        %v2570 = vpack.c.b16 %v2528, %v2525
        %v2571 = vpack.c.b16 %v2532, %v2529
        %v2572 = vpack.c.b16 %v2533, %v2530
        %v2573 = vpack.c.b16 %v2534, %v2531
        %v2574 = vpack.c.b16 %v2538, %v2535
        %v2575 = vpack.c.b16 %v2539, %v2536
        %v2576 = vpack.c.b16 %v2540, %v2537
        %v2577 = vpack.c.b16 %v2544, %v2541
        %v2578 = vpack.c.b16 %v2545, %v2542
        %v2579 = vpack.c.b16 %v2546, %v2543
        %v2580 = vpack.c.b16 %v2550, %v2547
        %v2581 = vpack.c.b16 %v2551, %v2548
        %v2582 = vpack.c.b16 %v2552, %v2549
        %v2583 = vpack.c.b16 %v2556, %v2553
        %v2584 = vpack.c.b16 %v2557, %v2554
        %v2585 = vpack.c.b16 %v2558, %v2555
        %v2586 = vpack.c.b16 %v2562, %v2559
        %v2587 = vpack.c.b16 %v2563, %v2560
        %v2588 = vpack.c.b16 %v2564, %v2561
        %2613 = vmatpush.bf16.msra.mxu0 %v2586
        %2614 = vmatpush.bf16.msra.mxu0 %v2583
        %2615 = vmatpush.bf16.msra.mxu0 %v2580
        %2616 = vmatpush.bf16.msra.mxu0 %v2577
        %2617 = vmatpush.bf16.msra.mxu0 %v2574
        %2618 = vmatpush.bf16.msra.mxu0 %v2571
        %2619 = vmatpush.bf16.msra.mxu0 %v2568
        %2620 = vmatpush.bf16.msra.mxu0 %v2565
        %2621 = vmatmul.bf16.gmra.mxu0 %v2442
        %v2622 = vpop.f32.mrf.mxu0
        %v2623 = vadd.f32 %v2479, %v2622
        %v2624 = vpop.f32.mrf.mxu0
        %2625 = vdwg.mxu0
        %2626 = vmatpush.bf16.msra.mxu0 %v2587
        %2627 = vmatpush.bf16.msra.mxu0 %v2584
        %2628 = vmatpush.bf16.msra.mxu0 %v2581
        %2629 = vmatpush.bf16.msra.mxu0 %v2578
        %2630 = vmatpush.bf16.msra.mxu0 %v2575
        %2631 = vmatpush.bf16.msra.mxu0 %v2572
        %2632 = vmatpush.bf16.msra.mxu0 %v2569
        %2633 = vmatpush.bf16.msra.mxu0 %v2566
        %2634 = vmatmul.bf16.gmra.mxu0 %v2442
        %v2635 = vpop.f32.mrf.mxu0
        %v2636 = vadd.f32 %v2480, %v2635
        %v2637 = vpop.f32.mrf.mxu0
        %2638 = vdwg.mxu0
        %2639 = vmatpush.bf16.msra.mxu0 %v2588
        %2640 = vmatpush.bf16.msra.mxu0 %v2585
        %2641 = vmatpush.bf16.msra.mxu0 %v2582
        %2642 = vmatpush.bf16.msra.mxu0 %v2579
        %2643 = vmatpush.bf16.msra.mxu0 %v2576
        %2644 = vmatpush.bf16.msra.mxu0 %v2573
        %2645 = vmatpush.bf16.msra.mxu0 %v2570
        %2646 = vmatpush.bf16.msra.mxu0 %v2567
        %2647 = vmatmul.bf16.gmra.mxu0 %v2442
        %v2648 = vpop.f32.mrf.mxu0
        %v2649 = vadd.f32 %v2481, %v2648
        %v2650 = vpop.f32.mrf.mxu0
        %2651 = vdwg.mxu0
        %v2653 = vsel %vm1420, %v2623, 0
        %v2656 = vsel %vm1420, %v2636, 0
        %2658 = vmatpush.xpose.msra.mxu0 0.0
        %2659 = vmatpush.xpose.msra.mxu0 0.0
        %2660 = vmatpush.xpose.msra.mxu0 0.0
        %2661 = vmatpush.xpose.msra.mxu0 0.0
        %2662 = vmatpush.xpose.msra.mxu0 0.0
        %2663 = vmatpush.xpose.msra.mxu0 0.0
        %2664 = vmatpush.xpose.msra.mxu0 0.0
        %2665 = vmatpush.xpose.msra.mxu0 0.0
        %2666 = vmatpush.xpose.msra.mxu0 0.0
        %2667 = vmatpush.xpose.msra.mxu0 0.0
        %2668 = vmatpush.xpose.msra.mxu0 0.0
        %2669 = vmatpush.xpose.msra.mxu0 0.0
        %2670 = vmatpush.xpose.msra.mxu0 0.0
        %2671 = vmatpush.xpose.msra.mxu0 0.0
        %2672 = vmatpush.xpose.msra.mxu0 0.0
        %2673 = vmatpush.xpose.msra.mxu0 %v2656
        %2674 = vmatmul.f32.gmra.mxu0 %v2653
        %v2675 = vpop.f32.mrf.mxu0
        %v2676 = vadd.f32 0.0, %v2675
        %2677 = vdwg.mxu0
        %v2678 = vsel %vm1447, %v2676, -inf
        %2679 = vmax.xlane.f32.xlu0 %v2678
        %v2680 = vpop.xlane.xlu0 %2679
        %v2681 = vsub.f32 %v2676, %v2680
        %v2682 = vmul.f32 %v2681, 1.442695
        %v2683 = vpow.pop %v2682
        %v2684 = vsel %vm1447, %v2683, 0.0
        %2685 = vadd.xlane.f32.xlu0 %v2684
        %v2686 = vpop.xlane.xlu0 %2685
        %v2687 = vrcp.pop %v2686
        %v2688 = vmul.f32 %v2683, %v2687
        %v2690 = vsel %vm1447, %v2688, 0
        %2692 = vmatpush.msra.mxu0 0.0
        %2693 = vmatpush.msra.mxu0 0.0
        %2694 = vmatpush.msra.mxu0 0.0
        %2695 = vmatpush.msra.mxu0 0.0
        %2696 = vmatpush.msra.mxu0 0.0
        %2697 = vmatpush.msra.mxu0 0.0
        %2698 = vmatpush.msra.mxu0 0.0
        %2699 = vmatpush.msra.mxu0 0.0
        %2700 = vmatpush.msra.mxu0 0.0
        %2701 = vmatpush.msra.mxu0 0.0
        %2702 = vmatpush.msra.mxu0 0.0
        %2703 = vmatpush.msra.mxu0 0.0
        %2704 = vmatpush.msra.mxu0 0.0
        %2705 = vmatpush.msra.mxu0 0.0
        %2706 = vmatpush.msra.mxu0 0.0
        %2707 = vmatpush.msra.mxu0 %v2649
        %2708 = vmatmul.f32.gmra.mxu0 %v2690
        %v2709 = vpop.f32.mrf.mxu0
        %v2710 = vadd.f32 0.0, %v2709
        %2711 = vdwg.mxu0
        %2712 = vst.msk [vmem:[#allocation2] sm:$0xff] %vm1420, %v2710
        %2713 = vrot.lane.b32.xlu0 %v2623, 96
        %v2714 = vpop.permute.xlu0 %2713
        %2715 = vrot.lane.b32.xlu0 %v2636, 96
        %v2716 = vpop.permute.xlu0 %2715
        %v2717 = vsel %vm1420, %v2714, 0
        %v2719 = vsel %vm1420, %v2716, 0
        %2721 = vmatpush.xpose.msra.mxu0 0.0
        %2722 = vmatpush.xpose.msra.mxu0 0.0
        %2723 = vmatpush.xpose.msra.mxu0 0.0
        %2724 = vmatpush.xpose.msra.mxu0 0.0
        %2725 = vmatpush.xpose.msra.mxu0 0.0
        %2726 = vmatpush.xpose.msra.mxu0 0.0
        %2727 = vmatpush.xpose.msra.mxu0 0.0
        %2728 = vmatpush.xpose.msra.mxu0 0.0
        %2729 = vmatpush.xpose.msra.mxu0 0.0
        %2730 = vmatpush.xpose.msra.mxu0 0.0
        %2731 = vmatpush.xpose.msra.mxu0 0.0
        %2732 = vmatpush.xpose.msra.mxu0 0.0
        %2733 = vmatpush.xpose.msra.mxu0 0.0
        %2734 = vmatpush.xpose.msra.mxu0 0.0
        %2735 = vmatpush.xpose.msra.mxu0 0.0
        %2736 = vmatpush.xpose.msra.mxu0 %v2719
        %2737 = vmatmul.f32.gmra.mxu0 %v2717
        %v2738 = vpop.f32.mrf.mxu0
        %v2739 = vadd.f32 0.0, %v2738
        %2740 = vdwg.mxu0
        %v2741 = vsel %vm1447, %v2739, -inf
        %2742 = vmax.xlane.f32.xlu0 %v2741
        %v2743 = vpop.xlane.xlu0 %2742
        %v2744 = vsub.f32 %v2739, %v2743
        %v2745 = vmul.f32 %v2744, 1.442695
        %v2746 = vpow.pop %v2745
        %v2747 = vsel %vm1447, %v2746, 0.0
        %2748 = vadd.xlane.f32.xlu0 %v2747
        %v2749 = vpop.xlane.xlu0 %2748
        %v2750 = vrcp.pop %v2749
        %v2751 = vmul.f32 %v2746, %v2750
        %2753 = vrot.lane.b32.xlu0 %v2649, 96
        %v2754 = vpop.permute.xlu0 %2753
        %v2757 = vsel %vm1447, %v2751, 0
        %2759 = vmatpush.msra.mxu0 0.0
        %2760 = vmatpush.msra.mxu0 0.0
        %2761 = vmatpush.msra.mxu0 0.0
        %2762 = vmatpush.msra.mxu0 0.0
        %2763 = vmatpush.msra.mxu0 0.0
        %2764 = vmatpush.msra.mxu0 0.0
        %2765 = vmatpush.msra.mxu0 0.0
        %2766 = vmatpush.msra.mxu0 0.0
        %2767 = vmatpush.msra.mxu0 0.0
        %2768 = vmatpush.msra.mxu0 0.0
        %2769 = vmatpush.msra.mxu0 0.0
        %2770 = vmatpush.msra.mxu0 0.0
        %2771 = vmatpush.msra.mxu0 0.0
        %2772 = vmatpush.msra.mxu0 0.0
        %2773 = vmatpush.msra.mxu0 0.0
        %2774 = vmatpush.msra.mxu0 %v2754
        %2775 = vmatmul.f32.gmra.mxu0 %v2757
        %v2776 = vpop.f32.mrf.mxu0
        %v2777 = vadd.f32 0.0, %v2776
        %2778 = vdwg.mxu0
        %2780 = vrot.lane.b32.xlu0 %v2777, 32
        %v2781 = vpop.permute.xlu0 %2780
        %2783 = vst.msk [vmem:[#allocation2] sm:$0xff] %vm1553, %v2781
        %2784 = vrot.lane.b32.xlu0 %v2623, 64
        %v2785 = vpop.permute.xlu0 %2784
        %2786 = vrot.lane.b32.xlu0 %v2636, 64
        %v2787 = vpop.permute.xlu0 %2786
        %v2788 = vsel %vm1420, %v2785, 0
        %v2790 = vsel %vm1420, %v2787, 0
        %2792 = vmatpush.xpose.msra.mxu0 0.0
        %2793 = vmatpush.xpose.msra.mxu0 0.0
        %2794 = vmatpush.xpose.msra.mxu0 0.0
        %2795 = vmatpush.xpose.msra.mxu0 0.0
        %2796 = vmatpush.xpose.msra.mxu0 0.0
        %2797 = vmatpush.xpose.msra.mxu0 0.0
        %2798 = vmatpush.xpose.msra.mxu0 0.0
        %2799 = vmatpush.xpose.msra.mxu0 0.0
        %2800 = vmatpush.xpose.msra.mxu0 0.0
        %2801 = vmatpush.xpose.msra.mxu0 0.0
        %2802 = vmatpush.xpose.msra.mxu0 0.0
        %2803 = vmatpush.xpose.msra.mxu0 0.0
        %2804 = vmatpush.xpose.msra.mxu0 0.0
        %2805 = vmatpush.xpose.msra.mxu0 0.0
        %2806 = vmatpush.xpose.msra.mxu0 0.0
        %2807 = vmatpush.xpose.msra.mxu0 %v2790
        %2808 = vmatmul.f32.gmra.mxu0 %v2788
        %v2809 = vpop.f32.mrf.mxu0
        %v2810 = vadd.f32 0.0, %v2809
        %2811 = vdwg.mxu0
        %v2812 = vsel %vm1447, %v2810, -inf
        %2813 = vmax.xlane.f32.xlu0 %v2812
        %v2814 = vpop.xlane.xlu0 %2813
        %v2815 = vsub.f32 %v2810, %v2814
        %v2816 = vmul.f32 %v2815, 1.442695
        %v2817 = vpow.pop %v2816
        %v2818 = vsel %vm1447, %v2817, 0.0
        %2819 = vadd.xlane.f32.xlu0 %v2818
        %v2820 = vpop.xlane.xlu0 %2819
        %v2821 = vrcp.pop %v2820
        %v2822 = vmul.f32 %v2817, %v2821
        %2823 = vrot.lane.b32.xlu0 %v2649, 64
        %v2824 = vpop.permute.xlu0 %2823
        %v2827 = vsel %vm1447, %v2822, 0
        %2829 = vmatpush.msra.mxu0 0.0
        %2830 = vmatpush.msra.mxu0 0.0
        %2831 = vmatpush.msra.mxu0 0.0
        %2832 = vmatpush.msra.mxu0 0.0
        %2833 = vmatpush.msra.mxu0 0.0
        %2834 = vmatpush.msra.mxu0 0.0
        %2835 = vmatpush.msra.mxu0 0.0
        %2836 = vmatpush.msra.mxu0 0.0
        %2837 = vmatpush.msra.mxu0 0.0
        %2838 = vmatpush.msra.mxu0 0.0
        %2839 = vmatpush.msra.mxu0 0.0
        %2840 = vmatpush.msra.mxu0 0.0
        %2841 = vmatpush.msra.mxu0 0.0
        %2842 = vmatpush.msra.mxu0 0.0
        %2843 = vmatpush.msra.mxu0 0.0
        %2844 = vmatpush.msra.mxu0 %v2824
        %2845 = vmatmul.f32.gmra.mxu0 %v2827
        %v2846 = vpop.f32.mrf.mxu0
        %v2847 = vadd.f32 0.0, %v2846
        %2848 = vdwg.mxu0
        %2850 = vrot.lane.b32.xlu0 %v2847, 64
        %v2851 = vpop.permute.xlu0 %2850
        %2853 = vst.msk [vmem:[#allocation2] sm:$0xff] %vm1624, %v2851
        %2854 = vrot.lane.b32.xlu0 %v2623, 32
        %v2855 = vpop.permute.xlu0 %2854
        %2856 = vrot.lane.b32.xlu0 %v2636, 32
        %v2857 = vpop.permute.xlu0 %2856
        %v2858 = vsel %vm1420, %v2855, 0
        %v2860 = vsel %vm1420, %v2857, 0
        %2862 = vmatpush.xpose.msra.mxu0 0.0
        %2863 = vmatpush.xpose.msra.mxu0 0.0
        %2864 = vmatpush.xpose.msra.mxu0 0.0
        %2865 = vmatpush.xpose.msra.mxu0 0.0
        %2866 = vmatpush.xpose.msra.mxu0 0.0
        %2867 = vmatpush.xpose.msra.mxu0 0.0
        %2868 = vmatpush.xpose.msra.mxu0 0.0
        %2869 = vmatpush.xpose.msra.mxu0 0.0
        %2870 = vmatpush.xpose.msra.mxu0 0.0
        %2871 = vmatpush.xpose.msra.mxu0 0.0
        %2872 = vmatpush.xpose.msra.mxu0 0.0
        %2873 = vmatpush.xpose.msra.mxu0 0.0
        %2874 = vmatpush.xpose.msra.mxu0 0.0
        %2875 = vmatpush.xpose.msra.mxu0 0.0
        %2876 = vmatpush.xpose.msra.mxu0 0.0
        %2877 = vmatpush.xpose.msra.mxu0 %v2860
        %2878 = vmatmul.f32.gmra.mxu0 %v2858
        %v2879 = vpop.f32.mrf.mxu0
        %v2880 = vadd.f32 0.0, %v2879
        %2881 = vdwg.mxu0
        %v2882 = vsel %vm1447, %v2880, -inf
        %2883 = vmax.xlane.f32.xlu0 %v2882
        %v2884 = vpop.xlane.xlu0 %2883
        %v2885 = vsub.f32 %v2880, %v2884
        %v2886 = vmul.f32 %v2885, 1.442695
        %v2887 = vpow.pop %v2886
        %v2888 = vsel %vm1447, %v2887, 0.0
        %2889 = vadd.xlane.f32.xlu0 %v2888
        %v2890 = vpop.xlane.xlu0 %2889
        %v2891 = vrcp.pop %v2890
        %v2892 = vmul.f32 %v2887, %v2891
        %2893 = vrot.lane.b32.xlu0 %v2649, 32
        %v2894 = vpop.permute.xlu0 %2893
        %v2897 = vsel %vm1447, %v2892, 0
        %2899 = vmatpush.msra.mxu0 0.0
        %2900 = vmatpush.msra.mxu0 0.0
        %2901 = vmatpush.msra.mxu0 0.0
        %2902 = vmatpush.msra.mxu0 0.0
        %2903 = vmatpush.msra.mxu0 0.0
        %2904 = vmatpush.msra.mxu0 0.0
        %2905 = vmatpush.msra.mxu0 0.0
        %2906 = vmatpush.msra.mxu0 0.0
        %2907 = vmatpush.msra.mxu0 0.0
        %2908 = vmatpush.msra.mxu0 0.0
        %2909 = vmatpush.msra.mxu0 0.0
        %2910 = vmatpush.msra.mxu0 0.0
        %2911 = vmatpush.msra.mxu0 0.0
        %2912 = vmatpush.msra.mxu0 0.0
        %2913 = vmatpush.msra.mxu0 0.0
        %2914 = vmatpush.msra.mxu0 %v2894
        %2915 = vmatmul.f32.gmra.mxu0 %v2897
        %v2916 = vpop.f32.mrf.mxu0
        %v2917 = vadd.f32 0.0, %v2916
        %2918 = vdwg.mxu0
        %2920 = vrot.lane.b32.xlu0 %v2917, 96
        %v2921 = vpop.permute.xlu0 %2920
        %2923 = vst.msk [vmem:[#allocation2] sm:$0xff] %vm1695, %v2921
        %v2924 = vld [vmem:[#allocation2] sm:$0xff]
        %v2925 = vpack.c.bf16 %v2924, %v2924
        %s2926 = scalar_lea.vmem [#allocation12], 64
        %v2927 = vld [vmem:[%s2926] sm:$0xf]
        %v2928 = vld [vmem:[%s2926 + $0x4] sm:$0xf]
        %v2929 = vld [vmem:[%s2926 + $0x8] sm:$0xf]
        %v2930 = vld [vmem:[%s2926 + $0xc] sm:$0xf]
        %v2931 = vld [vmem:[%s2926 + $0x10] sm:$0xf]
        %v2932 = vld [vmem:[%s2926 + $0x14] sm:$0xf]
        %v2933 = vld [vmem:[%s2926 + $0x18] sm:$0xf]
        %v2934 = vld [vmem:[%s2926 + $0x1c] sm:$0xf]
        %v2935 = vld [vmem:[%s2926 + $0x20] sm:$0xf]
        %v2936 = vld [vmem:[%s2926 + $0x24] sm:$0xf]
        %v2937 = vld [vmem:[%s2926 + $0x28] sm:$0xf]
        %v2938 = vld [vmem:[%s2926 + $0x2c] sm:$0xf]
        %v2939 = vld [vmem:[%s2926 + $0x30] sm:$0xf]
        %v2940 = vld [vmem:[%s2926 + $0x34] sm:$0xf]
        %v2941 = vld [vmem:[%s2926 + $0x38] sm:$0xf]
        %v2942 = vld [vmem:[%s2926 + $0x3c] sm:$0xf]
        %s2943 = scalar_lea.vmem [#allocation14], 1
        %v2944 = vld [vmem:[%s2943] sm:$0x1]
        %v2946 = vperm.slane %v2944, 0
        %v2964 = vunpack.c.l.b16 %v2927
        %v2965 = vunpack.c.l.b16 %v2928
        %v2966 = vunpack.c.l.b16 %v2929
        %v2967 = vunpack.c.l.b16 %v2930
        %v2968 = vunpack.c.l.b16 %v2931
        %v2969 = vunpack.c.l.b16 %v2932
        %v2970 = vunpack.c.l.b16 %v2933
        %v2971 = vunpack.c.l.b16 %v2934
        %v2972 = vunpack.c.l.b16 %v2935
        %v2973 = vunpack.c.l.b16 %v2936
        %v2974 = vunpack.c.l.b16 %v2937
        %v2975 = vunpack.c.l.b16 %v2938
        %v2976 = vunpack.c.l.b16 %v2939
        %v2977 = vunpack.c.l.b16 %v2940
        %v2978 = vunpack.c.l.b16 %v2941
        %v2979 = vunpack.c.l.b16 %v2942
        %v2980 = vpack.c.b16 %v2965, %v2964
        %v2981 = vpack.c.b16 %v2967, %v2966
        %v2982 = vpack.c.b16 %v2969, %v2968
        %v2983 = vpack.c.b16 %v2971, %v2970
        %v2984 = vpack.c.b16 %v2973, %v2972
        %v2985 = vpack.c.b16 %v2975, %v2974
        %v2986 = vpack.c.b16 %v2977, %v2976
        %v2987 = vpack.c.b16 %v2979, %v2978
        %2996 = vmatpush.bf16.msra.mxu0 %v2987
        %2997 = vmatpush.bf16.msra.mxu0 %v2986
        %2998 = vmatpush.bf16.msra.mxu0 %v2985
        %2999 = vmatpush.bf16.msra.mxu0 %v2984
        %3000 = vmatpush.bf16.msra.mxu0 %v2983
        %3001 = vmatpush.bf16.msra.mxu0 %v2982
        %3002 = vmatpush.bf16.msra.mxu0 %v2981
        %3003 = vmatpush.bf16.msra.mxu0 %v2980
        %3004 = vmatmul.bf16.gmra.mxu0 %v2925
        %v3005 = vpop.f32.mrf.mxu0
        %v3006 = vadd.f32 %v2946, %v3005
        %v3007 = vpop.f32.mrf.mxu0
        %3008 = vdwg.mxu0
        %v3009 = vadd.f32 %v2412, %v3006
        %3010 = vadd.xlane.f32.xlu0 %v3009
        %v3011 = vpop.xlane.xlu0 %3010
        %v3012 = vmul.f32 %v3011, %v1189
        %v3013 = vsub.f32 %v3009, %v3012
        %v3014 = vmul.f32 %v3013, %v3013
        %3015 = vadd.xlane.f32.xlu0 %v3014
        %v3016 = vpop.xlane.xlu0 %3015
        %v3017 = vmul.f32 %v3016, %v1189
        %v3018 = vadd.f32 %v3017, 1e-05
        %v3019 = vrsqrt.pop %v3018
        %v3020 = vmul.f32 %v3019, %v3018
        %v3021 = vmul.f32 %v3020, %v3019
        %v3022 = vmul.f32 0.5, %v3021
        %v3023 = vsub.f32 1.5, %v3022
        %v3024 = vmul.f32 %v3019, %v3023
        %vm3025 = vweird.f32 %v3018
        %vm3026 = vweird.f32 %v3019
        %vm3027 = vmor %vm3025, %vm3026
        %v3028 = vsel %vm3027, %v3019, %v3024
        %v3029 = vmul.f32 %v3013, %v3028
        %v3030 = vperm.slane %v2416, 0
        %v3031 = vmul.f32 %v3029, %v3030
        %v3032 = vperm.slane %v2417, 0
        %v3033 = vadd.f32 %v3031, %v3032
        %v3034 = vpack.c.bf16 %v3033, %v3033
        %s3035 = scalar_lea.vmem [#allocation15], 256
        %v3036 = vld [vmem:[%s3035] sm:$0xff]
        %v3037 = vld [vmem:[%s3035 + $0x8] sm:$0xff]
        %v3038 = vld [vmem:[%s3035 + $0x10] sm:$0xff]
        %v3039 = vld [vmem:[%s3035 + $0x18] sm:$0xff]
        %v3040 = vld [vmem:[%s3035 + $0x20] sm:$0xff]
        %v3041 = vld [vmem:[%s3035 + $0x28] sm:$0xff]
        %v3042 = vld [vmem:[%s3035 + $0x30] sm:$0xff]
        %v3043 = vld [vmem:[%s3035 + $0x38] sm:$0xff]
        %v3044 = vld [vmem:[%s3035 + $0x40] sm:$0xff]
        %v3045 = vld [vmem:[%s3035 + $0x48] sm:$0xff]
        %v3046 = vld [vmem:[%s3035 + $0x50] sm:$0xff]
        %v3047 = vld [vmem:[%s3035 + $0x58] sm:$0xff]
        %v3048 = vld [vmem:[%s3035 + $0x60] sm:$0xff]
        %v3049 = vld [vmem:[%s3035 + $0x68] sm:$0xff]
        %v3050 = vld [vmem:[%s3035 + $0x70] sm:$0xff]
        %v3051 = vld [vmem:[%s3035 + $0x78] sm:$0xff]
        %v3052 = vld [vmem:[%s3035 + $0x80] sm:$0xff]
        %v3053 = vld [vmem:[%s3035 + $0x88] sm:$0xff]
        %v3054 = vld [vmem:[%s3035 + $0x90] sm:$0xff]
        %v3055 = vld [vmem:[%s3035 + $0x98] sm:$0xff]
        %v3056 = vld [vmem:[%s3035 + $0xa0] sm:$0xff]
        %v3057 = vld [vmem:[%s3035 + $0xa8] sm:$0xff]
        %v3058 = vld [vmem:[%s3035 + $0xb0] sm:$0xff]
        %v3059 = vld [vmem:[%s3035 + $0xb8] sm:$0xff]
        %v3060 = vld [vmem:[%s3035 + $0xc0] sm:$0xff]
        %v3061 = vld [vmem:[%s3035 + $0xc8] sm:$0xff]
        %v3062 = vld [vmem:[%s3035 + $0xd0] sm:$0xff]
        %v3063 = vld [vmem:[%s3035 + $0xd8] sm:$0xff]
        %v3064 = vld [vmem:[%s3035 + $0xe0] sm:$0xff]
        %v3065 = vld [vmem:[%s3035 + $0xe8] sm:$0xff]
        %v3066 = vld [vmem:[%s3035 + $0xf0] sm:$0xff]
        %v3067 = vld [vmem:[%s3035 + $0xf8] sm:$0xff]
        %s3068 = scalar_lea.vmem %s11, 4
        %v3069 = vld [vmem:[%s3068] sm:$0xf]
        %v3071 = vperm.slane %v3069, 0
        %v3072 = vperm.slane %v3069, 1
        %v3073 = vperm.slane %v3069, 2
        %v3074 = vperm.slane %v3069, 3
        %v3111 = vunpack.c.l.b16 %v3036
        %v3112 = vunpack.c.h.b16 %v3036
        %v3113 = vunpack.c.l.b16 %v3037
        %v3114 = vunpack.c.h.b16 %v3037
        %v3115 = vunpack.c.l.b16 %v3038
        %v3116 = vunpack.c.h.b16 %v3038
        %v3117 = vunpack.c.l.b16 %v3039
        %v3118 = vunpack.c.h.b16 %v3039
        %v3119 = vunpack.c.l.b16 %v3040
        %v3120 = vunpack.c.h.b16 %v3040
        %v3121 = vunpack.c.l.b16 %v3041
        %v3122 = vunpack.c.h.b16 %v3041
        %v3123 = vunpack.c.l.b16 %v3042
        %v3124 = vunpack.c.h.b16 %v3042
        %v3125 = vunpack.c.l.b16 %v3043
        %v3126 = vunpack.c.h.b16 %v3043
        %v3127 = vunpack.c.l.b16 %v3044
        %v3128 = vunpack.c.h.b16 %v3044
        %v3129 = vunpack.c.l.b16 %v3045
        %v3130 = vunpack.c.h.b16 %v3045
        %v3131 = vunpack.c.l.b16 %v3046
        %v3132 = vunpack.c.h.b16 %v3046
        %v3133 = vunpack.c.l.b16 %v3047
        %v3134 = vunpack.c.h.b16 %v3047
        %v3135 = vunpack.c.l.b16 %v3048
        %v3136 = vunpack.c.h.b16 %v3048
        %v3137 = vunpack.c.l.b16 %v3049
        %v3138 = vunpack.c.h.b16 %v3049
        %v3139 = vunpack.c.l.b16 %v3050
        %v3140 = vunpack.c.h.b16 %v3050
        %v3141 = vunpack.c.l.b16 %v3051
        %v3142 = vunpack.c.h.b16 %v3051
        %v3143 = vunpack.c.l.b16 %v3052
        %v3144 = vunpack.c.h.b16 %v3052
        %v3145 = vunpack.c.l.b16 %v3053
        %v3146 = vunpack.c.h.b16 %v3053
        %v3147 = vunpack.c.l.b16 %v3054
        %v3148 = vunpack.c.h.b16 %v3054
        %v3149 = vunpack.c.l.b16 %v3055
        %v3150 = vunpack.c.h.b16 %v3055
        %v3151 = vunpack.c.l.b16 %v3056
        %v3152 = vunpack.c.h.b16 %v3056
        %v3153 = vunpack.c.l.b16 %v3057
        %v3154 = vunpack.c.h.b16 %v3057
        %v3155 = vunpack.c.l.b16 %v3058
        %v3156 = vunpack.c.h.b16 %v3058
        %v3157 = vunpack.c.l.b16 %v3059
        %v3158 = vunpack.c.h.b16 %v3059
        %v3159 = vunpack.c.l.b16 %v3060
        %v3160 = vunpack.c.h.b16 %v3060
        %v3161 = vunpack.c.l.b16 %v3061
        %v3162 = vunpack.c.h.b16 %v3061
        %v3163 = vunpack.c.l.b16 %v3062
        %v3164 = vunpack.c.h.b16 %v3062
        %v3165 = vunpack.c.l.b16 %v3063
        %v3166 = vunpack.c.h.b16 %v3063
        %v3167 = vunpack.c.l.b16 %v3064
        %v3168 = vunpack.c.h.b16 %v3064
        %v3169 = vunpack.c.l.b16 %v3065
        %v3170 = vunpack.c.h.b16 %v3065
        %v3171 = vunpack.c.l.b16 %v3066
        %v3172 = vunpack.c.h.b16 %v3066
        %v3173 = vunpack.c.l.b16 %v3067
        %v3174 = vunpack.c.h.b16 %v3067
        %v3175 = vpack.c.b16 %v3115, %v3111
        %v3176 = vpack.c.b16 %v3116, %v3112
        %v3177 = vpack.c.b16 %v3117, %v3113
        %v3178 = vpack.c.b16 %v3118, %v3114
        %v3179 = vpack.c.b16 %v3123, %v3119
        %v3180 = vpack.c.b16 %v3124, %v3120
        %v3181 = vpack.c.b16 %v3125, %v3121
        %v3182 = vpack.c.b16 %v3126, %v3122
        %v3183 = vpack.c.b16 %v3131, %v3127
        %v3184 = vpack.c.b16 %v3132, %v3128
        %v3185 = vpack.c.b16 %v3133, %v3129
        %v3186 = vpack.c.b16 %v3134, %v3130
        %v3187 = vpack.c.b16 %v3139, %v3135
        %v3188 = vpack.c.b16 %v3140, %v3136
        %v3189 = vpack.c.b16 %v3141, %v3137
        %v3190 = vpack.c.b16 %v3142, %v3138
        %v3191 = vpack.c.b16 %v3147, %v3143
        %v3192 = vpack.c.b16 %v3148, %v3144
        %v3193 = vpack.c.b16 %v3149, %v3145
        %v3194 = vpack.c.b16 %v3150, %v3146
        %v3195 = vpack.c.b16 %v3155, %v3151
        %v3196 = vpack.c.b16 %v3156, %v3152
        %v3197 = vpack.c.b16 %v3157, %v3153
        %v3198 = vpack.c.b16 %v3158, %v3154
        %v3199 = vpack.c.b16 %v3163, %v3159
        %v3200 = vpack.c.b16 %v3164, %v3160
        %v3201 = vpack.c.b16 %v3165, %v3161
        %v3202 = vpack.c.b16 %v3166, %v3162
        %v3203 = vpack.c.b16 %v3171, %v3167
        %v3204 = vpack.c.b16 %v3172, %v3168
        %v3205 = vpack.c.b16 %v3173, %v3169
        %v3206 = vpack.c.b16 %v3174, %v3170
        %3239 = vmatpush.bf16.msra.mxu0 %v3203
        %3240 = vmatpush.bf16.msra.mxu0 %v3199
        %3241 = vmatpush.bf16.msra.mxu0 %v3195
        %3242 = vmatpush.bf16.msra.mxu0 %v3191
        %3243 = vmatpush.bf16.msra.mxu0 %v3187
        %3244 = vmatpush.bf16.msra.mxu0 %v3183
        %3245 = vmatpush.bf16.msra.mxu0 %v3179
        %3246 = vmatpush.bf16.msra.mxu0 %v3175
        %3247 = vmatmul.bf16.gmra.mxu0 %v3034
        %v3248 = vpop.f32.mrf.mxu0
        %v3249 = vadd.f32 %v3071, %v3248
        %v3250 = vpop.f32.mrf.mxu0
        %3251 = vdwg.mxu0
        %3252 = vmatpush.bf16.msra.mxu0 %v3204
        %3253 = vmatpush.bf16.msra.mxu0 %v3200
        %3254 = vmatpush.bf16.msra.mxu0 %v3196
        %3255 = vmatpush.bf16.msra.mxu0 %v3192
        %3256 = vmatpush.bf16.msra.mxu0 %v3188
        %3257 = vmatpush.bf16.msra.mxu0 %v3184
        %3258 = vmatpush.bf16.msra.mxu0 %v3180
        %3259 = vmatpush.bf16.msra.mxu0 %v3176
        %3260 = vmatmul.bf16.gmra.mxu0 %v3034
        %v3261 = vpop.f32.mrf.mxu0
        %v3262 = vadd.f32 %v3072, %v3261
        %v3263 = vpop.f32.mrf.mxu0
        %3264 = vdwg.mxu0
        %3265 = vmatpush.bf16.msra.mxu0 %v3205
        %3266 = vmatpush.bf16.msra.mxu0 %v3201
        %3267 = vmatpush.bf16.msra.mxu0 %v3197
        %3268 = vmatpush.bf16.msra.mxu0 %v3193
        %3269 = vmatpush.bf16.msra.mxu0 %v3189
        %3270 = vmatpush.bf16.msra.mxu0 %v3185
        %3271 = vmatpush.bf16.msra.mxu0 %v3181
        %3272 = vmatpush.bf16.msra.mxu0 %v3177
        %3273 = vmatmul.bf16.gmra.mxu0 %v3034
        %v3274 = vpop.f32.mrf.mxu0
        %v3275 = vadd.f32 %v3073, %v3274
        %v3276 = vpop.f32.mrf.mxu0
        %3277 = vdwg.mxu0
        %3278 = vmatpush.bf16.msra.mxu0 %v3206
        %3279 = vmatpush.bf16.msra.mxu0 %v3202
        %3280 = vmatpush.bf16.msra.mxu0 %v3198
        %3281 = vmatpush.bf16.msra.mxu0 %v3194
        %3282 = vmatpush.bf16.msra.mxu0 %v3190
        %3283 = vmatpush.bf16.msra.mxu0 %v3186
        %3284 = vmatpush.bf16.msra.mxu0 %v3182
        %3285 = vmatpush.bf16.msra.mxu0 %v3178
        %3286 = vmatmul.bf16.gmra.mxu0 %v3034
        %v3287 = vpop.f32.mrf.mxu0
        %v3288 = vadd.f32 %v3074, %v3287
        %v3289 = vpop.f32.mrf.mxu0
        %3290 = vdwg.mxu0
        %v3291 = vmul.f32 %v3249, 0.5
        %v3292 = vmul.f32 %v3262, 0.5
        %v3293 = vmul.f32 %v3275, 0.5
        %v3294 = vmul.f32 %v3288, 0.5
        %v3295 = vmul.f32 %v3249, 0.044715
        %v3296 = vmul.f32 %v3262, 0.044715
        %v3297 = vmul.f32 %v3275, 0.044715
        %v3298 = vmul.f32 %v3288, 0.044715
        %v3299 = vmul.f32 %v3295, %v3249
        %v3300 = vmul.f32 %v3296, %v3262
        %v3301 = vmul.f32 %v3297, %v3275
        %v3302 = vmul.f32 %v3298, %v3288
        %v3303 = vmul.f32 %v3299, %v3249
        %v3304 = vmul.f32 %v3300, %v3262
        %v3305 = vmul.f32 %v3301, %v3275
        %v3306 = vmul.f32 %v3302, %v3288
        %v3307 = vadd.f32 %v3249, %v3303
        %v3308 = vadd.f32 %v3262, %v3304
        %v3309 = vadd.f32 %v3275, %v3305
        %v3310 = vadd.f32 %v3288, %v3306
        %v3311 = vmul.f32 %v3307, 0.7978846
        %v3312 = vmul.f32 %v3308, 0.7978846
        %v3313 = vmul.f32 %v3309, 0.7978846
        %v3314 = vmul.f32 %v3310, 0.7978846
        %v3315 = vtanh.pop %v3311
        %v3316 = vtanh.pop %v3312
        %v3317 = vtanh.pop %v3313
        %v3318 = vtanh.pop %v3314
        %v3319 = vadd.f32 %v3315, 1.0
        %v3320 = vadd.f32 %v3316, 1.0
        %v3321 = vadd.f32 %v3317, 1.0
        %v3322 = vadd.f32 %v3318, 1.0
        %v3323 = vmul.f32 %v3291, %v3319
        %v3324 = vmul.f32 %v3292, %v3320
        %v3325 = vmul.f32 %v3293, %v3321
        %v3326 = vmul.f32 %v3294, %v3322
        %v3327 = vpack.c.bf16 %v3323, %v3323
        %v3328 = vpack.c.bf16 %v3324, %v3324
        %v3329 = vpack.c.bf16 %v3325, %v3325
        %v3330 = vpack.c.bf16 %v3326, %v3326
        %s3331 = scalar_lea.vmem [#allocation17], 256
        %v3332 = vld [vmem:[%s3331] sm:$0xf]
        %v3333 = vld [vmem:[%s3331 + $0x4] sm:$0xf]
        %v3334 = vld [vmem:[%s3331 + $0x8] sm:$0xf]
        %v3335 = vld [vmem:[%s3331 + $0xc] sm:$0xf]
        %v3336 = vld [vmem:[%s3331 + $0x10] sm:$0xf]
        %v3337 = vld [vmem:[%s3331 + $0x14] sm:$0xf]
        %v3338 = vld [vmem:[%s3331 + $0x18] sm:$0xf]
        %v3339 = vld [vmem:[%s3331 + $0x1c] sm:$0xf]
        %v3340 = vld [vmem:[%s3331 + $0x20] sm:$0xf]
        %v3341 = vld [vmem:[%s3331 + $0x24] sm:$0xf]
        %v3342 = vld [vmem:[%s3331 + $0x28] sm:$0xf]
        %v3343 = vld [vmem:[%s3331 + $0x2c] sm:$0xf]
        %v3344 = vld [vmem:[%s3331 + $0x30] sm:$0xf]
        %v3345 = vld [vmem:[%s3331 + $0x34] sm:$0xf]
        %v3346 = vld [vmem:[%s3331 + $0x38] sm:$0xf]
        %v3347 = vld [vmem:[%s3331 + $0x3c] sm:$0xf]
        %v3348 = vld [vmem:[%s3331 + $0x40] sm:$0xf]
        %v3349 = vld [vmem:[%s3331 + $0x44] sm:$0xf]
        %v3350 = vld [vmem:[%s3331 + $0x48] sm:$0xf]
        %v3351 = vld [vmem:[%s3331 + $0x4c] sm:$0xf]
        %v3352 = vld [vmem:[%s3331 + $0x50] sm:$0xf]
        %v3353 = vld [vmem:[%s3331 + $0x54] sm:$0xf]
        %v3354 = vld [vmem:[%s3331 + $0x58] sm:$0xf]
        %v3355 = vld [vmem:[%s3331 + $0x5c] sm:$0xf]
        %v3356 = vld [vmem:[%s3331 + $0x60] sm:$0xf]
        %v3357 = vld [vmem:[%s3331 + $0x64] sm:$0xf]
        %v3358 = vld [vmem:[%s3331 + $0x68] sm:$0xf]
        %v3359 = vld [vmem:[%s3331 + $0x6c] sm:$0xf]
        %v3360 = vld [vmem:[%s3331 + $0x70] sm:$0xf]
        %v3361 = vld [vmem:[%s3331 + $0x74] sm:$0xf]
        %v3362 = vld [vmem:[%s3331 + $0x78] sm:$0xf]
        %v3363 = vld [vmem:[%s3331 + $0x7c] sm:$0xf]
        %v3364 = vld [vmem:[%s3331 + $0x80] sm:$0xf]
        %v3365 = vld [vmem:[%s3331 + $0x84] sm:$0xf]
        %v3366 = vld [vmem:[%s3331 + $0x88] sm:$0xf]
        %v3367 = vld [vmem:[%s3331 + $0x8c] sm:$0xf]
        %v3368 = vld [vmem:[%s3331 + $0x90] sm:$0xf]
        %v3369 = vld [vmem:[%s3331 + $0x94] sm:$0xf]
        %v3370 = vld [vmem:[%s3331 + $0x98] sm:$0xf]
        %v3371 = vld [vmem:[%s3331 + $0x9c] sm:$0xf]
        %v3372 = vld [vmem:[%s3331 + $0xa0] sm:$0xf]
        %v3373 = vld [vmem:[%s3331 + $0xa4] sm:$0xf]
        %v3374 = vld [vmem:[%s3331 + $0xa8] sm:$0xf]
        %v3375 = vld [vmem:[%s3331 + $0xac] sm:$0xf]
        %v3376 = vld [vmem:[%s3331 + $0xb0] sm:$0xf]
        %v3377 = vld [vmem:[%s3331 + $0xb4] sm:$0xf]
        %v3378 = vld [vmem:[%s3331 + $0xb8] sm:$0xf]
        %v3379 = vld [vmem:[%s3331 + $0xbc] sm:$0xf]
        %v3380 = vld [vmem:[%s3331 + $0xc0] sm:$0xf]
        %v3381 = vld [vmem:[%s3331 + $0xc4] sm:$0xf]
        %v3382 = vld [vmem:[%s3331 + $0xc8] sm:$0xf]
        %v3383 = vld [vmem:[%s3331 + $0xcc] sm:$0xf]
        %v3384 = vld [vmem:[%s3331 + $0xd0] sm:$0xf]
        %v3385 = vld [vmem:[%s3331 + $0xd4] sm:$0xf]
        %v3386 = vld [vmem:[%s3331 + $0xd8] sm:$0xf]
        %v3387 = vld [vmem:[%s3331 + $0xdc] sm:$0xf]
        %v3388 = vld [vmem:[%s3331 + $0xe0] sm:$0xf]
        %v3389 = vld [vmem:[%s3331 + $0xe4] sm:$0xf]
        %v3390 = vld [vmem:[%s3331 + $0xe8] sm:$0xf]
        %v3391 = vld [vmem:[%s3331 + $0xec] sm:$0xf]
        %v3392 = vld [vmem:[%s3331 + $0xf0] sm:$0xf]
        %v3393 = vld [vmem:[%s3331 + $0xf4] sm:$0xf]
        %v3394 = vld [vmem:[%s3331 + $0xf8] sm:$0xf]
        %v3395 = vld [vmem:[%s3331 + $0xfc] sm:$0xf]
        %s3396 = scalar_lea.vmem %s13, 1
        %v3397 = vld [vmem:[%s3396] sm:$0x1]
        %v3399 = vperm.slane %v3397, 0
        %v3465 = vunpack.c.l.b16 %v3332
        %v3466 = vunpack.c.l.b16 %v3333
        %v3467 = vunpack.c.l.b16 %v3334
        %v3468 = vunpack.c.l.b16 %v3335
        %v3469 = vunpack.c.l.b16 %v3336
        %v3470 = vunpack.c.l.b16 %v3337
        %v3471 = vunpack.c.l.b16 %v3338
        %v3472 = vunpack.c.l.b16 %v3339
        %v3473 = vunpack.c.l.b16 %v3340
        %v3474 = vunpack.c.l.b16 %v3341
        %v3475 = vunpack.c.l.b16 %v3342
        %v3476 = vunpack.c.l.b16 %v3343
        %v3477 = vunpack.c.l.b16 %v3344
        %v3478 = vunpack.c.l.b16 %v3345
        %v3479 = vunpack.c.l.b16 %v3346
        %v3480 = vunpack.c.l.b16 %v3347
        %v3481 = vunpack.c.l.b16 %v3348
        %v3482 = vunpack.c.l.b16 %v3349
        %v3483 = vunpack.c.l.b16 %v3350
        %v3484 = vunpack.c.l.b16 %v3351
        %v3485 = vunpack.c.l.b16 %v3352
        %v3486 = vunpack.c.l.b16 %v3353
        %v3487 = vunpack.c.l.b16 %v3354
        %v3488 = vunpack.c.l.b16 %v3355
        %v3489 = vunpack.c.l.b16 %v3356
        %v3490 = vunpack.c.l.b16 %v3357
        %v3491 = vunpack.c.l.b16 %v3358
        %v3492 = vunpack.c.l.b16 %v3359
        %v3493 = vunpack.c.l.b16 %v3360
        %v3494 = vunpack.c.l.b16 %v3361
        %v3495 = vunpack.c.l.b16 %v3362
        %v3496 = vunpack.c.l.b16 %v3363
        %v3497 = vunpack.c.l.b16 %v3364
        %v3498 = vunpack.c.l.b16 %v3365
        %v3499 = vunpack.c.l.b16 %v3366
        %v3500 = vunpack.c.l.b16 %v3367
        %v3501 = vunpack.c.l.b16 %v3368
        %v3502 = vunpack.c.l.b16 %v3369
        %v3503 = vunpack.c.l.b16 %v3370
        %v3504 = vunpack.c.l.b16 %v3371
        %v3505 = vunpack.c.l.b16 %v3372
        %v3506 = vunpack.c.l.b16 %v3373
        %v3507 = vunpack.c.l.b16 %v3374
        %v3508 = vunpack.c.l.b16 %v3375
        %v3509 = vunpack.c.l.b16 %v3376
        %v3510 = vunpack.c.l.b16 %v3377
        %v3511 = vunpack.c.l.b16 %v3378
        %v3512 = vunpack.c.l.b16 %v3379
        %v3513 = vunpack.c.l.b16 %v3380
        %v3514 = vunpack.c.l.b16 %v3381
        %v3515 = vunpack.c.l.b16 %v3382
        %v3516 = vunpack.c.l.b16 %v3383
        %v3517 = vunpack.c.l.b16 %v3384
        %v3518 = vunpack.c.l.b16 %v3385
        %v3519 = vunpack.c.l.b16 %v3386
        %v3520 = vunpack.c.l.b16 %v3387
        %v3521 = vunpack.c.l.b16 %v3388
        %v3522 = vunpack.c.l.b16 %v3389
        %v3523 = vunpack.c.l.b16 %v3390
        %v3524 = vunpack.c.l.b16 %v3391
        %v3525 = vunpack.c.l.b16 %v3392
        %v3526 = vunpack.c.l.b16 %v3393
        %v3527 = vunpack.c.l.b16 %v3394
        %v3528 = vunpack.c.l.b16 %v3395
        %v3529 = vpack.c.b16 %v3466, %v3465
        %v3530 = vpack.c.b16 %v3468, %v3467
        %v3531 = vpack.c.b16 %v3470, %v3469
        %v3532 = vpack.c.b16 %v3472, %v3471
        %v3533 = vpack.c.b16 %v3474, %v3473
        %v3534 = vpack.c.b16 %v3476, %v3475
        %v3535 = vpack.c.b16 %v3478, %v3477
        %v3536 = vpack.c.b16 %v3480, %v3479
        %v3537 = vpack.c.b16 %v3482, %v3481
        %v3538 = vpack.c.b16 %v3484, %v3483
        %v3539 = vpack.c.b16 %v3486, %v3485
        %v3540 = vpack.c.b16 %v3488, %v3487
        %v3541 = vpack.c.b16 %v3490, %v3489
        %v3542 = vpack.c.b16 %v3492, %v3491
        %v3543 = vpack.c.b16 %v3494, %v3493
        %v3544 = vpack.c.b16 %v3496, %v3495
        %v3545 = vpack.c.b16 %v3498, %v3497
        %v3546 = vpack.c.b16 %v3500, %v3499
        %v3547 = vpack.c.b16 %v3502, %v3501
        %v3548 = vpack.c.b16 %v3504, %v3503
        %v3549 = vpack.c.b16 %v3506, %v3505
        %v3550 = vpack.c.b16 %v3508, %v3507
        %v3551 = vpack.c.b16 %v3510, %v3509
        %v3552 = vpack.c.b16 %v3512, %v3511
        %v3553 = vpack.c.b16 %v3514, %v3513
        %v3554 = vpack.c.b16 %v3516, %v3515
        %v3555 = vpack.c.b16 %v3518, %v3517
        %v3556 = vpack.c.b16 %v3520, %v3519
        %v3557 = vpack.c.b16 %v3522, %v3521
        %v3558 = vpack.c.b16 %v3524, %v3523
        %v3559 = vpack.c.b16 %v3526, %v3525
        %v3560 = vpack.c.b16 %v3528, %v3527
        %3593 = vmatpush.bf16.msra.mxu0 %v3536
        %3594 = vmatpush.bf16.msra.mxu0 %v3535
        %3595 = vmatpush.bf16.msra.mxu0 %v3534
        %3596 = vmatpush.bf16.msra.mxu0 %v3533
        %3597 = vmatpush.bf16.msra.mxu0 %v3532
        %3598 = vmatpush.bf16.msra.mxu0 %v3531
        %3599 = vmatpush.bf16.msra.mxu0 %v3530
        %3600 = vmatpush.bf16.msra.mxu0 %v3529
        %3601 = vmatmul.bf16.gmra.mxu0 %v3327
        %v3602 = vpop.f32.mrf.mxu0
        %v3603 = vadd.f32 %v3399, %v3602
        %v3604 = vpop.f32.mrf.mxu0
        %3605 = vdwg.mxu0
        %3606 = vmatpush.bf16.msra.mxu0 %v3544
        %3607 = vmatpush.bf16.msra.mxu0 %v3543
        %3608 = vmatpush.bf16.msra.mxu0 %v3542
        %3609 = vmatpush.bf16.msra.mxu0 %v3541
        %3610 = vmatpush.bf16.msra.mxu0 %v3540
        %3611 = vmatpush.bf16.msra.mxu0 %v3539
        %3612 = vmatpush.bf16.msra.mxu0 %v3538
        %3613 = vmatpush.bf16.msra.mxu0 %v3537
        %3614 = vmatmul.bf16.gmra.mxu0 %v3328
        %v3615 = vpop.f32.mrf.mxu0
        %v3616 = vadd.f32 %v3603, %v3615
        %v3617 = vpop.f32.mrf.mxu0
        %3618 = vdwg.mxu0
        %3619 = vmatpush.bf16.msra.mxu0 %v3552
        %3620 = vmatpush.bf16.msra.mxu0 %v3551
        %3621 = vmatpush.bf16.msra.mxu0 %v3550
        %3622 = vmatpush.bf16.msra.mxu0 %v3549
        %3623 = vmatpush.bf16.msra.mxu0 %v3548
        %3624 = vmatpush.bf16.msra.mxu0 %v3547
        %3625 = vmatpush.bf16.msra.mxu0 %v3546
        %3626 = vmatpush.bf16.msra.mxu0 %v3545
        %3627 = vmatmul.bf16.gmra.mxu0 %v3329
        %v3628 = vpop.f32.mrf.mxu0
        %v3629 = vadd.f32 %v3616, %v3628
        %v3630 = vpop.f32.mrf.mxu0
        %3631 = vdwg.mxu0
        %3632 = vmatpush.bf16.msra.mxu0 %v3560
        %3633 = vmatpush.bf16.msra.mxu0 %v3559
        %3634 = vmatpush.bf16.msra.mxu0 %v3558
        %3635 = vmatpush.bf16.msra.mxu0 %v3557
        %3636 = vmatpush.bf16.msra.mxu0 %v3556
        %3637 = vmatpush.bf16.msra.mxu0 %v3555
        %3638 = vmatpush.bf16.msra.mxu0 %v3554
        %3639 = vmatpush.bf16.msra.mxu0 %v3553
        %3640 = vmatmul.bf16.gmra.mxu0 %v3330
        %v3641 = vpop.f32.mrf.mxu0
        %v3642 = vadd.f32 %v3629, %v3641
        %v3643 = vpop.f32.mrf.mxu0
        %3644 = vdwg.mxu0
        %v3645 = vadd.f32 %v3009, %v3642
        %v3646 = vrot.slane %v3645, 4
        %v3647 = vadd.f32 %v3645, %v3646
        %v3648 = vrot.slane %v3647, 2
        %v3649 = vadd.f32 %v3647, %v3648
        %v3650 = vrot.slane %v3649, 1
        %v3651 = vadd.f32 %v3649, %v3650
        %v3652 = vmul.f32 %v3651, 0.125
        %v3653 = vld [vmem:[#allocation18] sm:$0xff]
        %v3654 = vld [vmem:[#allocation18 + $0x8] sm:$0xff]
        %v3655 = vld [vmem:[#allocation18 + $0x10] sm:$0xff]
        %v3656 = vld [vmem:[#allocation18 + $0x18] sm:$0xff]
        %v3657 = vld [vmem:[#allocation18 + $0x20] sm:$0xff]
        %v3658 = vld [vmem:[#allocation18 + $0x28] sm:$0xff]
        %v3659 = vld [vmem:[#allocation18 + $0x30] sm:$0xff]
        %v3660 = vld [vmem:[#allocation18 + $0x38] sm:$0xff]
        %v3661 = vld [vmem:[#allocation18 + $0x40] sm:$0xff]
        %v3662 = vld [vmem:[#allocation18 + $0x48] sm:$0xff]
        %v3663 = vld [vmem:[#allocation18 + $0x50] sm:$0xff]
        %v3664 = vld [vmem:[#allocation18 + $0x58] sm:$0xff]
        %v3665 = vld [vmem:[#allocation18 + $0x60] sm:$0xff]
        %v3666 = vld [vmem:[#allocation18 + $0x68] sm:$0xff]
        %v3667 = vld [vmem:[#allocation18 + $0x70] sm:$0xff]
        %v3668 = vld [vmem:[#allocation18 + $0x78] sm:$0xff]
        %v3669 = vld [vmem:[%s15] sm:$0x3]
        %v3670 = vpack.c.bf16 %v3652, %v3652
        %v3687 = vunpack.c.l.b16 %v3653
        %v3688 = vunpack.c.h.b16 %v3653
        %v3689 = vunpack.c.l.b16 %v3654
        %v3690 = vunpack.c.h.b16 %v3654
        %v3691 = vunpack.c.l.b16 %v3655
        %v3692 = vunpack.c.h.b16 %v3655
        %v3693 = vunpack.c.l.b16 %v3656
        %v3694 = vunpack.c.h.b16 %v3656
        %v3695 = vunpack.c.l.b16 %v3657
        %v3696 = vunpack.c.h.b16 %v3657
        %v3697 = vunpack.c.l.b16 %v3658
        %v3698 = vunpack.c.h.b16 %v3658
        %v3699 = vunpack.c.l.b16 %v3659
        %v3700 = vunpack.c.h.b16 %v3659
        %v3701 = vunpack.c.l.b16 %v3660
        %v3702 = vunpack.c.h.b16 %v3660
        %v3703 = vunpack.c.l.b16 %v3661
        %v3704 = vunpack.c.h.b16 %v3661
        %v3705 = vunpack.c.l.b16 %v3662
        %v3706 = vunpack.c.h.b16 %v3662
        %v3707 = vunpack.c.l.b16 %v3663
        %v3708 = vunpack.c.h.b16 %v3663
        %v3709 = vunpack.c.l.b16 %v3664
        %v3710 = vunpack.c.h.b16 %v3664
        %v3711 = vunpack.c.l.b16 %v3665
        %v3712 = vunpack.c.h.b16 %v3665
        %v3713 = vunpack.c.l.b16 %v3666
        %v3714 = vunpack.c.h.b16 %v3666
        %v3715 = vunpack.c.l.b16 %v3667
        %v3716 = vunpack.c.h.b16 %v3667
        %v3717 = vunpack.c.l.b16 %v3668
        %v3718 = vunpack.c.h.b16 %v3668
        %v3719 = vpack.c.b16 %v3689, %v3687
        %v3720 = vpack.c.b16 %v3690, %v3688
        %v3721 = vpack.c.b16 %v3693, %v3691
        %v3722 = vpack.c.b16 %v3694, %v3692
        %v3723 = vpack.c.b16 %v3697, %v3695
        %v3724 = vpack.c.b16 %v3698, %v3696
        %v3725 = vpack.c.b16 %v3701, %v3699
        %v3726 = vpack.c.b16 %v3702, %v3700
        %v3727 = vpack.c.b16 %v3705, %v3703
        %v3728 = vpack.c.b16 %v3706, %v3704
        %v3729 = vpack.c.b16 %v3709, %v3707
        %v3730 = vpack.c.b16 %v3710, %v3708
        %v3731 = vpack.c.b16 %v3713, %v3711
        %v3732 = vpack.c.b16 %v3714, %v3712
        %v3733 = vpack.c.b16 %v3717, %v3715
        %v3734 = vpack.c.b16 %v3718, %v3716
        %v3752 = vperm.slane %v3669, 0
        %v3753 = vperm.slane %v3669, 1
        %3756 = vmatpush.bf16.msra.mxu0 %v3733
        %3757 = vmatpush.bf16.msra.mxu0 %v3731
        %3758 = vmatpush.bf16.msra.mxu0 %v3729
        %3759 = vmatpush.bf16.msra.mxu0 %v3727
        %3760 = vmatpush.bf16.msra.mxu0 %v3725
        %3761 = vmatpush.bf16.msra.mxu0 %v3723
        %3762 = vmatpush.bf16.msra.mxu0 %v3721
        %3763 = vmatpush.bf16.msra.mxu0 %v3719
        %3764 = vmatmul.bf16.gmra.mxu0 %v3670
        %v3765 = vpop.f32.mrf.mxu0
        %v3766 = vadd.f32 %v3752, %v3765
        %v3767 = vpop.f32.mrf.mxu0
        %3768 = vdwg.mxu0
        %3769 = vmatpush.bf16.msra.mxu0 %v3734
        %3770 = vmatpush.bf16.msra.mxu0 %v3732
        %3771 = vmatpush.bf16.msra.mxu0 %v3730
        %3772 = vmatpush.bf16.msra.mxu0 %v3728
        %3773 = vmatpush.bf16.msra.mxu0 %v3726
        %3774 = vmatpush.bf16.msra.mxu0 %v3724
        %3775 = vmatpush.bf16.msra.mxu0 %v3722
        %3776 = vmatpush.bf16.msra.mxu0 %v3720
        %3777 = vmatmul.bf16.gmra.mxu0 %v3670
        %v3778 = vpop.f32.mrf.mxu0
        %v3779 = vadd.f32 %v3753, %v3778
        %v3780 = vpop.f32.mrf.mxu0
        %3781 = vdwg.mxu0
        %v3782 = vmul.f32 %v3766, 0.5
        %v3783 = vmul.f32 %v3779, 0.5
        %v3784 = vmul.f32 %v3766, 0.044715
        %v3785 = vmul.f32 %v3779, 0.044715
        %v3786 = vmul.f32 %v3784, %v3766
        %v3787 = vmul.f32 %v3785, %v3779
        %v3788 = vmul.f32 %v3786, %v3766
        %v3789 = vmul.f32 %v3787, %v3779
        %v3790 = vadd.f32 %v3766, %v3788
        %v3791 = vadd.f32 %v3779, %v3789
        %v3792 = vmul.f32 %v3790, 0.7978846
        %v3793 = vmul.f32 %v3791, 0.7978846
        %v3794 = vtanh.pop %v3792
        %v3795 = vtanh.pop %v3793
        %v3796 = vadd.f32 %v3794, 1.0
        %v3797 = vadd.f32 %v3795, 1.0
        %v3798 = vmul.f32 %v3782, %v3796
        %v3799 = vmul.f32 %v3783, %v3797
        %v3800 = vld [vmem:[#allocation20] sm:$0xf]
        %v3801 = vld [vmem:[#allocation20 + $0x4] sm:$0xf]
        %v3802 = vld [vmem:[#allocation20 + $0x8] sm:$0xf]
        %v3803 = vld [vmem:[#allocation20 + $0xc] sm:$0xf]
        %v3804 = vld [vmem:[#allocation20 + $0x10] sm:$0xf]
        %v3805 = vld [vmem:[#allocation20 + $0x14] sm:$0xf]
        %v3806 = vld [vmem:[#allocation20 + $0x18] sm:$0xf]
        %v3807 = vld [vmem:[#allocation20 + $0x1c] sm:$0xf]
        %v3808 = vld [vmem:[#allocation20 + $0x20] sm:$0xf]
        %v3809 = vld [vmem:[#allocation20 + $0x24] sm:$0xf]
        %v3810 = vld [vmem:[#allocation20 + $0x28] sm:$0xf]
        %v3811 = vld [vmem:[#allocation20 + $0x2c] sm:$0xf]
        %v3812 = vld [vmem:[#allocation20 + $0x30] sm:$0xf]
        %v3813 = vld [vmem:[#allocation20 + $0x34] sm:$0xf]
        %v3814 = vld [vmem:[#allocation20 + $0x38] sm:$0xf]
        %v3815 = vld [vmem:[#allocation20 + $0x3c] sm:$0xf]
        %v3816 = vld [vmem:[#allocation20 + $0x40] sm:$0xf]
        %v3817 = vld [vmem:[#allocation20 + $0x44] sm:$0xf]
        %v3818 = vld [vmem:[#allocation20 + $0x48] sm:$0xf]
        %v3819 = vld [vmem:[#allocation20 + $0x4c] sm:$0xf]
        %v3820 = vld [vmem:[#allocation20 + $0x50] sm:$0xf]
        %v3821 = vld [vmem:[#allocation20 + $0x54] sm:$0xf]
        %v3822 = vld [vmem:[#allocation20 + $0x58] sm:$0xf]
        %v3823 = vld [vmem:[#allocation20 + $0x5c] sm:$0xf]
        %v3824 = vld [vmem:[#allocation20 + $0x60] sm:$0xf]
        %v3825 = vld [vmem:[#allocation20 + $0x64] sm:$0xf]
        %v3826 = vld [vmem:[#allocation20 + $0x68] sm:$0xf]
        %v3827 = vld [vmem:[#allocation20 + $0x6c] sm:$0xf]
        %v3828 = vld [vmem:[#allocation20 + $0x70] sm:$0xf]
        %v3829 = vld [vmem:[#allocation20 + $0x74] sm:$0xf]
        %v3830 = vld [vmem:[#allocation20 + $0x78] sm:$0xf]
        %v3831 = vld [vmem:[#allocation20 + $0x7c] sm:$0xf]
        %v3832 = vld [vmem:[%s17] sm:$0x1]
        %v3833 = vpack.c.bf16 %v3798, %v3798
        %v3834 = vpack.c.bf16 %v3799, %v3799
        %v3867 = vunpack.c.l.b16 %v3800
        %v3868 = vunpack.c.l.b16 %v3801
        %v3869 = vunpack.c.l.b16 %v3802
        %v3870 = vunpack.c.l.b16 %v3803
        %v3871 = vunpack.c.l.b16 %v3804
        %v3872 = vunpack.c.l.b16 %v3805
        %v3873 = vunpack.c.l.b16 %v3806
        %v3874 = vunpack.c.l.b16 %v3807
        %v3875 = vunpack.c.l.b16 %v3808
        %v3876 = vunpack.c.l.b16 %v3809
        %v3877 = vunpack.c.l.b16 %v3810
        %v3878 = vunpack.c.l.b16 %v3811
        %v3879 = vunpack.c.l.b16 %v3812
        %v3880 = vunpack.c.l.b16 %v3813
        %v3881 = vunpack.c.l.b16 %v3814
        %v3882 = vunpack.c.l.b16 %v3815
        %v3883 = vunpack.c.l.b16 %v3816
        %v3884 = vunpack.c.l.b16 %v3817
        %v3885 = vunpack.c.l.b16 %v3818
        %v3886 = vunpack.c.l.b16 %v3819
        %v3887 = vunpack.c.l.b16 %v3820
        %v3888 = vunpack.c.l.b16 %v3821
        %v3889 = vunpack.c.l.b16 %v3822
        %v3890 = vunpack.c.l.b16 %v3823
        %v3891 = vunpack.c.l.b16 %v3824
        %v3892 = vunpack.c.l.b16 %v3825
        %v3893 = vunpack.c.l.b16 %v3826
        %v3894 = vunpack.c.l.b16 %v3827
        %v3895 = vunpack.c.l.b16 %v3828
        %v3896 = vunpack.c.l.b16 %v3829
        %v3897 = vunpack.c.l.b16 %v3830
        %v3898 = vunpack.c.l.b16 %v3831
        %v3899 = vpack.c.b16 %v3868, %v3867
        %v3900 = vpack.c.b16 %v3870, %v3869
        %v3901 = vpack.c.b16 %v3872, %v3871
        %v3902 = vpack.c.b16 %v3874, %v3873
        %v3903 = vpack.c.b16 %v3876, %v3875
        %v3904 = vpack.c.b16 %v3878, %v3877
        %v3905 = vpack.c.b16 %v3880, %v3879
        %v3906 = vpack.c.b16 %v3882, %v3881
        %v3907 = vpack.c.b16 %v3884, %v3883
        %v3908 = vpack.c.b16 %v3886, %v3885
        %v3909 = vpack.c.b16 %v3888, %v3887
        %v3910 = vpack.c.b16 %v3890, %v3889
        %v3911 = vpack.c.b16 %v3892, %v3891
        %v3912 = vpack.c.b16 %v3894, %v3893
        %v3913 = vpack.c.b16 %v3896, %v3895
        %v3914 = vpack.c.b16 %v3898, %v3897
        %3931 = vmatpush.bf16.msra.mxu0 %v3906
        %3932 = vmatpush.bf16.msra.mxu0 %v3905
        %3933 = vmatpush.bf16.msra.mxu0 %v3904
        %3934 = vmatpush.bf16.msra.mxu0 %v3903
        %3935 = vmatpush.bf16.msra.mxu0 %v3902
        %3936 = vmatpush.bf16.msra.mxu0 %v3901
        %3937 = vmatpush.bf16.msra.mxu0 %v3900
        %3938 = vmatpush.bf16.msra.mxu0 %v3899
        %3939 = vmatmul.bf16.gmra.mxu0 %v3833
        %v3940 = vpop.f32.mrf.mxu0
        %v3941 = vadd.f32 %v3832, %v3940
        %v3942 = vpop.f32.mrf.mxu0
        %3943 = vdwg.mxu0
        %3944 = vmatpush.bf16.msra.mxu0 %v3914
        %3945 = vmatpush.bf16.msra.mxu0 %v3913
        %3946 = vmatpush.bf16.msra.mxu0 %v3912
        %3947 = vmatpush.bf16.msra.mxu0 %v3911
        %3948 = vmatpush.bf16.msra.mxu0 %v3910
        %3949 = vmatpush.bf16.msra.mxu0 %v3909
        %3950 = vmatpush.bf16.msra.mxu0 %v3908
        %3951 = vmatpush.bf16.msra.mxu0 %v3907
        %3952 = vmatmul.bf16.gmra.mxu0 %v3834
        %v3953 = vpop.f32.mrf.mxu0
        %v3954 = vadd.f32 %v3941, %v3953
        %v3955 = vpop.f32.mrf.mxu0
        %3956 = vdwg.mxu0
        %v3957 = vmul.f32 %v3954, 0.5
        %v3958 = vmul.f32 %v3954, 0.044715
        %v3959 = vmul.f32 %v3958, %v3954
        %v3960 = vmul.f32 %v3959, %v3954
        %v3961 = vadd.f32 %v3954, %v3960
        %v3962 = vmul.f32 %v3961, 0.7978846
        %v3963 = vtanh.pop %v3962
        %v3964 = vadd.f32 %v3963, 1.0
        %v3965 = vmul.f32 %v3957, %v3964
        %v3966 = vadd.f32 %v3652, %v3965
        %s3967 = scalar_lea.vmem [#allocation18], 128
        %v3968 = vld [vmem:[%s3967] sm:$0xff]
        %v3969 = vld [vmem:[%s3967 + $0x8] sm:$0xff]
        %v3970 = vld [vmem:[%s3967 + $0x10] sm:$0xff]
        %v3971 = vld [vmem:[%s3967 + $0x18] sm:$0xff]
        %v3972 = vld [vmem:[%s3967 + $0x20] sm:$0xff]
        %v3973 = vld [vmem:[%s3967 + $0x28] sm:$0xff]
        %v3974 = vld [vmem:[%s3967 + $0x30] sm:$0xff]
        %v3975 = vld [vmem:[%s3967 + $0x38] sm:$0xff]
        %v3976 = vld [vmem:[%s3967 + $0x40] sm:$0xff]
        %v3977 = vld [vmem:[%s3967 + $0x48] sm:$0xff]
        %v3978 = vld [vmem:[%s3967 + $0x50] sm:$0xff]
        %v3979 = vld [vmem:[%s3967 + $0x58] sm:$0xff]
        %v3980 = vld [vmem:[%s3967 + $0x60] sm:$0xff]
        %v3981 = vld [vmem:[%s3967 + $0x68] sm:$0xff]
        %v3982 = vld [vmem:[%s3967 + $0x70] sm:$0xff]
        %v3983 = vld [vmem:[%s3967 + $0x78] sm:$0xff]
        %s3984 = scalar_lea.vmem %s15, 2
        %v3985 = vld [vmem:[%s3984] sm:$0x3]
        %v3986 = vpack.c.bf16 %v3966, %v3966
        %v4003 = vunpack.c.l.b16 %v3968
        %v4004 = vunpack.c.h.b16 %v3968
        %v4005 = vunpack.c.l.b16 %v3969
        %v4006 = vunpack.c.h.b16 %v3969
        %v4007 = vunpack.c.l.b16 %v3970
        %v4008 = vunpack.c.h.b16 %v3970
        %v4009 = vunpack.c.l.b16 %v3971
        %v4010 = vunpack.c.h.b16 %v3971
        %v4011 = vunpack.c.l.b16 %v3972
        %v4012 = vunpack.c.h.b16 %v3972
        %v4013 = vunpack.c.l.b16 %v3973
        %v4014 = vunpack.c.h.b16 %v3973
        %v4015 = vunpack.c.l.b16 %v3974
        %v4016 = vunpack.c.h.b16 %v3974
        %v4017 = vunpack.c.l.b16 %v3975
        %v4018 = vunpack.c.h.b16 %v3975
        %v4019 = vunpack.c.l.b16 %v3976
        %v4020 = vunpack.c.h.b16 %v3976
        %v4021 = vunpack.c.l.b16 %v3977
        %v4022 = vunpack.c.h.b16 %v3977
        %v4023 = vunpack.c.l.b16 %v3978
        %v4024 = vunpack.c.h.b16 %v3978
        %v4025 = vunpack.c.l.b16 %v3979
        %v4026 = vunpack.c.h.b16 %v3979
        %v4027 = vunpack.c.l.b16 %v3980
        %v4028 = vunpack.c.h.b16 %v3980
        %v4029 = vunpack.c.l.b16 %v3981
        %v4030 = vunpack.c.h.b16 %v3981
        %v4031 = vunpack.c.l.b16 %v3982
        %v4032 = vunpack.c.h.b16 %v3982
        %v4033 = vunpack.c.l.b16 %v3983
        %v4034 = vunpack.c.h.b16 %v3983
        %v4035 = vpack.c.b16 %v4005, %v4003
        %v4036 = vpack.c.b16 %v4006, %v4004
        %v4037 = vpack.c.b16 %v4009, %v4007
        %v4038 = vpack.c.b16 %v4010, %v4008
        %v4039 = vpack.c.b16 %v4013, %v4011
        %v4040 = vpack.c.b16 %v4014, %v4012
        %v4041 = vpack.c.b16 %v4017, %v4015
        %v4042 = vpack.c.b16 %v4018, %v4016
        %v4043 = vpack.c.b16 %v4021, %v4019
        %v4044 = vpack.c.b16 %v4022, %v4020
        %v4045 = vpack.c.b16 %v4025, %v4023
        %v4046 = vpack.c.b16 %v4026, %v4024
        %v4047 = vpack.c.b16 %v4029, %v4027
        %v4048 = vpack.c.b16 %v4030, %v4028
        %v4049 = vpack.c.b16 %v4033, %v4031
        %v4050 = vpack.c.b16 %v4034, %v4032
        %v4068 = vperm.slane %v3985, 0
        %v4069 = vperm.slane %v3985, 1
        %4072 = vmatpush.bf16.msra.mxu0 %v4049
        %4073 = vmatpush.bf16.msra.mxu0 %v4047
        %4074 = vmatpush.bf16.msra.mxu0 %v4045
        %4075 = vmatpush.bf16.msra.mxu0 %v4043
        %4076 = vmatpush.bf16.msra.mxu0 %v4041
        %4077 = vmatpush.bf16.msra.mxu0 %v4039
        %4078 = vmatpush.bf16.msra.mxu0 %v4037
        %4079 = vmatpush.bf16.msra.mxu0 %v4035
        %4080 = vmatmul.bf16.gmra.mxu0 %v3986
        %v4081 = vpop.f32.mrf.mxu0
        %v4082 = vadd.f32 %v4068, %v4081
        %v4083 = vpop.f32.mrf.mxu0
        %4084 = vdwg.mxu0
        %4085 = vmatpush.bf16.msra.mxu0 %v4050
        %4086 = vmatpush.bf16.msra.mxu0 %v4048
        %4087 = vmatpush.bf16.msra.mxu0 %v4046
        %4088 = vmatpush.bf16.msra.mxu0 %v4044
        %4089 = vmatpush.bf16.msra.mxu0 %v4042
        %4090 = vmatpush.bf16.msra.mxu0 %v4040
        %4091 = vmatpush.bf16.msra.mxu0 %v4038
        %4092 = vmatpush.bf16.msra.mxu0 %v4036
        %4093 = vmatmul.bf16.gmra.mxu0 %v3986
        %v4094 = vpop.f32.mrf.mxu0
        %v4095 = vadd.f32 %v4069, %v4094
        %v4096 = vpop.f32.mrf.mxu0
        %4097 = vdwg.mxu0
        %v4098 = vmul.f32 %v4082, 0.5
        %v4099 = vmul.f32 %v4095, 0.5
        %v4100 = vmul.f32 %v4082, 0.044715
        %v4101 = vmul.f32 %v4095, 0.044715
        %v4102 = vmul.f32 %v4100, %v4082
        %v4103 = vmul.f32 %v4101, %v4095
        %v4104 = vmul.f32 %v4102, %v4082
        %v4105 = vmul.f32 %v4103, %v4095
        %v4106 = vadd.f32 %v4082, %v4104
        %v4107 = vadd.f32 %v4095, %v4105
        %v4108 = vmul.f32 %v4106, 0.7978846
        %v4109 = vmul.f32 %v4107, 0.7978846
        %v4110 = vtanh.pop %v4108
        %v4111 = vtanh.pop %v4109
        %v4112 = vadd.f32 %v4110, 1.0
        %v4113 = vadd.f32 %v4111, 1.0
        %v4114 = vmul.f32 %v4098, %v4112
        %v4115 = vmul.f32 %v4099, %v4113
        %s4116 = scalar_lea.vmem [#allocation20], 128
        %v4117 = vld [vmem:[%s4116] sm:$0xf]
        %v4118 = vld [vmem:[%s4116 + $0x4] sm:$0xf]
        %v4119 = vld [vmem:[%s4116 + $0x8] sm:$0xf]
        %v4120 = vld [vmem:[%s4116 + $0xc] sm:$0xf]
        %v4121 = vld [vmem:[%s4116 + $0x10] sm:$0xf]
        %v4122 = vld [vmem:[%s4116 + $0x14] sm:$0xf]
        %v4123 = vld [vmem:[%s4116 + $0x18] sm:$0xf]
        %v4124 = vld [vmem:[%s4116 + $0x1c] sm:$0xf]
        %v4125 = vld [vmem:[%s4116 + $0x20] sm:$0xf]
        %v4126 = vld [vmem:[%s4116 + $0x24] sm:$0xf]
        %v4127 = vld [vmem:[%s4116 + $0x28] sm:$0xf]
        %v4128 = vld [vmem:[%s4116 + $0x2c] sm:$0xf]
        %v4129 = vld [vmem:[%s4116 + $0x30] sm:$0xf]
        %v4130 = vld [vmem:[%s4116 + $0x34] sm:$0xf]
        %v4131 = vld [vmem:[%s4116 + $0x38] sm:$0xf]
        %v4132 = vld [vmem:[%s4116 + $0x3c] sm:$0xf]
        %v4133 = vld [vmem:[%s4116 + $0x40] sm:$0xf]
        %v4134 = vld [vmem:[%s4116 + $0x44] sm:$0xf]
        %v4135 = vld [vmem:[%s4116 + $0x48] sm:$0xf]
        %v4136 = vld [vmem:[%s4116 + $0x4c] sm:$0xf]
        %v4137 = vld [vmem:[%s4116 + $0x50] sm:$0xf]
        %v4138 = vld [vmem:[%s4116 + $0x54] sm:$0xf]
        %v4139 = vld [vmem:[%s4116 + $0x58] sm:$0xf]
        %v4140 = vld [vmem:[%s4116 + $0x5c] sm:$0xf]
        %v4141 = vld [vmem:[%s4116 + $0x60] sm:$0xf]
        %v4142 = vld [vmem:[%s4116 + $0x64] sm:$0xf]
        %v4143 = vld [vmem:[%s4116 + $0x68] sm:$0xf]
        %v4144 = vld [vmem:[%s4116 + $0x6c] sm:$0xf]
        %v4145 = vld [vmem:[%s4116 + $0x70] sm:$0xf]
        %v4146 = vld [vmem:[%s4116 + $0x74] sm:$0xf]
        %v4147 = vld [vmem:[%s4116 + $0x78] sm:$0xf]
        %v4148 = vld [vmem:[%s4116 + $0x7c] sm:$0xf]
        %s4149 = scalar_lea.vmem %s17, 1
        %v4150 = vld [vmem:[%s4149] sm:$0x1]
        %v4151 = vpack.c.bf16 %v4114, %v4114
        %v4152 = vpack.c.bf16 %v4115, %v4115
        %v4185 = vunpack.c.l.b16 %v4117
        %v4186 = vunpack.c.l.b16 %v4118
        %v4187 = vunpack.c.l.b16 %v4119
        %v4188 = vunpack.c.l.b16 %v4120
        %v4189 = vunpack.c.l.b16 %v4121
        %v4190 = vunpack.c.l.b16 %v4122
        %v4191 = vunpack.c.l.b16 %v4123
        %v4192 = vunpack.c.l.b16 %v4124
        %v4193 = vunpack.c.l.b16 %v4125
        %v4194 = vunpack.c.l.b16 %v4126
        %v4195 = vunpack.c.l.b16 %v4127
        %v4196 = vunpack.c.l.b16 %v4128
        %v4197 = vunpack.c.l.b16 %v4129
        %v4198 = vunpack.c.l.b16 %v4130
        %v4199 = vunpack.c.l.b16 %v4131
        %v4200 = vunpack.c.l.b16 %v4132
        %v4201 = vunpack.c.l.b16 %v4133
        %v4202 = vunpack.c.l.b16 %v4134
        %v4203 = vunpack.c.l.b16 %v4135
        %v4204 = vunpack.c.l.b16 %v4136
        %v4205 = vunpack.c.l.b16 %v4137
        %v4206 = vunpack.c.l.b16 %v4138
        %v4207 = vunpack.c.l.b16 %v4139
        %v4208 = vunpack.c.l.b16 %v4140
        %v4209 = vunpack.c.l.b16 %v4141
        %v4210 = vunpack.c.l.b16 %v4142
        %v4211 = vunpack.c.l.b16 %v4143
        %v4212 = vunpack.c.l.b16 %v4144
        %v4213 = vunpack.c.l.b16 %v4145
        %v4214 = vunpack.c.l.b16 %v4146
        %v4215 = vunpack.c.l.b16 %v4147
        %v4216 = vunpack.c.l.b16 %v4148
        %v4217 = vpack.c.b16 %v4186, %v4185
        %v4218 = vpack.c.b16 %v4188, %v4187
        %v4219 = vpack.c.b16 %v4190, %v4189
        %v4220 = vpack.c.b16 %v4192, %v4191
        %v4221 = vpack.c.b16 %v4194, %v4193
        %v4222 = vpack.c.b16 %v4196, %v4195
        %v4223 = vpack.c.b16 %v4198, %v4197
        %v4224 = vpack.c.b16 %v4200, %v4199
        %v4225 = vpack.c.b16 %v4202, %v4201
        %v4226 = vpack.c.b16 %v4204, %v4203
        %v4227 = vpack.c.b16 %v4206, %v4205
        %v4228 = vpack.c.b16 %v4208, %v4207
        %v4229 = vpack.c.b16 %v4210, %v4209
        %v4230 = vpack.c.b16 %v4212, %v4211
        %v4231 = vpack.c.b16 %v4214, %v4213
        %v4232 = vpack.c.b16 %v4216, %v4215
        %4249 = vmatpush.bf16.msra.mxu0 %v4224
        %4250 = vmatpush.bf16.msra.mxu0 %v4223
        %4251 = vmatpush.bf16.msra.mxu0 %v4222
        %4252 = vmatpush.bf16.msra.mxu0 %v4221
        %4253 = vmatpush.bf16.msra.mxu0 %v4220
        %4254 = vmatpush.bf16.msra.mxu0 %v4219
        %4255 = vmatpush.bf16.msra.mxu0 %v4218
        %4256 = vmatpush.bf16.msra.mxu0 %v4217
        %4257 = vmatmul.bf16.gmra.mxu0 %v4151
        %v4258 = vpop.f32.mrf.mxu0
        %v4259 = vadd.f32 %v4150, %v4258
        %v4260 = vpop.f32.mrf.mxu0
        %4261 = vdwg.mxu0
        %4262 = vmatpush.bf16.msra.mxu0 %v4232
        %4263 = vmatpush.bf16.msra.mxu0 %v4231
        %4264 = vmatpush.bf16.msra.mxu0 %v4230
        %4265 = vmatpush.bf16.msra.mxu0 %v4229
        %4266 = vmatpush.bf16.msra.mxu0 %v4228
        %4267 = vmatpush.bf16.msra.mxu0 %v4227
        %4268 = vmatpush.bf16.msra.mxu0 %v4226
        %4269 = vmatpush.bf16.msra.mxu0 %v4225
        %4270 = vmatmul.bf16.gmra.mxu0 %v4152
        %v4271 = vpop.f32.mrf.mxu0
        %v4272 = vadd.f32 %v4259, %v4271
        %v4273 = vpop.f32.mrf.mxu0
        %4274 = vdwg.mxu0
        %v4275 = vmul.f32 %v4272, 0.5
        %v4276 = vmul.f32 %v4272, 0.044715
        %v4277 = vmul.f32 %v4276, %v4272
        %v4278 = vmul.f32 %v4277, %v4272
        %v4279 = vadd.f32 %v4272, %v4278
        %v4280 = vmul.f32 %v4279, 0.7978846
        %v4281 = vtanh.pop %v4280
        %v4282 = vadd.f32 %v4281, 1.0
        %v4283 = vmul.f32 %v4275, %v4282
        %v4284 = vld [vmem:[#allocation21] sm:$0xf]
        %v4285 = vld [vmem:[#allocation21 + $0x4] sm:$0xf]
        %v4286 = vld [vmem:[#allocation21 + $0x8] sm:$0xf]
        %v4287 = vld [vmem:[#allocation21 + $0xc] sm:$0xf]
        %v4288 = vld [vmem:[#allocation21 + $0x10] sm:$0xf]
        %v4289 = vld [vmem:[#allocation21 + $0x14] sm:$0xf]
        %v4290 = vld [vmem:[#allocation21 + $0x18] sm:$0xf]
        %v4291 = vld [vmem:[#allocation21 + $0x1c] sm:$0xf]
        %v4292 = vld [vmem:[#allocation21 + $0x20] sm:$0xf]
        %v4293 = vld [vmem:[#allocation21 + $0x24] sm:$0xf]
        %v4294 = vld [vmem:[#allocation21 + $0x28] sm:$0xf]
        %v4295 = vld [vmem:[#allocation21 + $0x2c] sm:$0xf]
        %v4296 = vld [vmem:[#allocation21 + $0x30] sm:$0xf]
        %v4297 = vld [vmem:[#allocation21 + $0x34] sm:$0xf]
        %v4298 = vld [vmem:[#allocation21 + $0x38] sm:$0xf]
        %v4299 = vld [vmem:[#allocation21 + $0x3c] sm:$0xf]
        %v4300 = vld [vmem:[%s19] sm:$0x1]
        %v4301 = vpack.c.bf16 %v4283, %v4283
        %v4318 = vunpack.c.l.b16 %v4284
        %v4319 = vunpack.c.l.b16 %v4285
        %v4320 = vunpack.c.l.b16 %v4286
        %v4321 = vunpack.c.l.b16 %v4287
        %v4322 = vunpack.c.l.b16 %v4288
        %v4323 = vunpack.c.l.b16 %v4289
        %v4324 = vunpack.c.l.b16 %v4290
        %v4325 = vunpack.c.l.b16 %v4291
        %v4326 = vunpack.c.l.b16 %v4292
        %v4327 = vunpack.c.l.b16 %v4293
        %v4328 = vunpack.c.l.b16 %v4294
        %v4329 = vunpack.c.l.b16 %v4295
        %v4330 = vunpack.c.l.b16 %v4296
        %v4331 = vunpack.c.l.b16 %v4297
        %v4332 = vunpack.c.l.b16 %v4298
        %v4333 = vunpack.c.l.b16 %v4299
        %v4334 = vpack.c.b16 %v4319, %v4318
        %v4335 = vpack.c.b16 %v4321, %v4320
        %v4336 = vpack.c.b16 %v4323, %v4322
        %v4337 = vpack.c.b16 %v4325, %v4324
        %v4338 = vpack.c.b16 %v4327, %v4326
        %v4339 = vpack.c.b16 %v4329, %v4328
        %v4340 = vpack.c.b16 %v4331, %v4330
        %v4341 = vpack.c.b16 %v4333, %v4332
        %4350 = vmatpush.bf16.msra.mxu0 %v4341
        %4351 = vmatpush.bf16.msra.mxu0 %v4340
        %4352 = vmatpush.bf16.msra.mxu0 %v4339
        %4353 = vmatpush.bf16.msra.mxu0 %v4338
        %4354 = vmatpush.bf16.msra.mxu0 %v4337
        %4355 = vmatpush.bf16.msra.mxu0 %v4336
        %4356 = vmatpush.bf16.msra.mxu0 %v4335
        %4357 = vmatpush.bf16.msra.mxu0 %v4334
        %4358 = vmatmul.bf16.gmra.mxu0 %v4301
        %v4359 = vpop.f32.mrf.mxu0
        %v4360 = vadd.f32 %v4300, %v4359
        %v4361 = vpop.f32.mrf.mxu0
        %4362 = vdwg.mxu0
        %4363 = vst [vmem:[%s814] sm:$0x1] %v4360
        %s4364 = sand.u32 %s474, 1
        %s4365 = scalar_lea.sflag [#allocation5], %s4364
        %s4366 = sand.u32 %s474, 1
        %s4367 = scalar_lea.vmem [#allocation23], %s4366
        // Predicated region
        $region149: #{tpu_custom_call.1} parent=99 // pred_check
          %p4368 = pneg %p484
        $region150: #{tpu_custom_call.1} parent=99 // pred_check_branch
          %4370 = sbr.rel (%p4368) target = $region152
        $region151: #{tpu_custom_call.1} parent=99 // pred_region
          %4372 = vsyncadd %s4365, 0
          %s4373 = scalar_lea.hbm %s20, %s41
          %s4375 = sshll.u32 %s4367, 4
          %s4376 = int_to_ptr.vmem [resolvable:$true] %s4375
          %s4377 = sshll.u32 %s4373, 4
          %s4378 = int_to_ptr.hbm [resolvable:$true] %s4377
          %4380 = dma.vmem_to_hbm [thread:$0]  %s4376, 16, %s4378, %s4365
        $region152: #{tpu_custom_call.1} parent=99 // pred_fallthru
          _
      $region100: #{tpu_custom_call.1} parent=5 // pred_fallthru
        _
      %p4381 = scmp.le.s32.totalorder 2, %s36
      // Predicated region
      $region153: #{tpu_custom_call.1} parent=5 // pred_check
        %p4382 = pneg %p4381
      $region154: #{tpu_custom_call.1} parent=5 // pred_check_branch
        %4384 = sbr.rel (%p4382) target = $region156
      $region155: #{tpu_custom_call.1} parent=5 // pred_region
        %s4385 = ssub.s32 %s36, 2
        // Predicated region
        $region157: #{tpu_custom_call.1} parent=155 // pred_check
          %p4386 = pneg %p490
        $region158: #{tpu_custom_call.1} parent=155 // pred_check_branch
          %4388 = sbr.rel (%p4386) target = $region160
        $region159: #{tpu_custom_call.1} parent=155 // pred_region
          %s4389 = sand.u32 %s475, 1
          %s4390 = scalar_lea.sflag [#allocation5], %s4389
          %s4391 = sand.u32 %s475, 1
          %s4392 = scalar_lea.vmem [#allocation23], %s4391
          %4394 = dma.done %s4390, 16
        $region160: #{tpu_custom_call.1} parent=155 // pred_fallthru
          _
      $region156: #{tpu_custom_call.1} parent=5 // pred_fallthru
        _
    $region6: #{tpu_custom_call.1} parent=1 // loop_footer
      %s40 = sadd.s32 1, %s36
    $region7: #{tpu_custom_call.1} parent=1 // loop_footer_branch
      %35 = sbr.rel target = $region3
    $region8: #{tpu_custom_call.1} parent=1 // loop_exit
      _
    %4395 = vsyncpa [#allocation4], 1
    %s4396 = scalar_lea.sflag [#allocation4], 1
    %4397 = vsyncpa %s4396, 1
    %4398 = vsyncpa [#allocation7], 1
    %4399 = vsyncpa [#allocation10], 1
    %4400 = vsyncpa [#allocation13], 1
    %4401 = vsyncpa [#allocation16], 1
    %4402 = vsyncpa [#allocation19], 1
    %4403 = vsyncpa [#allocation22], 1
    %4404 = vsyncpa [#allocation5], 1
    %s4405 = scalar_lea.sflag [#allocation5], 1
    %4406 = vsyncpa %s4405, 1

</llo_original>
